<compile_context>
chip_gen: v5e
topology: v5e:2x2
jax: 0.10.0
libtpu: 0.0.40
codegen_flags: <defaults>
</compile_context>

<pallas_src>
import jax
import jax.numpy as jnp
from jax.experimental import pallas as pl
from jax.experimental.pallas import tpu as pltpu

# fc dims copied from MyFullyConnectedLayer.__init__
DIMS = [256, 512, 1024, 512, 256, 128, 30]
OUT_PAD = 128          # fc5 output padded 30 -> 128 lanes (lane-dense stores)
TILE_B_DEFAULT = 512   # batch tile (VMEM-safe on v5e/v6e/v7x)


def _round_up(n, m):
    return ((n + m - 1) // m) * m


def mlp_kernel(x_ref,
               w0, b0, w1, b1, w2, b2, w3, b3, w4, b4, w5, b5,
               o_ref):
    """Fused 6-layer MLP on one (TILE_B, 256) batch tile.

    ReLU is applied only after fc4 (matching the PyTorch forward), then fc5.
    Matmuls run bf16 x bf16 -> f32 on the MXU; bias add in f32; activations
    are re-cast to bf16 between layers.
    """
    def layer(h, w_ref, b_ref, relu=False):
        y = jnp.dot(h, w_ref[...], preferred_element_type=jnp.float32) + b_ref[...]
        if relu:
            y = jnp.maximum(y, 0.0)
        return y.astype(jnp.bfloat16)

    h = x_ref[...]                       # (tb, 256) bf16
    h = layer(h, w0, b0)                 # fc   256 -> 512
    h = layer(h, w1, b1)                 # fc1  512 -> 1024
    h = layer(h, w2, b2)                 # fc2 1024 -> 512
    h = layer(h, w3, b3)                 # fc3  512 -> 256
    h = layer(h, w4, b4, relu=True)      # fc4  256 -> 128, then F.relu
    y = jnp.dot(h, w5[...], preferred_element_type=jnp.float32) + b5[...]  # fc5 128 -> 128(pad)
    o_ref[...] = y.astype(o_ref.dtype)


def init_params(key):
    """Deterministic init mimicking nn.Linear default U(-1/sqrt(in), 1/sqrt(in)).

    Weights stored pre-transposed as (in, out) in bf16; biases (1, out) in f32.
    The last layer is zero-padded from 30 to OUT_PAD output columns.
    """
    params = []
    for i in range(len(DIMS) - 1):
        fan_in, fan_out = DIMS[i], DIMS[i + 1]
        key, kw, kb = jax.random.split(key, 3)
        bound = 1.0 / float(jnp.sqrt(jnp.float32(fan_in)))
        w = jax.random.uniform(kw, (fan_in, fan_out), jnp.float32, -bound, bound)
        b = jax.random.uniform(kb, (1, fan_out), jnp.float32, -bound, bound)
        if i == len(DIMS) - 2:  # pad fc5: 30 -> OUT_PAD lanes (padded columns are zero)
            w = jnp.pad(w, ((0, 0), (0, OUT_PAD - fan_out)))
            b = jnp.pad(b, ((0, 0), (0, OUT_PAD - fan_out)))
        params.append((w.astype(jnp.bfloat16), b.astype(jnp.float32)))
    return params


def my_fully_connected_layer(x, params, tile_b=TILE_B_DEFAULT):
    """x: (B, 256) float -> (B, 10, 3) float32."""
    B, D = x.shape
    assert D == DIMS[0], (B, D)

    # Batch tile: full batch when small, otherwise TILE_B; pad B so the grid is exact.
    tb = min(tile_b, _round_up(B, 8))
    Bp = _round_up(B, tb)

    xb = x.astype(jnp.bfloat16)
    if Bp != B:
        xb = jnp.pad(xb, ((0, Bp - B), (0, 0)))

    flat_params = []
    in_specs = [pl.BlockSpec((tb, DIMS[0]), lambda i: (i, 0))]  # x: tiled over batch
    for (w, b) in params:
        flat_params += [w, b]
        # Constant index_map -> weight/bias blocks stay resident across grid steps.
        in_specs.append(pl.BlockSpec(w.shape, lambda i: (0, 0)))
        in_specs.append(pl.BlockSpec(b.shape, lambda i: (0, 0)))

    out = pl.pallas_call(
        mlp_kernel,
        grid=(Bp // tb,),
        out_shape=jax.ShapeDtypeStruct((Bp, OUT_PAD), jnp.float32),
        in_specs=in_specs,
        out_specs=pl.BlockSpec((tb, OUT_PAD), lambda i: (i, 0)),
        compiler_params=pltpu.CompilerParams(
            dimension_semantics=("parallel",)),
    )(xb, *flat_params)

    # Drop batch padding and the 30->128 lane padding, then x.view(-1, 10, 3).
    return out[:B, :DIMS[-1]].reshape(-1, 10, 3)


if __name__ == "__main__":
    key = jax.random.PRNGKey(0)
    key_x, key_p = jax.random.split(key)

    B = 8
    x = jax.random.normal(key_x, (B, 256), dtype=jnp.float32)
    params = init_params(key_p)

    y = my_fully_connected_layer(x, params)
    y = jax.block_until_ready(y)
    assert y.shape == (B, 10, 3), y.shape

    # Pure-JAX reference following the same bf16-weight / f32-accumulate path.
    h = x.astype(jnp.bfloat16)
    for i, (w, b) in enumerate(params):
        h = jnp.dot(h, w, preferred_element_type=jnp.float32) + b[0]
        if i == 4:               # F.relu after fc4 only
            h = jnp.maximum(h, 0.0)
        if i < len(params) - 1:
            h = h.astype(jnp.bfloat16)
    ref = h[:, :DIMS[-1]].reshape(-1, 10, 3)
    assert jnp.allclose(y, ref, atol=1e-2, rtol=1e-2), float(jnp.max(jnp.abs(y - ref)))

    print("KERNEL_OK")
</pallas_src>

<mosaic_0001>
module attributes {stable_mosaic.version = 11 : i64} {
  func.func @mlp_kernel(%arg0: i32, %arg1: memref<8x256xbf16, #tpu.memory_space<vmem>>, %arg2: memref<256x512xbf16, #tpu.memory_space<vmem>>, %arg3: memref<1x512xf32, #tpu.memory_space<vmem>>, %arg4: memref<512x1024xbf16, #tpu.memory_space<vmem>>, %arg5: memref<1x1024xf32, #tpu.memory_space<vmem>>, %arg6: memref<1024x512xbf16, #tpu.memory_space<vmem>>, %arg7: memref<1x512xf32, #tpu.memory_space<vmem>>, %arg8: memref<512x256xbf16, #tpu.memory_space<vmem>>, %arg9: memref<1x256xf32, #tpu.memory_space<vmem>>, %arg10: memref<256x128xbf16, #tpu.memory_space<vmem>>, %arg11: memref<1x128xf32, #tpu.memory_space<vmem>>, %arg12: memref<128x128xbf16, #tpu.memory_space<vmem>>, %arg13: memref<1x128xf32, #tpu.memory_space<vmem>>, %arg14: memref<8x128xf32, #tpu.memory_space<vmem>>) attributes {dimension_semantics = [#tpu.dimension_semantics<parallel>], iteration_bounds = array<i64: 1>, scalar_prefetch = 0 : i64, scratch_operands = 0 : i64, tpu.core_type = #tpu.core_type<tc>, window_params = [{transform_indices = @transform_0, window_bounds = array<i64: 8, 256>}, {pipeline_mode = #tpu.pipeline_mode<synchronous>, transform_indices = @transform_1, window_bounds = array<i64: 256, 512>}, {pipeline_mode = #tpu.pipeline_mode<synchronous>, transform_indices = @transform_2, window_bounds = array<i64: 1, 512>}, {pipeline_mode = #tpu.pipeline_mode<synchronous>, transform_indices = @transform_3, window_bounds = array<i64: 512, 1024>}, {pipeline_mode = #tpu.pipeline_mode<synchronous>, transform_indices = @transform_4, window_bounds = array<i64: 1, 1024>}, {pipeline_mode = #tpu.pipeline_mode<synchronous>, transform_indices = @transform_5, window_bounds = array<i64: 1024, 512>}, {pipeline_mode = #tpu.pipeline_mode<synchronous>, transform_indices = @transform_6, window_bounds = array<i64: 1, 512>}, {pipeline_mode = #tpu.pipeline_mode<synchronous>, transform_indices = @transform_7, window_bounds = array<i64: 512, 256>}, {pipeline_mode = #tpu.pipeline_mode<synchronous>, transform_indices = @transform_8, window_bounds = array<i64: 1, 256>}, {pipeline_mode = #tpu.pipeline_mode<synchronous>, transform_indices = @transform_9, window_bounds = array<i64: 256, 128>}, {pipeline_mode = #tpu.pipeline_mode<synchronous>, transform_indices = @transform_10, window_bounds = array<i64: 1, 128>}, {pipeline_mode = #tpu.pipeline_mode<synchronous>, transform_indices = @transform_11, window_bounds = array<i64: 128, 128>}, {pipeline_mode = #tpu.pipeline_mode<synchronous>, transform_indices = @transform_12, window_bounds = array<i64: 1, 128>}, {transform_indices = @transform_13, window_bounds = array<i64: 8, 128>}]} {
    %c0 = arith.constant 0 : index
    %c0_0 = arith.constant 0 : index
    %0 = vector.load %arg1[%c0, %c0_0] : memref<8x256xbf16, #tpu.memory_space<vmem>>, vector<8x256xbf16>
    %c0_1 = arith.constant 0 : index
    %c0_2 = arith.constant 0 : index
    %1 = vector.load %arg2[%c0_1, %c0_2] : memref<256x512xbf16, #tpu.memory_space<vmem>>, vector<256x512xbf16>
    %cst = arith.constant dense<0.000000e+00> : vector<8x512xf32>
    %2 = tpu.matmul %0, %1, %cst {dimension_numbers = #tpu.dot_dimension_numbers<[1], [0], [0], [1], [0, 0, 1, 1], [], []>} : vector<8x256xbf16>, vector<256x512xbf16>, vector<8x512xf32> -> vector<8x512xf32>
    %c0_3 = arith.constant 0 : index
    %c0_4 = arith.constant 0 : index
    %3 = vector.load %arg3[%c0_3, %c0_4] : memref<1x512xf32, #tpu.memory_space<vmem>>, vector<1x512xf32>
    %4 = vector.broadcast %3 : vector<1x512xf32> to vector<8x512xf32>
    %5 = arith.addf %2, %4 : vector<8x512xf32>
    %6 = arith.truncf %5 : vector<8x512xf32> to vector<8x512xbf16>
    %c0_5 = arith.constant 0 : index
    %c0_6 = arith.constant 0 : index
    %7 = vector.load %arg4[%c0_5, %c0_6] : memref<512x1024xbf16, #tpu.memory_space<vmem>>, vector<512x1024xbf16>
    %cst_7 = arith.constant dense<0.000000e+00> : vector<8x1024xf32>
    %8 = tpu.matmul %6, %7, %cst_7 {dimension_numbers = #tpu.dot_dimension_numbers<[1], [0], [0], [1], [0, 0, 1, 1], [], []>} : vector<8x512xbf16>, vector<512x1024xbf16>, vector<8x1024xf32> -> vector<8x1024xf32>
    %c0_8 = arith.constant 0 : index
    %c0_9 = arith.constant 0 : index
    %9 = vector.load %arg5[%c0_8, %c0_9] : memref<1x1024xf32, #tpu.memory_space<vmem>>, vector<1x1024xf32>
    %10 = vector.broadcast %9 : vector<1x1024xf32> to vector<8x1024xf32>
    %11 = arith.addf %8, %10 : vector<8x1024xf32>
    %12 = arith.truncf %11 : vector<8x1024xf32> to vector<8x1024xbf16>
    %c0_10 = arith.constant 0 : index
    %c0_11 = arith.constant 0 : index
    %13 = vector.load %arg6[%c0_10, %c0_11] : memref<1024x512xbf16, #tpu.memory_space<vmem>>, vector<1024x512xbf16>
    %cst_12 = arith.constant dense<0.000000e+00> : vector<8x512xf32>
    %14 = tpu.matmul %12, %13, %cst_12 {dimension_numbers = #tpu.dot_dimension_numbers<[1], [0], [0], [1], [0, 0, 1, 1], [], []>} : vector<8x1024xbf16>, vector<1024x512xbf16>, vector<8x512xf32> -> vector<8x512xf32>
    %c0_13 = arith.constant 0 : index
    %c0_14 = arith.constant 0 : index
    %15 = vector.load %arg7[%c0_13, %c0_14] : memref<1x512xf32, #tpu.memory_space<vmem>>, vector<1x512xf32>
    %16 = vector.broadcast %15 : vector<1x512xf32> to vector<8x512xf32>
    %17 = arith.addf %14, %16 : vector<8x512xf32>
    %18 = arith.truncf %17 : vector<8x512xf32> to vector<8x512xbf16>
    %c0_15 = arith.constant 0 : index
    %c0_16 = arith.constant 0 : index
    %19 = vector.load %arg8[%c0_15, %c0_16] : memref<512x256xbf16, #tpu.memory_space<vmem>>, vector<512x256xbf16>
    %cst_17 = arith.constant dense<0.000000e+00> : vector<8x256xf32>
    %20 = tpu.matmul %18, %19, %cst_17 {dimension_numbers = #tpu.dot_dimension_numbers<[1], [0], [0], [1], [0, 0, 1, 1], [], []>} : vector<8x512xbf16>, vector<512x256xbf16>, vector<8x256xf32> -> vector<8x256xf32>
    %c0_18 = arith.constant 0 : index
    %c0_19 = arith.constant 0 : index
    %21 = vector.load %arg9[%c0_18, %c0_19] : memref<1x256xf32, #tpu.memory_space<vmem>>, vector<1x256xf32>
    %22 = vector.broadcast %21 : vector<1x256xf32> to vector<8x256xf32>
    %23 = arith.addf %20, %22 : vector<8x256xf32>
    %24 = arith.truncf %23 : vector<8x256xf32> to vector<8x256xbf16>
    %c0_20 = arith.constant 0 : index
    %c0_21 = arith.constant 0 : index
    %25 = vector.load %arg10[%c0_20, %c0_21] : memref<256x128xbf16, #tpu.memory_space<vmem>>, vector<256x128xbf16>
    %cst_22 = arith.constant dense<0.000000e+00> : vector<8x128xf32>
    %26 = tpu.matmul %24, %25, %cst_22 {dimension_numbers = #tpu.dot_dimension_numbers<[1], [0], [0], [1], [0, 0, 1, 1], [], []>} : vector<8x256xbf16>, vector<256x128xbf16>, vector<8x128xf32> -> vector<8x128xf32>
    %c0_23 = arith.constant 0 : index
    %c0_24 = arith.constant 0 : index
    %27 = vector.load %arg11[%c0_23, %c0_24] : memref<1x128xf32, #tpu.memory_space<vmem>>, vector<1x128xf32>
    %28 = vector.broadcast %27 : vector<1x128xf32> to vector<8x128xf32>
    %29 = arith.addf %26, %28 : vector<8x128xf32>
    %cst_25 = arith.constant 0.000000e+00 : f32
    %30 = vector.broadcast %cst_25 : f32 to vector<8x128xf32>
    %31 = arith.maximumf %29, %30 : vector<8x128xf32>
    %32 = arith.truncf %31 : vector<8x128xf32> to vector<8x128xbf16>
    %c0_26 = arith.constant 0 : index
    %c0_27 = arith.constant 0 : index
    %33 = vector.load %arg12[%c0_26, %c0_27] : memref<128x128xbf16, #tpu.memory_space<vmem>>, vector<128x128xbf16>
    %cst_28 = arith.constant dense<0.000000e+00> : vector<8x128xf32>
    %34 = tpu.matmul %32, %33, %cst_28 {dimension_numbers = #tpu.dot_dimension_numbers<[1], [0], [0], [1], [0, 0, 1, 1], [], []>} : vector<8x128xbf16>, vector<128x128xbf16>, vector<8x128xf32> -> vector<8x128xf32>
    %c0_29 = arith.constant 0 : index
    %c0_30 = arith.constant 0 : index
    %35 = vector.load %arg13[%c0_29, %c0_30] : memref<1x128xf32, #tpu.memory_space<vmem>>, vector<1x128xf32>
    %36 = vector.broadcast %35 : vector<1x128xf32> to vector<8x128xf32>
    %37 = arith.addf %34, %36 : vector<8x128xf32>
    %c0_31 = arith.constant 0 : index
    %c0_32 = arith.constant 0 : index
    %38 = vector.load %arg14[%c0_31, %c0_32] : memref<8x128xf32, #tpu.memory_space<vmem>>, vector<8x128xf32>
    tpu.vector_store %arg14[%c0_31, %c0_32], %37 {strides = array<i32>} : memref<8x128xf32, #tpu.memory_space<vmem>>, vector<8x128xf32>,
    return
  }
  func.func @transform_0(%arg0: i32) -> (i32, i32) {
    %c0_i32 = arith.constant 0 : i32
    %c0_i32_0 = arith.constant 0 : i32
    return %arg0, %c0_i32 : i32, i32
  }
  func.func @transform_1(%arg0: i32) -> (i32, i32) {
    %c0_i32 = arith.constant 0 : i32
    %c0_i32_0 = arith.constant 0 : i32
    %c0_i32_1 = arith.constant 0 : i32
    return %c0_i32, %c0_i32_0 : i32, i32
  }
  func.func @transform_2(%arg0: i32) -> (i32, i32) {
    %c0_i32 = arith.constant 0 : i32
    %c0_i32_0 = arith.constant 0 : i32
    %c0_i32_1 = arith.constant 0 : i32
    return %c0_i32, %c0_i32_0 : i32, i32
  }
  func.func @transform_3(%arg0: i32) -> (i32, i32) {
    %c0_i32 = arith.constant 0 : i32
    %c0_i32_0 = arith.constant 0 : i32
    %c0_i32_1 = arith.constant 0 : i32
    return %c0_i32, %c0_i32_0 : i32, i32
  }
  func.func @transform_4(%arg0: i32) -> (i32, i32) {
    %c0_i32 = arith.constant 0 : i32
    %c0_i32_0 = arith.constant 0 : i32
    %c0_i32_1 = arith.constant 0 : i32
    return %c0_i32, %c0_i32_0 : i32, i32
  }
  func.func @transform_5(%arg0: i32) -> (i32, i32) {
    %c0_i32 = arith.constant 0 : i32
    %c0_i32_0 = arith.constant 0 : i32
    %c0_i32_1 = arith.constant 0 : i32
    return %c0_i32, %c0_i32_0 : i32, i32
  }
  func.func @transform_6(%arg0: i32) -> (i32, i32) {
    %c0_i32 = arith.constant 0 : i32
    %c0_i32_0 = arith.constant 0 : i32
    %c0_i32_1 = arith.constant 0 : i32
    return %c0_i32, %c0_i32_0 : i32, i32
  }
  func.func @transform_7(%arg0: i32) -> (i32, i32) {
    %c0_i32 = arith.constant 0 : i32
    %c0_i32_0 = arith.constant 0 : i32
    %c0_i32_1 = arith.constant 0 : i32
    return %c0_i32, %c0_i32_0 : i32, i32
  }
  func.func @transform_8(%arg0: i32) -> (i32, i32) {
    %c0_i32 = arith.constant 0 : i32
    %c0_i32_0 = arith.constant 0 : i32
    %c0_i32_1 = arith.constant 0 : i32
    return %c0_i32, %c0_i32_0 : i32, i32
  }
  func.func @transform_9(%arg0: i32) -> (i32, i32) {
    %c0_i32 = arith.constant 0 : i32
    %c0_i32_0 = arith.constant 0 : i32
    %c0_i32_1 = arith.constant 0 : i32
    return %c0_i32, %c0_i32_0 : i32, i32
  }
  func.func @transform_10(%arg0: i32) -> (i32, i32) {
    %c0_i32 = arith.constant 0 : i32
    %c0_i32_0 = arith.constant 0 : i32
    %c0_i32_1 = arith.constant 0 : i32
    return %c0_i32, %c0_i32_0 : i32, i32
  }
  func.func @transform_11(%arg0: i32) -> (i32, i32) {
    %c0_i32 = arith.constant 0 : i32
    %c0_i32_0 = arith.constant 0 : i32
    %c0_i32_1 = arith.constant 0 : i32
    return %c0_i32, %c0_i32_0 : i32, i32
  }
  func.func @transform_12(%arg0: i32) -> (i32, i32) {
    %c0_i32 = arith.constant 0 : i32
    %c0_i32_0 = arith.constant 0 : i32
    %c0_i32_1 = arith.constant 0 : i32
    return %c0_i32, %c0_i32_0 : i32, i32
  }
  func.func @transform_13(%arg0: i32) -> (i32, i32) {
    %c0_i32 = arith.constant 0 : i32
    %c0_i32_0 = arith.constant 0 : i32
    return %arg0, %c0_i32 : i32, i32
  }
}

</mosaic_0001>

<llo_original>
// kernel: tpu_custom_call.1
$region0: #{tpu_custom_call.1}
  #allocation0 [shape = 'u32[]', space=smem, size = 0x4, offset = 0x4, fixed_abs, tag = 'smem constant byte address 0x4 - core index']
  #allocation1 [shape = 'u32[72,128]{1,0:T(1,128)}', space=vmem, size = 0x9000, scoped, tag = 'internal scratch']
  %s0 = inlined_call_operand.hbm [shape: bf16[8,256], index: 0, kind: input, shape index: {}]
  %s1 = inlined_call_operand.hbm [shape: bf16[256,512], index: 1, kind: input, shape index: {}]
  %s2 = inlined_call_operand.hbm [shape: f32[1,512], index: 2, kind: input, shape index: {}]
  %s3 = inlined_call_operand.hbm [shape: bf16[512,1024], index: 3, kind: input, shape index: {}]
  %s4 = inlined_call_operand.hbm [shape: f32[1,1024], index: 4, kind: input, shape index: {}]
  %s5 = inlined_call_operand.hbm [shape: bf16[1024,512], index: 5, kind: input, shape index: {}]
  %s6 = inlined_call_operand.vmem [shape: f32[1,512], index: 6, kind: input, shape index: {}]
  %s7 = inlined_call_operand.hbm [shape: bf16[512,256], index: 7, kind: input, shape index: {}]
  %s8 = inlined_call_operand.vmem [shape: f32[1,256], index: 8, kind: input, shape index: {}]
  %s9 = inlined_call_operand.hbm [shape: bf16[256,128], index: 9, kind: input, shape index: {}]
  %s10 = inlined_call_operand.vmem [shape: f32[1,128], index: 10, kind: input, shape index: {}]
  %s11 = inlined_call_operand.hbm [shape: bf16[128,128], index: 11, kind: input, shape index: {}]
  %s12 = inlined_call_operand.vmem [shape: f32[1,128], index: 12, kind: input, shape index: {}]
  %s13 = inlined_call_operand.hbm [shape: f32[8,128], index: 13, kind: output, shape index: {}]
  %s14 = sld [smem:[#allocation0]]
  $region98: #{tpu_custom_call.1} parent=0
    _
  %s16 = ssub.s32 1, %s14
  %s17 = scalar_select 0, %s16, %s14
  $region1: #{tpu_custom_call.1} parent=0
    #allocation2 [shape = 'u8[4096]{0}', space=vmem, size = 0x1000, scoped, tag = 'input window, operand 0, single buffered']
    #allocation3 [shape = 's32[1]{0}', space=sflag, size = 0x4, scoped, tag = 'scoped memory for tpu_custom_call.1']
    #allocation4 [shape = 's32[1]{0}', space=sflag, size = 0x4, scoped, tag = 'scoped memory for tpu_custom_call.1']
    #allocation5 [shape = 'u8[262144]{0}', space=vmem, size = 0x40000, scoped, tag = 'input window, operand 1, single buffered']
    #allocation6 [shape = 's32[1]{0}', space=sflag, size = 0x4, scoped, tag = 'scoped memory for tpu_custom_call.1']
    #allocation7 [shape = 'u8[2048]{0}', space=vmem, size = 0x800, scoped, tag = 'input window, operand 2, single buffered']
    #allocation8 [shape = 'u8[1048576]{0}', space=vmem, size = 0x100000, scoped, tag = 'input window, operand 3, single buffered']
    #allocation9 [shape = 's32[1]{0}', space=sflag, size = 0x4, scoped, tag = 'scoped memory for tpu_custom_call.1']
    #allocation10 [shape = 'u8[4096]{0}', space=vmem, size = 0x1000, scoped, tag = 'input window, operand 4, single buffered']
    #allocation11 [shape = 'u8[1048576]{0}', space=vmem, size = 0x100000, scoped, tag = 'input window, operand 5, single buffered']
    #allocation12 [shape = 's32[1]{0}', space=sflag, size = 0x4, scoped, tag = 'scoped memory for tpu_custom_call.1']
    #allocation13 [shape = 'u8[262144]{0}', space=vmem, size = 0x40000, scoped, tag = 'input window, operand 7, single buffered']
    #allocation14 [shape = 'u8[65536]{0}', space=vmem, size = 0x10000, scoped, tag = 'input window, operand 9, single buffered']
    #allocation15 [shape = 's32[1]{0}', space=sflag, size = 0x4, scoped, tag = 'scoped memory for tpu_custom_call.1']
    #allocation16 [shape = 'u8[32768]{0}', space=vmem, size = 0x8000, scoped, tag = 'input window, operand 11, single buffered']
    #allocation17 [shape = 'u8[4096]{0}', space=vmem, size = 0x1000, scoped, tag = 'output window, operand 0, single buffered']
    %18 = vsyncpa [#allocation3], 0
    %19 = vsyncpa [#allocation6], 0
    %20 = vsyncpa [#allocation9], 0
    %21 = vsyncpa [#allocation12], 0
    %22 = vsyncpa [#allocation15], 0
    %23 = vsyncpa [#allocation4], 0
    // Predicated region
    $region2: #{tpu_custom_call.1} parent=1 // pred_check
      _
    $region3: #{tpu_custom_call.1} parent=1 // pred_check_branch
      %25 = sbr.rel (0) target = $region5
    $region4: #{tpu_custom_call.1} parent=1 // pred_region
      %27 = vsyncadd [#allocation3], 0
      %s29 = sshll.u32 %s0, 4
      %s30 = int_to_ptr.hbm [resolvable:$true] %s29
      %s31 = sshll.u32 [#allocation2], 4
      %s32 = int_to_ptr.vmem [resolvable:$true] %s31
      %34 = dma.hbm_to_vmem [thread:$0]  %s30, 128, %s32, [#allocation3]
    $region5: #{tpu_custom_call.1} parent=1 // pred_fallthru
      _
    // Predicated region
    $region6: #{tpu_custom_call.1} parent=1 // pred_check
      _
    $region7: #{tpu_custom_call.1} parent=1 // pred_check_branch
      %36 = sbr.rel (0) target = $region9
    $region8: #{tpu_custom_call.1} parent=1 // pred_region
      %38 = vsyncadd [#allocation6], 0
      %s39 = sshll.u32 %s1, 4
      %s40 = int_to_ptr.hbm [resolvable:$true] %s39
      %s41 = sshll.u32 [#allocation5], 4
      %s42 = int_to_ptr.vmem [resolvable:$true] %s41
      %47 = dma.hbm_to_vmem [thread:$0]  %s40, 8192, %s42, [#allocation6], 256, 256, 16
    $region9: #{tpu_custom_call.1} parent=1 // pred_fallthru
      _
    // Predicated region
    $region10: #{tpu_custom_call.1} parent=1 // pred_check
      _
    $region11: #{tpu_custom_call.1} parent=1 // pred_check_branch
      %49 = sbr.rel (0) target = $region13
    $region12: #{tpu_custom_call.1} parent=1 // pred_region
      %51 = vsyncadd [#allocation6], 0
      %s53 = sshll.u32 %s2, 4
      %s54 = int_to_ptr.hbm [resolvable:$true] %s53
      %s55 = sshll.u32 [#allocation7], 4
      %s56 = int_to_ptr.vmem [resolvable:$true] %s55
      %58 = dma.hbm_to_vmem [thread:$0]  %s54, 64, %s56, [#allocation6]
    $region13: #{tpu_custom_call.1} parent=1 // pred_fallthru
      _
    // Predicated region
    $region14: #{tpu_custom_call.1} parent=1 // pred_check
      _
    $region15: #{tpu_custom_call.1} parent=1 // pred_check_branch
      %60 = sbr.rel (0) target = $region17
    $region16: #{tpu_custom_call.1} parent=1 // pred_region
      %62 = vsyncadd [#allocation9], 0
      %s63 = sshll.u32 %s3, 4
      %s64 = int_to_ptr.hbm [resolvable:$true] %s63
      %s65 = sshll.u32 [#allocation8], 4
      %s66 = int_to_ptr.vmem [resolvable:$true] %s65
      %71 = dma.hbm_to_vmem [thread:$0]  %s64, 32768, %s66, [#allocation9], 512, 512, 32
    $region17: #{tpu_custom_call.1} parent=1 // pred_fallthru
      _
    // Predicated region
    $region18: #{tpu_custom_call.1} parent=1 // pred_check
      _
    $region19: #{tpu_custom_call.1} parent=1 // pred_check_branch
      %73 = sbr.rel (0) target = $region21
    $region20: #{tpu_custom_call.1} parent=1 // pred_region
      %75 = vsyncadd [#allocation9], 0
      %s77 = sshll.u32 %s4, 4
      %s78 = int_to_ptr.hbm [resolvable:$true] %s77
      %s79 = sshll.u32 [#allocation10], 4
      %s80 = int_to_ptr.vmem [resolvable:$true] %s79
      %82 = dma.hbm_to_vmem [thread:$0]  %s78, 128, %s80, [#allocation9]
    $region21: #{tpu_custom_call.1} parent=1 // pred_fallthru
      _
    // Predicated region
    $region22: #{tpu_custom_call.1} parent=1 // pred_check
      _
    $region23: #{tpu_custom_call.1} parent=1 // pred_check_branch
      %84 = sbr.rel (0) target = $region25
    $region24: #{tpu_custom_call.1} parent=1 // pred_region
      %86 = vsyncadd [#allocation12], 0
      %s87 = sshll.u32 %s5, 4
      %s88 = int_to_ptr.hbm [resolvable:$true] %s87
      %s89 = sshll.u32 [#allocation11], 4
      %s90 = int_to_ptr.vmem [resolvable:$true] %s89
      %95 = dma.hbm_to_vmem [thread:$0]  %s88, 32768, %s90, [#allocation12], 256, 256, 16
    $region25: #{tpu_custom_call.1} parent=1 // pred_fallthru
      _
    // Predicated region
    $region26: #{tpu_custom_call.1} parent=1 // pred_check
      _
    $region27: #{tpu_custom_call.1} parent=1 // pred_check_branch
      %97 = sbr.rel (0) target = $region29
    $region28: #{tpu_custom_call.1} parent=1 // pred_region
      _
    $region29: #{tpu_custom_call.1} parent=1 // pred_fallthru
      _
    // Predicated region
    $region30: #{tpu_custom_call.1} parent=1 // pred_check
      _
    $region31: #{tpu_custom_call.1} parent=1 // pred_check_branch
      %99 = sbr.rel (0) target = $region33
    $region32: #{tpu_custom_call.1} parent=1 // pred_region
      %101 = vsyncadd [#allocation12], 0
      %s102 = sshll.u32 %s7, 4
      %s103 = int_to_ptr.hbm [resolvable:$true] %s102
      %s104 = sshll.u32 [#allocation13], 4
      %s105 = int_to_ptr.vmem [resolvable:$true] %s104
      %110 = dma.hbm_to_vmem [thread:$0]  %s103, 8192, %s105, [#allocation12], 128, 128, 8
    $region33: #{tpu_custom_call.1} parent=1 // pred_fallthru
      _
    // Predicated region
    $region34: #{tpu_custom_call.1} parent=1 // pred_check
      _
    $region35: #{tpu_custom_call.1} parent=1 // pred_check_branch
      %112 = sbr.rel (0) target = $region37
    $region36: #{tpu_custom_call.1} parent=1 // pred_region
      _
    $region37: #{tpu_custom_call.1} parent=1 // pred_fallthru
      _
    // Predicated region
    $region38: #{tpu_custom_call.1} parent=1 // pred_check
      _
    $region39: #{tpu_custom_call.1} parent=1 // pred_check_branch
      %114 = sbr.rel (0) target = $region41
    $region40: #{tpu_custom_call.1} parent=1 // pred_region
      %116 = vsyncadd [#allocation15], 0
      %s117 = sshll.u32 %s9, 4
      %s118 = int_to_ptr.hbm [resolvable:$true] %s117
      %s119 = sshll.u32 [#allocation14], 4
      %s120 = int_to_ptr.vmem [resolvable:$true] %s119
      %125 = dma.hbm_to_vmem [thread:$0]  %s118, 2048, %s120, [#allocation15], 64, 64, 4
    $region41: #{tpu_custom_call.1} parent=1 // pred_fallthru
      _
    // Predicated region
    $region42: #{tpu_custom_call.1} parent=1 // pred_check
      _
    $region43: #{tpu_custom_call.1} parent=1 // pred_check_branch
      %127 = sbr.rel (0) target = $region45
    $region44: #{tpu_custom_call.1} parent=1 // pred_region
      _
    $region45: #{tpu_custom_call.1} parent=1 // pred_fallthru
      _
    // Predicated region
    $region46: #{tpu_custom_call.1} parent=1 // pred_check
      _
    $region47: #{tpu_custom_call.1} parent=1 // pred_check_branch
      %129 = sbr.rel (0) target = $region49
    $region48: #{tpu_custom_call.1} parent=1 // pred_region
      %131 = vsyncadd [#allocation15], 0
      %s132 = sshll.u32 %s11, 4
      %s133 = int_to_ptr.hbm [resolvable:$true] %s132
      %s134 = sshll.u32 [#allocation16], 4
      %s135 = int_to_ptr.vmem [resolvable:$true] %s134
      %140 = dma.hbm_to_vmem [thread:$0]  %s133, 1024, %s135, [#allocation15], 64, 64, 4
    $region49: #{tpu_custom_call.1} parent=1 // pred_fallthru
      _
    // Predicated region
    $region50: #{tpu_custom_call.1} parent=1 // pred_check
      _
    $region51: #{tpu_custom_call.1} parent=1 // pred_check_branch
      %142 = sbr.rel (0) target = $region53
    $region52: #{tpu_custom_call.1} parent=1 // pred_region
      _
    $region53: #{tpu_custom_call.1} parent=1 // pred_fallthru
      _
    // Predicated region
    $region54: #{tpu_custom_call.1} parent=1 // pred_check
      _
    $region55: #{tpu_custom_call.1} parent=1 // pred_check_branch
      %144 = sbr.rel (0) target = $region57
    $region56: #{tpu_custom_call.1} parent=1 // pred_region
      %146 = dma.done [#allocation3], 128
    $region57: #{tpu_custom_call.1} parent=1 // pred_fallthru
      _
    // Predicated region
    $region58: #{tpu_custom_call.1} parent=1 // pred_check
      _
    $region59: #{tpu_custom_call.1} parent=1 // pred_check_branch
      %148 = sbr.rel (0) target = $region61
    $region60: #{tpu_custom_call.1} parent=1 // pred_region
      %150 = dma.done [#allocation6], 8192
    $region61: #{tpu_custom_call.1} parent=1 // pred_fallthru
      _
    // Predicated region
    $region62: #{tpu_custom_call.1} parent=1 // pred_check
      _
    $region63: #{tpu_custom_call.1} parent=1 // pred_check_branch
      %152 = sbr.rel (0) target = $region65
    $region64: #{tpu_custom_call.1} parent=1 // pred_region
      %154 = dma.done [#allocation6], 64
    $region65: #{tpu_custom_call.1} parent=1 // pred_fallthru
      _
    // Predicated region
    $region66: #{tpu_custom_call.1} parent=1 // pred_check
      _
    $region67: #{tpu_custom_call.1} parent=1 // pred_check_branch
      %156 = sbr.rel (0) target = $region69
    $region68: #{tpu_custom_call.1} parent=1 // pred_region
      %158 = dma.done [#allocation9], 32768
    $region69: #{tpu_custom_call.1} parent=1 // pred_fallthru
      _
    // Predicated region
    $region70: #{tpu_custom_call.1} parent=1 // pred_check
      _
    $region71: #{tpu_custom_call.1} parent=1 // pred_check_branch
      %160 = sbr.rel (0) target = $region73
    $region72: #{tpu_custom_call.1} parent=1 // pred_region
      %162 = dma.done [#allocation9], 128
    $region73: #{tpu_custom_call.1} parent=1 // pred_fallthru
      _
    // Predicated region
    $region74: #{tpu_custom_call.1} parent=1 // pred_check
      _
    $region75: #{tpu_custom_call.1} parent=1 // pred_check_branch
      %164 = sbr.rel (0) target = $region77
    $region76: #{tpu_custom_call.1} parent=1 // pred_region
      %166 = dma.done [#allocation12], 32768
    $region77: #{tpu_custom_call.1} parent=1 // pred_fallthru
      _
    // Predicated region
    $region78: #{tpu_custom_call.1} parent=1 // pred_check
      _
    $region79: #{tpu_custom_call.1} parent=1 // pred_check_branch
      %168 = sbr.rel (0) target = $region81
    $region80: #{tpu_custom_call.1} parent=1 // pred_region
      %170 = dma.done [#allocation12], 8192
    $region81: #{tpu_custom_call.1} parent=1 // pred_fallthru
      _
    // Predicated region
    $region82: #{tpu_custom_call.1} parent=1 // pred_check
      _
    $region83: #{tpu_custom_call.1} parent=1 // pred_check_branch
      %172 = sbr.rel (0) target = $region85
    $region84: #{tpu_custom_call.1} parent=1 // pred_region
      %174 = dma.done [#allocation15], 2048
    $region85: #{tpu_custom_call.1} parent=1 // pred_fallthru
      _
    // Predicated region
    $region86: #{tpu_custom_call.1} parent=1 // pred_check
      _
    $region87: #{tpu_custom_call.1} parent=1 // pred_check_branch
      %176 = sbr.rel (0) target = $region89
    $region88: #{tpu_custom_call.1} parent=1 // pred_region
      %178 = dma.done [#allocation15], 1024
    $region89: #{tpu_custom_call.1} parent=1 // pred_fallthru
      _
    %v179 = vld [vmem:[#allocation2] sm:$0xff]
    %v180 = vld [vmem:[#allocation5] sm:$0xff]
    %v181 = vld [vmem:[#allocation5 + $0x8] sm:$0xff]
    %v182 = vld [vmem:[#allocation5 + $0x10] sm:$0xff]
    %v183 = vld [vmem:[#allocation5 + $0x18] sm:$0xff]
    %v184 = vld [vmem:[#allocation5 + $0x20] sm:$0xff]
    %v185 = vld [vmem:[#allocation5 + $0x28] sm:$0xff]
    %v186 = vld [vmem:[#allocation5 + $0x30] sm:$0xff]
    %v187 = vld [vmem:[#allocation5 + $0x38] sm:$0xff]
    %v188 = vld [vmem:[#allocation5 + $0x40] sm:$0xff]
    %v189 = vld [vmem:[#allocation5 + $0x48] sm:$0xff]
    %v190 = vld [vmem:[#allocation5 + $0x50] sm:$0xff]
    %v191 = vld [vmem:[#allocation5 + $0x58] sm:$0xff]
    %v192 = vld [vmem:[#allocation5 + $0x60] sm:$0xff]
    %v193 = vld [vmem:[#allocation5 + $0x68] sm:$0xff]
    %v194 = vld [vmem:[#allocation5 + $0x70] sm:$0xff]
    %v195 = vld [vmem:[#allocation5 + $0x78] sm:$0xff]
    %v196 = vld [vmem:[#allocation5 + $0x80] sm:$0xff]
    %v197 = vld [vmem:[#allocation5 + $0x88] sm:$0xff]
    %v198 = vld [vmem:[#allocation5 + $0x90] sm:$0xff]
    %v199 = vld [vmem:[#allocation5 + $0x98] sm:$0xff]
    %v200 = vld [vmem:[#allocation5 + $0xa0] sm:$0xff]
    %v201 = vld [vmem:[#allocation5 + $0xa8] sm:$0xff]
    %v202 = vld [vmem:[#allocation5 + $0xb0] sm:$0xff]
    %v203 = vld [vmem:[#allocation5 + $0xb8] sm:$0xff]
    %v204 = vld [vmem:[#allocation5 + $0xc0] sm:$0xff]
    %v205 = vld [vmem:[#allocation5 + $0xc8] sm:$0xff]
    %v206 = vld [vmem:[#allocation5 + $0xd0] sm:$0xff]
    %v207 = vld [vmem:[#allocation5 + $0xd8] sm:$0xff]
    %v208 = vld [vmem:[#allocation5 + $0xe0] sm:$0xff]
    %v209 = vld [vmem:[#allocation5 + $0xe8] sm:$0xff]
    %v210 = vld [vmem:[#allocation5 + $0xf0] sm:$0xff]
    %v211 = vld [vmem:[#allocation5 + $0xf8] sm:$0xff]
    %v212 = vld [vmem:[#allocation5 + $0x100] sm:$0xff]
    %v213 = vld [vmem:[#allocation5 + $0x108] sm:$0xff]
    %v214 = vld [vmem:[#allocation5 + $0x110] sm:$0xff]
    %v215 = vld [vmem:[#allocation5 + $0x118] sm:$0xff]
    %v216 = vld [vmem:[#allocation5 + $0x120] sm:$0xff]
    %v217 = vld [vmem:[#allocation5 + $0x128] sm:$0xff]
    %v218 = vld [vmem:[#allocation5 + $0x130] sm:$0xff]
    %v219 = vld [vmem:[#allocation5 + $0x138] sm:$0xff]
    %v220 = vld [vmem:[#allocation5 + $0x140] sm:$0xff]
    %v221 = vld [vmem:[#allocation5 + $0x148] sm:$0xff]
    %v222 = vld [vmem:[#allocation5 + $0x150] sm:$0xff]
    %v223 = vld [vmem:[#allocation5 + $0x158] sm:$0xff]
    %v224 = vld [vmem:[#allocation5 + $0x160] sm:$0xff]
    %v225 = vld [vmem:[#allocation5 + $0x168] sm:$0xff]
    %v226 = vld [vmem:[#allocation5 + $0x170] sm:$0xff]
    %v227 = vld [vmem:[#allocation5 + $0x178] sm:$0xff]
    %v228 = vld [vmem:[#allocation5 + $0x180] sm:$0xff]
    %v229 = vld [vmem:[#allocation5 + $0x188] sm:$0xff]
    %v230 = vld [vmem:[#allocation5 + $0x190] sm:$0xff]
    %v231 = vld [vmem:[#allocation5 + $0x198] sm:$0xff]
    %v232 = vld [vmem:[#allocation5 + $0x1a0] sm:$0xff]
    %v233 = vld [vmem:[#allocation5 + $0x1a8] sm:$0xff]
    %v234 = vld [vmem:[#allocation5 + $0x1b0] sm:$0xff]
    %v235 = vld [vmem:[#allocation5 + $0x1b8] sm:$0xff]
    %v236 = vld [vmem:[#allocation5 + $0x1c0] sm:$0xff]
    %v237 = vld [vmem:[#allocation5 + $0x1c8] sm:$0xff]
    %v238 = vld [vmem:[#allocation5 + $0x1d0] sm:$0xff]
    %v239 = vld [vmem:[#allocation5 + $0x1d8] sm:$0xff]
    %v240 = vld [vmem:[#allocation5 + $0x1e0] sm:$0xff]
    %v241 = vld [vmem:[#allocation5 + $0x1e8] sm:$0xff]
    %v242 = vld [vmem:[#allocation5 + $0x1f0] sm:$0xff]
    %v243 = vld [vmem:[#allocation5 + $0x1f8] sm:$0xff]
    %v244 = vld [vmem:[#allocation7] sm:$0xf]
    %v246 = vperm.slane %v244, 0
    %v247 = vperm.slane %v244, 1
    %v248 = vperm.slane %v244, 2
    %v249 = vperm.slane %v244, 3
    %v255 = vunpack.c.l.b16 %v179
    %v256 = vunpack.c.h.b16 %v179
    %v257 = vpack.c.b16 %v255, %v255
    %v258 = vpack.c.b16 %v256, %v256
    %v325 = vunpack.c.l.b16 %v180
    %v326 = vunpack.c.h.b16 %v180
    %v327 = vunpack.c.l.b16 %v181
    %v328 = vunpack.c.h.b16 %v181
    %v329 = vunpack.c.l.b16 %v182
    %v330 = vunpack.c.h.b16 %v182
    %v331 = vunpack.c.l.b16 %v183
    %v332 = vunpack.c.h.b16 %v183
    %v333 = vunpack.c.l.b16 %v184
    %v334 = vunpack.c.h.b16 %v184
    %v335 = vunpack.c.l.b16 %v185
    %v336 = vunpack.c.h.b16 %v185
    %v337 = vunpack.c.l.b16 %v186
    %v338 = vunpack.c.h.b16 %v186
    %v339 = vunpack.c.l.b16 %v187
    %v340 = vunpack.c.h.b16 %v187
    %v341 = vunpack.c.l.b16 %v188
    %v342 = vunpack.c.h.b16 %v188
    %v343 = vunpack.c.l.b16 %v189
    %v344 = vunpack.c.h.b16 %v189
    %v345 = vunpack.c.l.b16 %v190
    %v346 = vunpack.c.h.b16 %v190
    %v347 = vunpack.c.l.b16 %v191
    %v348 = vunpack.c.h.b16 %v191
    %v349 = vunpack.c.l.b16 %v192
    %v350 = vunpack.c.h.b16 %v192
    %v351 = vunpack.c.l.b16 %v193
    %v352 = vunpack.c.h.b16 %v193
    %v353 = vunpack.c.l.b16 %v194
    %v354 = vunpack.c.h.b16 %v194
    %v355 = vunpack.c.l.b16 %v195
    %v356 = vunpack.c.h.b16 %v195
    %v357 = vunpack.c.l.b16 %v196
    %v358 = vunpack.c.h.b16 %v196
    %v359 = vunpack.c.l.b16 %v197
    %v360 = vunpack.c.h.b16 %v197
    %v361 = vunpack.c.l.b16 %v198
    %v362 = vunpack.c.h.b16 %v198
    %v363 = vunpack.c.l.b16 %v199
    %v364 = vunpack.c.h.b16 %v199
    %v365 = vunpack.c.l.b16 %v200
    %v366 = vunpack.c.h.b16 %v200
    %v367 = vunpack.c.l.b16 %v201
    %v368 = vunpack.c.h.b16 %v201
    %v369 = vunpack.c.l.b16 %v202
    %v370 = vunpack.c.h.b16 %v202
    %v371 = vunpack.c.l.b16 %v203
    %v372 = vunpack.c.h.b16 %v203
    %v373 = vunpack.c.l.b16 %v204
    %v374 = vunpack.c.h.b16 %v204
    %v375 = vunpack.c.l.b16 %v205
    %v376 = vunpack.c.h.b16 %v205
    %v377 = vunpack.c.l.b16 %v206
    %v378 = vunpack.c.h.b16 %v206
    %v379 = vunpack.c.l.b16 %v207
    %v380 = vunpack.c.h.b16 %v207
    %v381 = vunpack.c.l.b16 %v208
    %v382 = vunpack.c.h.b16 %v208
    %v383 = vunpack.c.l.b16 %v209
    %v384 = vunpack.c.h.b16 %v209
    %v385 = vunpack.c.l.b16 %v210
    %v386 = vunpack.c.h.b16 %v210
    %v387 = vunpack.c.l.b16 %v211
    %v388 = vunpack.c.h.b16 %v211
    %v389 = vunpack.c.l.b16 %v212
    %v390 = vunpack.c.h.b16 %v212
    %v391 = vunpack.c.l.b16 %v213
    %v392 = vunpack.c.h.b16 %v213
    %v393 = vunpack.c.l.b16 %v214
    %v394 = vunpack.c.h.b16 %v214
    %v395 = vunpack.c.l.b16 %v215
    %v396 = vunpack.c.h.b16 %v215
    %v397 = vunpack.c.l.b16 %v216
    %v398 = vunpack.c.h.b16 %v216
    %v399 = vunpack.c.l.b16 %v217
    %v400 = vunpack.c.h.b16 %v217
    %v401 = vunpack.c.l.b16 %v218
    %v402 = vunpack.c.h.b16 %v218
    %v403 = vunpack.c.l.b16 %v219
    %v404 = vunpack.c.h.b16 %v219
    %v405 = vunpack.c.l.b16 %v220
    %v406 = vunpack.c.h.b16 %v220
    %v407 = vunpack.c.l.b16 %v221
    %v408 = vunpack.c.h.b16 %v221
    %v409 = vunpack.c.l.b16 %v222
    %v410 = vunpack.c.h.b16 %v222
    %v411 = vunpack.c.l.b16 %v223
    %v412 = vunpack.c.h.b16 %v223
    %v413 = vunpack.c.l.b16 %v224
    %v414 = vunpack.c.h.b16 %v224
    %v415 = vunpack.c.l.b16 %v225
    %v416 = vunpack.c.h.b16 %v225
    %v417 = vunpack.c.l.b16 %v226
    %v418 = vunpack.c.h.b16 %v226
    %v419 = vunpack.c.l.b16 %v227
    %v420 = vunpack.c.h.b16 %v227
    %v421 = vunpack.c.l.b16 %v228
    %v422 = vunpack.c.h.b16 %v228
    %v423 = vunpack.c.l.b16 %v229
    %v424 = vunpack.c.h.b16 %v229
    %v425 = vunpack.c.l.b16 %v230
    %v426 = vunpack.c.h.b16 %v230
    %v427 = vunpack.c.l.b16 %v231
    %v428 = vunpack.c.h.b16 %v231
    %v429 = vunpack.c.l.b16 %v232
    %v430 = vunpack.c.h.b16 %v232
    %v431 = vunpack.c.l.b16 %v233
    %v432 = vunpack.c.h.b16 %v233
    %v433 = vunpack.c.l.b16 %v234
    %v434 = vunpack.c.h.b16 %v234
    %v435 = vunpack.c.l.b16 %v235
    %v436 = vunpack.c.h.b16 %v235
    %v437 = vunpack.c.l.b16 %v236
    %v438 = vunpack.c.h.b16 %v236
    %v439 = vunpack.c.l.b16 %v237
    %v440 = vunpack.c.h.b16 %v237
    %v441 = vunpack.c.l.b16 %v238
    %v442 = vunpack.c.h.b16 %v238
    %v443 = vunpack.c.l.b16 %v239
    %v444 = vunpack.c.h.b16 %v239
    %v445 = vunpack.c.l.b16 %v240
    %v446 = vunpack.c.h.b16 %v240
    %v447 = vunpack.c.l.b16 %v241
    %v448 = vunpack.c.h.b16 %v241
    %v449 = vunpack.c.l.b16 %v242
    %v450 = vunpack.c.h.b16 %v242
    %v451 = vunpack.c.l.b16 %v243
    %v452 = vunpack.c.h.b16 %v243
    %v453 = vpack.c.b16 %v329, %v325
    %v454 = vpack.c.b16 %v330, %v326
    %v455 = vpack.c.b16 %v331, %v327
    %v456 = vpack.c.b16 %v332, %v328
    %v457 = vpack.c.b16 %v337, %v333
    %v458 = vpack.c.b16 %v338, %v334
    %v459 = vpack.c.b16 %v339, %v335
    %v460 = vpack.c.b16 %v340, %v336
    %v461 = vpack.c.b16 %v345, %v341
    %v462 = vpack.c.b16 %v346, %v342
    %v463 = vpack.c.b16 %v347, %v343
    %v464 = vpack.c.b16 %v348, %v344
    %v465 = vpack.c.b16 %v353, %v349
    %v466 = vpack.c.b16 %v354, %v350
    %v467 = vpack.c.b16 %v355, %v351
    %v468 = vpack.c.b16 %v356, %v352
    %v469 = vpack.c.b16 %v361, %v357
    %v470 = vpack.c.b16 %v362, %v358
    %v471 = vpack.c.b16 %v363, %v359
    %v472 = vpack.c.b16 %v364, %v360
    %v473 = vpack.c.b16 %v369, %v365
    %v474 = vpack.c.b16 %v370, %v366
    %v475 = vpack.c.b16 %v371, %v367
    %v476 = vpack.c.b16 %v372, %v368
    %v477 = vpack.c.b16 %v377, %v373
    %v478 = vpack.c.b16 %v378, %v374
    %v479 = vpack.c.b16 %v379, %v375
    %v480 = vpack.c.b16 %v380, %v376
    %v481 = vpack.c.b16 %v385, %v381
    %v482 = vpack.c.b16 %v386, %v382
    %v483 = vpack.c.b16 %v387, %v383
    %v484 = vpack.c.b16 %v388, %v384
    %v485 = vpack.c.b16 %v393, %v389
    %v486 = vpack.c.b16 %v394, %v390
    %v487 = vpack.c.b16 %v395, %v391
    %v488 = vpack.c.b16 %v396, %v392
    %v489 = vpack.c.b16 %v401, %v397
    %v490 = vpack.c.b16 %v402, %v398
    %v491 = vpack.c.b16 %v403, %v399
    %v492 = vpack.c.b16 %v404, %v400
    %v493 = vpack.c.b16 %v409, %v405
    %v494 = vpack.c.b16 %v410, %v406
    %v495 = vpack.c.b16 %v411, %v407
    %v496 = vpack.c.b16 %v412, %v408
    %v497 = vpack.c.b16 %v417, %v413
    %v498 = vpack.c.b16 %v418, %v414
    %v499 = vpack.c.b16 %v419, %v415
    %v500 = vpack.c.b16 %v420, %v416
    %v501 = vpack.c.b16 %v425, %v421
    %v502 = vpack.c.b16 %v426, %v422
    %v503 = vpack.c.b16 %v427, %v423
    %v504 = vpack.c.b16 %v428, %v424
    %v505 = vpack.c.b16 %v433, %v429
    %v506 = vpack.c.b16 %v434, %v430
    %v507 = vpack.c.b16 %v435, %v431
    %v508 = vpack.c.b16 %v436, %v432
    %v509 = vpack.c.b16 %v441, %v437
    %v510 = vpack.c.b16 %v442, %v438
    %v511 = vpack.c.b16 %v443, %v439
    %v512 = vpack.c.b16 %v444, %v440
    %v513 = vpack.c.b16 %v449, %v445
    %v514 = vpack.c.b16 %v450, %v446
    %v515 = vpack.c.b16 %v451, %v447
    %v516 = vpack.c.b16 %v452, %v448
    %581 = vmatpush.bf16.msra.mxu0 %v481
    %582 = vmatpush.bf16.msra.mxu0 %v477
    %583 = vmatpush.bf16.msra.mxu0 %v473
    %584 = vmatpush.bf16.msra.mxu0 %v469
    %585 = vmatpush.bf16.msra.mxu0 %v465
    %586 = vmatpush.bf16.msra.mxu0 %v461
    %587 = vmatpush.bf16.msra.mxu0 %v457
    %588 = vmatpush.bf16.msra.mxu0 %v453
    %589 = vmatmul.bf16.gmra.mxu0 %v257
    %v590 = vpop.f32.mrf.mxu0
    %v591 = vadd.f32 %v246, %v590
    %v592 = vpop.f32.mrf.mxu0
    %593 = vdwg.mxu0
    %594 = vmatpush.bf16.msra.mxu0 %v513
    %595 = vmatpush.bf16.msra.mxu0 %v509
    %596 = vmatpush.bf16.msra.mxu0 %v505
    %597 = vmatpush.bf16.msra.mxu0 %v501
    %598 = vmatpush.bf16.msra.mxu0 %v497
    %599 = vmatpush.bf16.msra.mxu0 %v493
    %600 = vmatpush.bf16.msra.mxu0 %v489
    %601 = vmatpush.bf16.msra.mxu0 %v485
    %602 = vmatmul.bf16.gmra.mxu0 %v258
    %v603 = vpop.f32.mrf.mxu0
    %v604 = vadd.f32 %v591, %v603
    %v605 = vpop.f32.mrf.mxu0
    %606 = vdwg.mxu0
    %607 = vmatpush.bf16.msra.mxu0 %v482
    %608 = vmatpush.bf16.msra.mxu0 %v478
    %609 = vmatpush.bf16.msra.mxu0 %v474
    %610 = vmatpush.bf16.msra.mxu0 %v470
    %611 = vmatpush.bf16.msra.mxu0 %v466
    %612 = vmatpush.bf16.msra.mxu0 %v462
    %613 = vmatpush.bf16.msra.mxu0 %v458
    %614 = vmatpush.bf16.msra.mxu0 %v454
    %615 = vmatmul.bf16.gmra.mxu0 %v257
    %v616 = vpop.f32.mrf.mxu0
    %v617 = vadd.f32 %v247, %v616
    %v618 = vpop.f32.mrf.mxu0
    %619 = vdwg.mxu0
    %620 = vmatpush.bf16.msra.mxu0 %v514
    %621 = vmatpush.bf16.msra.mxu0 %v510
    %622 = vmatpush.bf16.msra.mxu0 %v506
    %623 = vmatpush.bf16.msra.mxu0 %v502
    %624 = vmatpush.bf16.msra.mxu0 %v498
    %625 = vmatpush.bf16.msra.mxu0 %v494
    %626 = vmatpush.bf16.msra.mxu0 %v490
    %627 = vmatpush.bf16.msra.mxu0 %v486
    %628 = vmatmul.bf16.gmra.mxu0 %v258
    %v629 = vpop.f32.mrf.mxu0
    %v630 = vadd.f32 %v617, %v629
    %v631 = vpop.f32.mrf.mxu0
    %632 = vdwg.mxu0
    %633 = vmatpush.bf16.msra.mxu0 %v483
    %634 = vmatpush.bf16.msra.mxu0 %v479
    %635 = vmatpush.bf16.msra.mxu0 %v475
    %636 = vmatpush.bf16.msra.mxu0 %v471
    %637 = vmatpush.bf16.msra.mxu0 %v467
    %638 = vmatpush.bf16.msra.mxu0 %v463
    %639 = vmatpush.bf16.msra.mxu0 %v459
    %640 = vmatpush.bf16.msra.mxu0 %v455
    %641 = vmatmul.bf16.gmra.mxu0 %v257
    %v642 = vpop.f32.mrf.mxu0
    %v643 = vadd.f32 %v248, %v642
    %v644 = vpop.f32.mrf.mxu0
    %645 = vdwg.mxu0
    %646 = vmatpush.bf16.msra.mxu0 %v515
    %647 = vmatpush.bf16.msra.mxu0 %v511
    %648 = vmatpush.bf16.msra.mxu0 %v507
    %649 = vmatpush.bf16.msra.mxu0 %v503
    %650 = vmatpush.bf16.msra.mxu0 %v499
    %651 = vmatpush.bf16.msra.mxu0 %v495
    %652 = vmatpush.bf16.msra.mxu0 %v491
    %653 = vmatpush.bf16.msra.mxu0 %v487
    %654 = vmatmul.bf16.gmra.mxu0 %v258
    %v655 = vpop.f32.mrf.mxu0
    %v656 = vadd.f32 %v643, %v655
    %v657 = vpop.f32.mrf.mxu0
    %658 = vdwg.mxu0
    %659 = vmatpush.bf16.msra.mxu0 %v484
    %660 = vmatpush.bf16.msra.mxu0 %v480
    %661 = vmatpush.bf16.msra.mxu0 %v476
    %662 = vmatpush.bf16.msra.mxu0 %v472
    %663 = vmatpush.bf16.msra.mxu0 %v468
    %664 = vmatpush.bf16.msra.mxu0 %v464
    %665 = vmatpush.bf16.msra.mxu0 %v460
    %666 = vmatpush.bf16.msra.mxu0 %v456
    %667 = vmatmul.bf16.gmra.mxu0 %v257
    %v668 = vpop.f32.mrf.mxu0
    %v669 = vadd.f32 %v249, %v668
    %v670 = vpop.f32.mrf.mxu0
    %671 = vdwg.mxu0
    %672 = vmatpush.bf16.msra.mxu0 %v516
    %673 = vmatpush.bf16.msra.mxu0 %v512
    %674 = vmatpush.bf16.msra.mxu0 %v508
    %675 = vmatpush.bf16.msra.mxu0 %v504
    %676 = vmatpush.bf16.msra.mxu0 %v500
    %677 = vmatpush.bf16.msra.mxu0 %v496
    %678 = vmatpush.bf16.msra.mxu0 %v492
    %679 = vmatpush.bf16.msra.mxu0 %v488
    %680 = vmatmul.bf16.gmra.mxu0 %v258
    %v681 = vpop.f32.mrf.mxu0
    %v682 = vadd.f32 %v669, %v681
    %v683 = vpop.f32.mrf.mxu0
    %684 = vdwg.mxu0
    %v685 = vpack.c.bf16 %v604, %v604
    %v686 = vpack.c.bf16 %v630, %v630
    %v687 = vpack.c.bf16 %v656, %v656
    %v688 = vpack.c.bf16 %v682, %v682
    %v689 = vld [vmem:[#allocation8] sm:$0xff]
    %v690 = vld [vmem:[#allocation8 + $0x8] sm:$0xff]
    %v691 = vld [vmem:[#allocation8 + $0x10] sm:$0xff]
    %v692 = vld [vmem:[#allocation8 + $0x18] sm:$0xff]
    %v693 = vld [vmem:[#allocation8 + $0x20] sm:$0xff]
    %v694 = vld [vmem:[#allocation8 + $0x28] sm:$0xff]
    %v695 = vld [vmem:[#allocation8 + $0x30] sm:$0xff]
    %v696 = vld [vmem:[#allocation8 + $0x38] sm:$0xff]
    %v697 = vld [vmem:[#allocation8 + $0x40] sm:$0xff]
    %v698 = vld [vmem:[#allocation8 + $0x48] sm:$0xff]
    %v699 = vld [vmem:[#allocation8 + $0x50] sm:$0xff]
    %v700 = vld [vmem:[#allocation8 + $0x58] sm:$0xff]
    %v701 = vld [vmem:[#allocation8 + $0x60] sm:$0xff]
    %v702 = vld [vmem:[#allocation8 + $0x68] sm:$0xff]
    %v703 = vld [vmem:[#allocation8 + $0x70] sm:$0xff]
    %v704 = vld [vmem:[#allocation8 + $0x78] sm:$0xff]
    %v705 = vld [vmem:[#allocation8 + $0x80] sm:$0xff]
    %v706 = vld [vmem:[#allocation8 + $0x88] sm:$0xff]
    %v707 = vld [vmem:[#allocation8 + $0x90] sm:$0xff]
    %v708 = vld [vmem:[#allocation8 + $0x98] sm:$0xff]
    %v709 = vld [vmem:[#allocation8 + $0xa0] sm:$0xff]
    %v710 = vld [vmem:[#allocation8 + $0xa8] sm:$0xff]
    %v711 = vld [vmem:[#allocation8 + $0xb0] sm:$0xff]
    %v712 = vld [vmem:[#allocation8 + $0xb8] sm:$0xff]
    %v713 = vld [vmem:[#allocation8 + $0xc0] sm:$0xff]
    %v714 = vld [vmem:[#allocation8 + $0xc8] sm:$0xff]
    %v715 = vld [vmem:[#allocation8 + $0xd0] sm:$0xff]
    %v716 = vld [vmem:[#allocation8 + $0xd8] sm:$0xff]
    %v717 = vld [vmem:[#allocation8 + $0xe0] sm:$0xff]
    %v718 = vld [vmem:[#allocation8 + $0xe8] sm:$0xff]
    %v719 = vld [vmem:[#allocation8 + $0xf0] sm:$0xff]
    %v720 = vld [vmem:[#allocation8 + $0xf8] sm:$0xff]
    %v721 = vld [vmem:[#allocation8 + $0x100] sm:$0xff]
    %v722 = vld [vmem:[#allocation8 + $0x108] sm:$0xff]
    %v723 = vld [vmem:[#allocation8 + $0x110] sm:$0xff]
    %v724 = vld [vmem:[#allocation8 + $0x118] sm:$0xff]
    %v725 = vld [vmem:[#allocation8 + $0x120] sm:$0xff]
    %v726 = vld [vmem:[#allocation8 + $0x128] sm:$0xff]
    %v727 = vld [vmem:[#allocation8 + $0x130] sm:$0xff]
    %v728 = vld [vmem:[#allocation8 + $0x138] sm:$0xff]
    %v729 = vld [vmem:[#allocation8 + $0x140] sm:$0xff]
    %v730 = vld [vmem:[#allocation8 + $0x148] sm:$0xff]
    %v731 = vld [vmem:[#allocation8 + $0x150] sm:$0xff]
    %v732 = vld [vmem:[#allocation8 + $0x158] sm:$0xff]
    %v733 = vld [vmem:[#allocation8 + $0x160] sm:$0xff]
    %v734 = vld [vmem:[#allocation8 + $0x168] sm:$0xff]
    %v735 = vld [vmem:[#allocation8 + $0x170] sm:$0xff]
    %v736 = vld [vmem:[#allocation8 + $0x178] sm:$0xff]
    %v737 = vld [vmem:[#allocation8 + $0x180] sm:$0xff]
    %v738 = vld [vmem:[#allocation8 + $0x188] sm:$0xff]
    %v739 = vld [vmem:[#allocation8 + $0x190] sm:$0xff]
    %v740 = vld [vmem:[#allocation8 + $0x198] sm:$0xff]
    %v741 = vld [vmem:[#allocation8 + $0x1a0] sm:$0xff]
    %v742 = vld [vmem:[#allocation8 + $0x1a8] sm:$0xff]
    %v743 = vld [vmem:[#allocation8 + $0x1b0] sm:$0xff]
    %v744 = vld [vmem:[#allocation8 + $0x1b8] sm:$0xff]
    %v745 = vld [vmem:[#allocation8 + $0x1c0] sm:$0xff]
    %v746 = vld [vmem:[#allocation8 + $0x1c8] sm:$0xff]
    %v747 = vld [vmem:[#allocation8 + $0x1d0] sm:$0xff]
    %v748 = vld [vmem:[#allocation8 + $0x1d8] sm:$0xff]
    %v749 = vld [vmem:[#allocation8 + $0x1e0] sm:$0xff]
    %v750 = vld [vmem:[#allocation8 + $0x1e8] sm:$0xff]
    %v751 = vld [vmem:[#allocation8 + $0x1f0] sm:$0xff]
    %v752 = vld [vmem:[#allocation8 + $0x1f8] sm:$0xff]
    %v753 = vld [vmem:[#allocation8 + $0x200] sm:$0xff]
    %v754 = vld [vmem:[#allocation8 + $0x208] sm:$0xff]
    %v755 = vld [vmem:[#allocation8 + $0x210] sm:$0xff]
    %v756 = vld [vmem:[#allocation8 + $0x218] sm:$0xff]
    %v757 = vld [vmem:[#allocation8 + $0x220] sm:$0xff]
    %v758 = vld [vmem:[#allocation8 + $0x228] sm:$0xff]
    %v759 = vld [vmem:[#allocation8 + $0x230] sm:$0xff]
    %v760 = vld [vmem:[#allocation8 + $0x238] sm:$0xff]
    %v761 = vld [vmem:[#allocation8 + $0x240] sm:$0xff]
    %v762 = vld [vmem:[#allocation8 + $0x248] sm:$0xff]
    %v763 = vld [vmem:[#allocation8 + $0x250] sm:$0xff]
    %v764 = vld [vmem:[#allocation8 + $0x258] sm:$0xff]
    %v765 = vld [vmem:[#allocation8 + $0x260] sm:$0xff]
    %v766 = vld [vmem:[#allocation8 + $0x268] sm:$0xff]
    %v767 = vld [vmem:[#allocation8 + $0x270] sm:$0xff]
    %v768 = vld [vmem:[#allocation8 + $0x278] sm:$0xff]
    %v769 = vld [vmem:[#allocation8 + $0x280] sm:$0xff]
    %v770 = vld [vmem:[#allocation8 + $0x288] sm:$0xff]
    %v771 = vld [vmem:[#allocation8 + $0x290] sm:$0xff]
    %v772 = vld [vmem:[#allocation8 + $0x298] sm:$0xff]
    %v773 = vld [vmem:[#allocation8 + $0x2a0] sm:$0xff]
    %v774 = vld [vmem:[#allocation8 + $0x2a8] sm:$0xff]
    %v775 = vld [vmem:[#allocation8 + $0x2b0] sm:$0xff]
    %v776 = vld [vmem:[#allocation8 + $0x2b8] sm:$0xff]
    %v777 = vld [vmem:[#allocation8 + $0x2c0] sm:$0xff]
    %v778 = vld [vmem:[#allocation8 + $0x2c8] sm:$0xff]
    %v779 = vld [vmem:[#allocation8 + $0x2d0] sm:$0xff]
    %v780 = vld [vmem:[#allocation8 + $0x2d8] sm:$0xff]
    %v781 = vld [vmem:[#allocation8 + $0x2e0] sm:$0xff]
    %v782 = vld [vmem:[#allocation8 + $0x2e8] sm:$0xff]
    %v783 = vld [vmem:[#allocation8 + $0x2f0] sm:$0xff]
    %v784 = vld [vmem:[#allocation8 + $0x2f8] sm:$0xff]
    %v785 = vld [vmem:[#allocation8 + $0x300] sm:$0xff]
    %v786 = vld [vmem:[#allocation8 + $0x308] sm:$0xff]
    %v787 = vld [vmem:[#allocation8 + $0x310] sm:$0xff]
    %v788 = vld [vmem:[#allocation8 + $0x318] sm:$0xff]
    %v789 = vld [vmem:[#allocation8 + $0x320] sm:$0xff]
    %v790 = vld [vmem:[#allocation8 + $0x328] sm:$0xff]
    %v791 = vld [vmem:[#allocation8 + $0x330] sm:$0xff]
    %v792 = vld [vmem:[#allocation8 + $0x338] sm:$0xff]
    %v793 = vld [vmem:[#allocation8 + $0x340] sm:$0xff]
    %v794 = vld [vmem:[#allocation8 + $0x348] sm:$0xff]
    %v795 = vld [vmem:[#allocation8 + $0x350] sm:$0xff]
    %v796 = vld [vmem:[#allocation8 + $0x358] sm:$0xff]
    %v797 = vld [vmem:[#allocation8 + $0x360] sm:$0xff]
    %v798 = vld [vmem:[#allocation8 + $0x368] sm:$0xff]
    %v799 = vld [vmem:[#allocation8 + $0x370] sm:$0xff]
    %v800 = vld [vmem:[#allocation8 + $0x378] sm:$0xff]
    %v801 = vld [vmem:[#allocation8 + $0x380] sm:$0xff]
    %v802 = vld [vmem:[#allocation8 + $0x388] sm:$0xff]
    %v803 = vld [vmem:[#allocation8 + $0x390] sm:$0xff]
    %v804 = vld [vmem:[#allocation8 + $0x398] sm:$0xff]
    %v805 = vld [vmem:[#allocation8 + $0x3a0] sm:$0xff]
    %v806 = vld [vmem:[#allocation8 + $0x3a8] sm:$0xff]
    %v807 = vld [vmem:[#allocation8 + $0x3b0] sm:$0xff]
    %v808 = vld [vmem:[#allocation8 + $0x3b8] sm:$0xff]
    %v809 = vld [vmem:[#allocation8 + $0x3c0] sm:$0xff]
    %v810 = vld [vmem:[#allocation8 + $0x3c8] sm:$0xff]
    %v811 = vld [vmem:[#allocation8 + $0x3d0] sm:$0xff]
    %v812 = vld [vmem:[#allocation8 + $0x3d8] sm:$0xff]
    %v813 = vld [vmem:[#allocation8 + $0x3e0] sm:$0xff]
    %v814 = vld [vmem:[#allocation8 + $0x3e8] sm:$0xff]
    %v815 = vld [vmem:[#allocation8 + $0x3f0] sm:$0xff]
    %v816 = vld [vmem:[#allocation8 + $0x3f8] sm:$0xff]
    %v817 = vld [vmem:[#allocation8 + $0x400] sm:$0xff]
    %v818 = vld [vmem:[#allocation8 + $0x408] sm:$0xff]
    %v819 = vld [vmem:[#allocation8 + $0x410] sm:$0xff]
    %v820 = vld [vmem:[#allocation8 + $0x418] sm:$0xff]
    %v821 = vld [vmem:[#allocation8 + $0x420] sm:$0xff]
    %v822 = vld [vmem:[#allocation8 + $0x428] sm:$0xff]
    %v823 = vld [vmem:[#allocation8 + $0x430] sm:$0xff]
    %v824 = vld [vmem:[#allocation8 + $0x438] sm:$0xff]
    %v825 = vld [vmem:[#allocation8 + $0x440] sm:$0xff]
    %v826 = vld [vmem:[#allocation8 + $0x448] sm:$0xff]
    %v827 = vld [vmem:[#allocation8 + $0x450] sm:$0xff]
    %v828 = vld [vmem:[#allocation8 + $0x458] sm:$0xff]
    %v829 = vld [vmem:[#allocation8 + $0x460] sm:$0xff]
    %v830 = vld [vmem:[#allocation8 + $0x468] sm:$0xff]
    %v831 = vld [vmem:[#allocation8 + $0x470] sm:$0xff]
    %v832 = vld [vmem:[#allocation8 + $0x478] sm:$0xff]
    %v833 = vld [vmem:[#allocation8 + $0x480] sm:$0xff]
    %v834 = vld [vmem:[#allocation8 + $0x488] sm:$0xff]
    %v835 = vld [vmem:[#allocation8 + $0x490] sm:$0xff]
    %v836 = vld [vmem:[#allocation8 + $0x498] sm:$0xff]
    %v837 = vld [vmem:[#allocation8 + $0x4a0] sm:$0xff]
    %v838 = vld [vmem:[#allocation8 + $0x4a8] sm:$0xff]
    %v839 = vld [vmem:[#allocation8 + $0x4b0] sm:$0xff]
    %v840 = vld [vmem:[#allocation8 + $0x4b8] sm:$0xff]
    %v841 = vld [vmem:[#allocation8 + $0x4c0] sm:$0xff]
    %v842 = vld [vmem:[#allocation8 + $0x4c8] sm:$0xff]
    %v843 = vld [vmem:[#allocation8 + $0x4d0] sm:$0xff]
    %v844 = vld [vmem:[#allocation8 + $0x4d8] sm:$0xff]
    %v845 = vld [vmem:[#allocation8 + $0x4e0] sm:$0xff]
    %v846 = vld [vmem:[#allocation8 + $0x4e8] sm:$0xff]
    %v847 = vld [vmem:[#allocation8 + $0x4f0] sm:$0xff]
    %v848 = vld [vmem:[#allocation8 + $0x4f8] sm:$0xff]
    %v849 = vld [vmem:[#allocation8 + $0x500] sm:$0xff]
    %v850 = vld [vmem:[#allocation8 + $0x508] sm:$0xff]
    %v851 = vld [vmem:[#allocation8 + $0x510] sm:$0xff]
    %v852 = vld [vmem:[#allocation8 + $0x518] sm:$0xff]
    %v853 = vld [vmem:[#allocation8 + $0x520] sm:$0xff]
    %v854 = vld [vmem:[#allocation8 + $0x528] sm:$0xff]
    %v855 = vld [vmem:[#allocation8 + $0x530] sm:$0xff]
    %v856 = vld [vmem:[#allocation8 + $0x538] sm:$0xff]
    %v857 = vld [vmem:[#allocation8 + $0x540] sm:$0xff]
    %v858 = vld [vmem:[#allocation8 + $0x548] sm:$0xff]
    %v859 = vld [vmem:[#allocation8 + $0x550] sm:$0xff]
    %v860 = vld [vmem:[#allocation8 + $0x558] sm:$0xff]
    %v861 = vld [vmem:[#allocation8 + $0x560] sm:$0xff]
    %v862 = vld [vmem:[#allocation8 + $0x568] sm:$0xff]
    %v863 = vld [vmem:[#allocation8 + $0x570] sm:$0xff]
    %v864 = vld [vmem:[#allocation8 + $0x578] sm:$0xff]
    %v865 = vld [vmem:[#allocation8 + $0x580] sm:$0xff]
    %v866 = vld [vmem:[#allocation8 + $0x588] sm:$0xff]
    %v867 = vld [vmem:[#allocation8 + $0x590] sm:$0xff]
    %v868 = vld [vmem:[#allocation8 + $0x598] sm:$0xff]
    %v869 = vld [vmem:[#allocation8 + $0x5a0] sm:$0xff]
    %v870 = vld [vmem:[#allocation8 + $0x5a8] sm:$0xff]
    %v871 = vld [vmem:[#allocation8 + $0x5b0] sm:$0xff]
    %v872 = vld [vmem:[#allocation8 + $0x5b8] sm:$0xff]
    %v873 = vld [vmem:[#allocation8 + $0x5c0] sm:$0xff]
    %v874 = vld [vmem:[#allocation8 + $0x5c8] sm:$0xff]
    %v875 = vld [vmem:[#allocation8 + $0x5d0] sm:$0xff]
    %v876 = vld [vmem:[#allocation8 + $0x5d8] sm:$0xff]
    %v877 = vld [vmem:[#allocation8 + $0x5e0] sm:$0xff]
    %v878 = vld [vmem:[#allocation8 + $0x5e8] sm:$0xff]
    %v879 = vld [vmem:[#allocation8 + $0x5f0] sm:$0xff]
    %v880 = vld [vmem:[#allocation8 + $0x5f8] sm:$0xff]
    %v881 = vld [vmem:[#allocation8 + $0x600] sm:$0xff]
    %v882 = vld [vmem:[#allocation8 + $0x608] sm:$0xff]
    %v883 = vld [vmem:[#allocation8 + $0x610] sm:$0xff]
    %v884 = vld [vmem:[#allocation8 + $0x618] sm:$0xff]
    %v885 = vld [vmem:[#allocation8 + $0x620] sm:$0xff]
    %v886 = vld [vmem:[#allocation8 + $0x628] sm:$0xff]
    %v887 = vld [vmem:[#allocation8 + $0x630] sm:$0xff]
    %v888 = vld [vmem:[#allocation8 + $0x638] sm:$0xff]
    %v889 = vld [vmem:[#allocation8 + $0x640] sm:$0xff]
    %v890 = vld [vmem:[#allocation8 + $0x648] sm:$0xff]
    %v891 = vld [vmem:[#allocation8 + $0x650] sm:$0xff]
    %v892 = vld [vmem:[#allocation8 + $0x658] sm:$0xff]
    %v893 = vld [vmem:[#allocation8 + $0x660] sm:$0xff]
    %v894 = vld [vmem:[#allocation8 + $0x668] sm:$0xff]
    %v895 = vld [vmem:[#allocation8 + $0x670] sm:$0xff]
    %v896 = vld [vmem:[#allocation8 + $0x678] sm:$0xff]
    %v897 = vld [vmem:[#allocation8 + $0x680] sm:$0xff]
    %v898 = vld [vmem:[#allocation8 + $0x688] sm:$0xff]
    %v899 = vld [vmem:[#allocation8 + $0x690] sm:$0xff]
    %v900 = vld [vmem:[#allocation8 + $0x698] sm:$0xff]
    %v901 = vld [vmem:[#allocation8 + $0x6a0] sm:$0xff]
    %v902 = vld [vmem:[#allocation8 + $0x6a8] sm:$0xff]
    %v903 = vld [vmem:[#allocation8 + $0x6b0] sm:$0xff]
    %v904 = vld [vmem:[#allocation8 + $0x6b8] sm:$0xff]
    %v905 = vld [vmem:[#allocation8 + $0x6c0] sm:$0xff]
    %v906 = vld [vmem:[#allocation8 + $0x6c8] sm:$0xff]
    %v907 = vld [vmem:[#allocation8 + $0x6d0] sm:$0xff]
    %v908 = vld [vmem:[#allocation8 + $0x6d8] sm:$0xff]
    %v909 = vld [vmem:[#allocation8 + $0x6e0] sm:$0xff]
    %v910 = vld [vmem:[#allocation8 + $0x6e8] sm:$0xff]
    %v911 = vld [vmem:[#allocation8 + $0x6f0] sm:$0xff]
    %v912 = vld [vmem:[#allocation8 + $0x6f8] sm:$0xff]
    %v913 = vld [vmem:[#allocation8 + $0x700] sm:$0xff]
    %v914 = vld [vmem:[#allocation8 + $0x708] sm:$0xff]
    %v915 = vld [vmem:[#allocation8 + $0x710] sm:$0xff]
    %v916 = vld [vmem:[#allocation8 + $0x718] sm:$0xff]
    %v917 = vld [vmem:[#allocation8 + $0x720] sm:$0xff]
    %v918 = vld [vmem:[#allocation8 + $0x728] sm:$0xff]
    %v919 = vld [vmem:[#allocation8 + $0x730] sm:$0xff]
    %v920 = vld [vmem:[#allocation8 + $0x738] sm:$0xff]
    %v921 = vld [vmem:[#allocation8 + $0x740] sm:$0xff]
    %v922 = vld [vmem:[#allocation8 + $0x748] sm:$0xff]
    %v923 = vld [vmem:[#allocation8 + $0x750] sm:$0xff]
    %v924 = vld [vmem:[#allocation8 + $0x758] sm:$0xff]
    %v925 = vld [vmem:[#allocation8 + $0x760] sm:$0xff]
    %v926 = vld [vmem:[#allocation8 + $0x768] sm:$0xff]
    %v927 = vld [vmem:[#allocation8 + $0x770] sm:$0xff]
    %v928 = vld [vmem:[#allocation8 + $0x778] sm:$0xff]
    %v929 = vld [vmem:[#allocation8 + $0x780] sm:$0xff]
    %v930 = vld [vmem:[#allocation8 + $0x788] sm:$0xff]
    %v931 = vld [vmem:[#allocation8 + $0x790] sm:$0xff]
    %v932 = vld [vmem:[#allocation8 + $0x798] sm:$0xff]
    %v933 = vld [vmem:[#allocation8 + $0x7a0] sm:$0xff]
    %v934 = vld [vmem:[#allocation8 + $0x7a8] sm:$0xff]
    %v935 = vld [vmem:[#allocation8 + $0x7b0] sm:$0xff]
    %v936 = vld [vmem:[#allocation8 + $0x7b8] sm:$0xff]
    %v937 = vld [vmem:[#allocation8 + $0x7c0] sm:$0xff]
    %v938 = vld [vmem:[#allocation8 + $0x7c8] sm:$0xff]
    %v939 = vld [vmem:[#allocation8 + $0x7d0] sm:$0xff]
    %v940 = vld [vmem:[#allocation8 + $0x7d8] sm:$0xff]
    %v941 = vld [vmem:[#allocation8 + $0x7e0] sm:$0xff]
    %v942 = vld [vmem:[#allocation8 + $0x7e8] sm:$0xff]
    %v943 = vld [vmem:[#allocation8 + $0x7f0] sm:$0xff]
    %v944 = vld [vmem:[#allocation8 + $0x7f8] sm:$0xff]
    %v945 = vld [vmem:[#allocation10] sm:$0xff]
    %v947 = vperm.slane %v945, 0
    %v948 = vperm.slane %v945, 1
    %v949 = vperm.slane %v945, 2
    %v950 = vperm.slane %v945, 3
    %v951 = vperm.slane %v945, 4
    %v952 = vperm.slane %v945, 5
    %v953 = vperm.slane %v945, 6
    %v954 = vperm.slane %v945, 7
    %v1219 = vunpack.c.l.b16 %v689
    %v1220 = vunpack.c.h.b16 %v689
    %v1221 = vunpack.c.l.b16 %v690
    %v1222 = vunpack.c.h.b16 %v690
    %v1223 = vunpack.c.l.b16 %v691
    %v1224 = vunpack.c.h.b16 %v691
    %v1225 = vunpack.c.l.b16 %v692
    %v1226 = vunpack.c.h.b16 %v692
    %v1227 = vunpack.c.l.b16 %v693
    %v1228 = vunpack.c.h.b16 %v693
    %v1229 = vunpack.c.l.b16 %v694
    %v1230 = vunpack.c.h.b16 %v694
    %v1231 = vunpack.c.l.b16 %v695
    %v1232 = vunpack.c.h.b16 %v695
    %v1233 = vunpack.c.l.b16 %v696
    %v1234 = vunpack.c.h.b16 %v696
    %v1235 = vunpack.c.l.b16 %v697
    %v1236 = vunpack.c.h.b16 %v697
    %v1237 = vunpack.c.l.b16 %v698
    %v1238 = vunpack.c.h.b16 %v698
    %v1239 = vunpack.c.l.b16 %v699
    %v1240 = vunpack.c.h.b16 %v699
    %v1241 = vunpack.c.l.b16 %v700
    %v1242 = vunpack.c.h.b16 %v700
    %v1243 = vunpack.c.l.b16 %v701
    %v1244 = vunpack.c.h.b16 %v701
    %v1245 = vunpack.c.l.b16 %v702
    %v1246 = vunpack.c.h.b16 %v702
    %v1247 = vunpack.c.l.b16 %v703
    %v1248 = vunpack.c.h.b16 %v703
    %v1249 = vunpack.c.l.b16 %v704
    %v1250 = vunpack.c.h.b16 %v704
    %v1251 = vunpack.c.l.b16 %v705
    %v1252 = vunpack.c.h.b16 %v705
    %v1253 = vunpack.c.l.b16 %v706
    %v1254 = vunpack.c.h.b16 %v706
    %v1255 = vunpack.c.l.b16 %v707
    %v1256 = vunpack.c.h.b16 %v707
    %v1257 = vunpack.c.l.b16 %v708
    %v1258 = vunpack.c.h.b16 %v708
    %v1259 = vunpack.c.l.b16 %v709
    %v1260 = vunpack.c.h.b16 %v709
    %v1261 = vunpack.c.l.b16 %v710
    %v1262 = vunpack.c.h.b16 %v710
    %v1263 = vunpack.c.l.b16 %v711
    %v1264 = vunpack.c.h.b16 %v711
    %v1265 = vunpack.c.l.b16 %v712
    %v1266 = vunpack.c.h.b16 %v712
    %v1267 = vunpack.c.l.b16 %v713
    %v1268 = vunpack.c.h.b16 %v713
    %v1269 = vunpack.c.l.b16 %v714
    %v1270 = vunpack.c.h.b16 %v714
    %v1271 = vunpack.c.l.b16 %v715
    %v1272 = vunpack.c.h.b16 %v715
    %v1273 = vunpack.c.l.b16 %v716
    %v1274 = vunpack.c.h.b16 %v716
    %v1275 = vunpack.c.l.b16 %v717
    %v1276 = vunpack.c.h.b16 %v717
    %v1277 = vunpack.c.l.b16 %v718
    %v1278 = vunpack.c.h.b16 %v718
    %v1279 = vunpack.c.l.b16 %v719
    %v1280 = vunpack.c.h.b16 %v719
    %v1281 = vunpack.c.l.b16 %v720
    %v1282 = vunpack.c.h.b16 %v720
    %v1283 = vunpack.c.l.b16 %v721
    %v1284 = vunpack.c.h.b16 %v721
    %v1285 = vunpack.c.l.b16 %v722
    %v1286 = vunpack.c.h.b16 %v722
    %v1287 = vunpack.c.l.b16 %v723
    %v1288 = vunpack.c.h.b16 %v723
    %v1289 = vunpack.c.l.b16 %v724
    %v1290 = vunpack.c.h.b16 %v724
    %v1291 = vunpack.c.l.b16 %v725
    %v1292 = vunpack.c.h.b16 %v725
    %v1293 = vunpack.c.l.b16 %v726
    %v1294 = vunpack.c.h.b16 %v726
    %v1295 = vunpack.c.l.b16 %v727
    %v1296 = vunpack.c.h.b16 %v727
    %v1297 = vunpack.c.l.b16 %v728
    %v1298 = vunpack.c.h.b16 %v728
    %v1299 = vunpack.c.l.b16 %v729
    %v1300 = vunpack.c.h.b16 %v729
    %v1301 = vunpack.c.l.b16 %v730
    %v1302 = vunpack.c.h.b16 %v730
    %v1303 = vunpack.c.l.b16 %v731
    %v1304 = vunpack.c.h.b16 %v731
    %v1305 = vunpack.c.l.b16 %v732
    %v1306 = vunpack.c.h.b16 %v732
    %v1307 = vunpack.c.l.b16 %v733
    %v1308 = vunpack.c.h.b16 %v733
    %v1309 = vunpack.c.l.b16 %v734
    %v1310 = vunpack.c.h.b16 %v734
    %v1311 = vunpack.c.l.b16 %v735
    %v1312 = vunpack.c.h.b16 %v735
    %v1313 = vunpack.c.l.b16 %v736
    %v1314 = vunpack.c.h.b16 %v736
    %v1315 = vunpack.c.l.b16 %v737
    %v1316 = vunpack.c.h.b16 %v737
    %v1317 = vunpack.c.l.b16 %v738
    %v1318 = vunpack.c.h.b16 %v738
    %v1319 = vunpack.c.l.b16 %v739
    %v1320 = vunpack.c.h.b16 %v739
    %v1321 = vunpack.c.l.b16 %v740
    %v1322 = vunpack.c.h.b16 %v740
    %v1323 = vunpack.c.l.b16 %v741
    %v1324 = vunpack.c.h.b16 %v741
    %v1325 = vunpack.c.l.b16 %v742
    %v1326 = vunpack.c.h.b16 %v742
    %v1327 = vunpack.c.l.b16 %v743
    %v1328 = vunpack.c.h.b16 %v743
    %v1329 = vunpack.c.l.b16 %v744
    %v1330 = vunpack.c.h.b16 %v744
    %v1331 = vunpack.c.l.b16 %v745
    %v1332 = vunpack.c.h.b16 %v745
    %v1333 = vunpack.c.l.b16 %v746
    %v1334 = vunpack.c.h.b16 %v746
    %v1335 = vunpack.c.l.b16 %v747
    %v1336 = vunpack.c.h.b16 %v747
    %v1337 = vunpack.c.l.b16 %v748
    %v1338 = vunpack.c.h.b16 %v748
    %v1339 = vunpack.c.l.b16 %v749
    %v1340 = vunpack.c.h.b16 %v749
    %v1341 = vunpack.c.l.b16 %v750
    %v1342 = vunpack.c.h.b16 %v750
    %v1343 = vunpack.c.l.b16 %v751
    %v1344 = vunpack.c.h.b16 %v751
    %v1345 = vunpack.c.l.b16 %v752
    %v1346 = vunpack.c.h.b16 %v752
    %v1347 = vunpack.c.l.b16 %v753
    %v1348 = vunpack.c.h.b16 %v753
    %v1349 = vunpack.c.l.b16 %v754
    %v1350 = vunpack.c.h.b16 %v754
    %v1351 = vunpack.c.l.b16 %v755
    %v1352 = vunpack.c.h.b16 %v755
    %v1353 = vunpack.c.l.b16 %v756
    %v1354 = vunpack.c.h.b16 %v756
    %v1355 = vunpack.c.l.b16 %v757
    %v1356 = vunpack.c.h.b16 %v757
    %v1357 = vunpack.c.l.b16 %v758
    %v1358 = vunpack.c.h.b16 %v758
    %v1359 = vunpack.c.l.b16 %v759
    %v1360 = vunpack.c.h.b16 %v759
    %v1361 = vunpack.c.l.b16 %v760
    %v1362 = vunpack.c.h.b16 %v760
    %v1363 = vunpack.c.l.b16 %v761
    %v1364 = vunpack.c.h.b16 %v761
    %v1365 = vunpack.c.l.b16 %v762
    %v1366 = vunpack.c.h.b16 %v762
    %v1367 = vunpack.c.l.b16 %v763
    %v1368 = vunpack.c.h.b16 %v763
    %v1369 = vunpack.c.l.b16 %v764
    %v1370 = vunpack.c.h.b16 %v764
    %v1371 = vunpack.c.l.b16 %v765
    %v1372 = vunpack.c.h.b16 %v765
    %v1373 = vunpack.c.l.b16 %v766
    %v1374 = vunpack.c.h.b16 %v766
    %v1375 = vunpack.c.l.b16 %v767
    %v1376 = vunpack.c.h.b16 %v767
    %v1377 = vunpack.c.l.b16 %v768
    %v1378 = vunpack.c.h.b16 %v768
    %v1379 = vunpack.c.l.b16 %v769
    %v1380 = vunpack.c.h.b16 %v769
    %v1381 = vunpack.c.l.b16 %v770
    %v1382 = vunpack.c.h.b16 %v770
    %v1383 = vunpack.c.l.b16 %v771
    %v1384 = vunpack.c.h.b16 %v771
    %v1385 = vunpack.c.l.b16 %v772
    %v1386 = vunpack.c.h.b16 %v772
    %v1387 = vunpack.c.l.b16 %v773
    %v1388 = vunpack.c.h.b16 %v773
    %v1389 = vunpack.c.l.b16 %v774
    %v1390 = vunpack.c.h.b16 %v774
    %v1391 = vunpack.c.l.b16 %v775
    %v1392 = vunpack.c.h.b16 %v775
    %v1393 = vunpack.c.l.b16 %v776
    %v1394 = vunpack.c.h.b16 %v776
    %v1395 = vunpack.c.l.b16 %v777
    %v1396 = vunpack.c.h.b16 %v777
    %v1397 = vunpack.c.l.b16 %v778
    %v1398 = vunpack.c.h.b16 %v778
    %v1399 = vunpack.c.l.b16 %v779
    %v1400 = vunpack.c.h.b16 %v779
    %v1401 = vunpack.c.l.b16 %v780
    %v1402 = vunpack.c.h.b16 %v780
    %v1403 = vunpack.c.l.b16 %v781
    %v1404 = vunpack.c.h.b16 %v781
    %v1405 = vunpack.c.l.b16 %v782
    %v1406 = vunpack.c.h.b16 %v782
    %v1407 = vunpack.c.l.b16 %v783
    %v1408 = vunpack.c.h.b16 %v783
    %v1409 = vunpack.c.l.b16 %v784
    %v1410 = vunpack.c.h.b16 %v784
    %v1411 = vunpack.c.l.b16 %v785
    %v1412 = vunpack.c.h.b16 %v785
    %v1413 = vunpack.c.l.b16 %v786
    %v1414 = vunpack.c.h.b16 %v786
    %v1415 = vunpack.c.l.b16 %v787
    %v1416 = vunpack.c.h.b16 %v787
    %v1417 = vunpack.c.l.b16 %v788
    %v1418 = vunpack.c.h.b16 %v788
    %v1419 = vunpack.c.l.b16 %v789
    %v1420 = vunpack.c.h.b16 %v789
    %v1421 = vunpack.c.l.b16 %v790
    %v1422 = vunpack.c.h.b16 %v790
    %v1423 = vunpack.c.l.b16 %v791
    %v1424 = vunpack.c.h.b16 %v791
    %v1425 = vunpack.c.l.b16 %v792
    %v1426 = vunpack.c.h.b16 %v792
    %v1427 = vunpack.c.l.b16 %v793
    %v1428 = vunpack.c.h.b16 %v793
    %v1429 = vunpack.c.l.b16 %v794
    %v1430 = vunpack.c.h.b16 %v794
    %v1431 = vunpack.c.l.b16 %v795
    %v1432 = vunpack.c.h.b16 %v795
    %v1433 = vunpack.c.l.b16 %v796
    %v1434 = vunpack.c.h.b16 %v796
    %v1435 = vunpack.c.l.b16 %v797
    %v1436 = vunpack.c.h.b16 %v797
    %v1437 = vunpack.c.l.b16 %v798
    %v1438 = vunpack.c.h.b16 %v798
    %v1439 = vunpack.c.l.b16 %v799
    %v1440 = vunpack.c.h.b16 %v799
    %v1441 = vunpack.c.l.b16 %v800
    %v1442 = vunpack.c.h.b16 %v800
    %v1443 = vunpack.c.l.b16 %v801
    %v1444 = vunpack.c.h.b16 %v801
    %v1445 = vunpack.c.l.b16 %v802
    %v1446 = vunpack.c.h.b16 %v802
    %v1447 = vunpack.c.l.b16 %v803
    %v1448 = vunpack.c.h.b16 %v803
    %v1449 = vunpack.c.l.b16 %v804
    %v1450 = vunpack.c.h.b16 %v804
    %v1451 = vunpack.c.l.b16 %v805
    %v1452 = vunpack.c.h.b16 %v805
    %v1453 = vunpack.c.l.b16 %v806
    %v1454 = vunpack.c.h.b16 %v806
    %v1455 = vunpack.c.l.b16 %v807
    %v1456 = vunpack.c.h.b16 %v807
    %v1457 = vunpack.c.l.b16 %v808
    %v1458 = vunpack.c.h.b16 %v808
    %v1459 = vunpack.c.l.b16 %v809
    %v1460 = vunpack.c.h.b16 %v809
    %v1461 = vunpack.c.l.b16 %v810
    %v1462 = vunpack.c.h.b16 %v810
    %v1463 = vunpack.c.l.b16 %v811
    %v1464 = vunpack.c.h.b16 %v811
    %v1465 = vunpack.c.l.b16 %v812
    %v1466 = vunpack.c.h.b16 %v812
    %v1467 = vunpack.c.l.b16 %v813
    %v1468 = vunpack.c.h.b16 %v813
    %v1469 = vunpack.c.l.b16 %v814
    %v1470 = vunpack.c.h.b16 %v814
    %v1471 = vunpack.c.l.b16 %v815
    %v1472 = vunpack.c.h.b16 %v815
    %v1473 = vunpack.c.l.b16 %v816
    %v1474 = vunpack.c.h.b16 %v816
    %v1475 = vunpack.c.l.b16 %v817
    %v1476 = vunpack.c.h.b16 %v817
    %v1477 = vunpack.c.l.b16 %v818
    %v1478 = vunpack.c.h.b16 %v818
    %v1479 = vunpack.c.l.b16 %v819
    %v1480 = vunpack.c.h.b16 %v819
    %v1481 = vunpack.c.l.b16 %v820
    %v1482 = vunpack.c.h.b16 %v820
    %v1483 = vunpack.c.l.b16 %v821
    %v1484 = vunpack.c.h.b16 %v821
    %v1485 = vunpack.c.l.b16 %v822
    %v1486 = vunpack.c.h.b16 %v822
    %v1487 = vunpack.c.l.b16 %v823
    %v1488 = vunpack.c.h.b16 %v823
    %v1489 = vunpack.c.l.b16 %v824
    %v1490 = vunpack.c.h.b16 %v824
    %v1491 = vunpack.c.l.b16 %v825
    %v1492 = vunpack.c.h.b16 %v825
    %v1493 = vunpack.c.l.b16 %v826
    %v1494 = vunpack.c.h.b16 %v826
    %v1495 = vunpack.c.l.b16 %v827
    %v1496 = vunpack.c.h.b16 %v827
    %v1497 = vunpack.c.l.b16 %v828
    %v1498 = vunpack.c.h.b16 %v828
    %v1499 = vunpack.c.l.b16 %v829
    %v1500 = vunpack.c.h.b16 %v829
    %v1501 = vunpack.c.l.b16 %v830
    %v1502 = vunpack.c.h.b16 %v830
    %v1503 = vunpack.c.l.b16 %v831
    %v1504 = vunpack.c.h.b16 %v831
    %v1505 = vunpack.c.l.b16 %v832
    %v1506 = vunpack.c.h.b16 %v832
    %v1507 = vunpack.c.l.b16 %v833
    %v1508 = vunpack.c.h.b16 %v833
    %v1509 = vunpack.c.l.b16 %v834
    %v1510 = vunpack.c.h.b16 %v834
    %v1511 = vunpack.c.l.b16 %v835
    %v1512 = vunpack.c.h.b16 %v835
    %v1513 = vunpack.c.l.b16 %v836
    %v1514 = vunpack.c.h.b16 %v836
    %v1515 = vunpack.c.l.b16 %v837
    %v1516 = vunpack.c.h.b16 %v837
    %v1517 = vunpack.c.l.b16 %v838
    %v1518 = vunpack.c.h.b16 %v838
    %v1519 = vunpack.c.l.b16 %v839
    %v1520 = vunpack.c.h.b16 %v839
    %v1521 = vunpack.c.l.b16 %v840
    %v1522 = vunpack.c.h.b16 %v840
    %v1523 = vunpack.c.l.b16 %v841
    %v1524 = vunpack.c.h.b16 %v841
    %v1525 = vunpack.c.l.b16 %v842
    %v1526 = vunpack.c.h.b16 %v842
    %v1527 = vunpack.c.l.b16 %v843
    %v1528 = vunpack.c.h.b16 %v843
    %v1529 = vunpack.c.l.b16 %v844
    %v1530 = vunpack.c.h.b16 %v844
    %v1531 = vunpack.c.l.b16 %v845
    %v1532 = vunpack.c.h.b16 %v845
    %v1533 = vunpack.c.l.b16 %v846
    %v1534 = vunpack.c.h.b16 %v846
    %v1535 = vunpack.c.l.b16 %v847
    %v1536 = vunpack.c.h.b16 %v847
    %v1537 = vunpack.c.l.b16 %v848
    %v1538 = vunpack.c.h.b16 %v848
    %v1539 = vunpack.c.l.b16 %v849
    %v1540 = vunpack.c.h.b16 %v849
    %v1541 = vunpack.c.l.b16 %v850
    %v1542 = vunpack.c.h.b16 %v850
    %v1543 = vunpack.c.l.b16 %v851
    %v1544 = vunpack.c.h.b16 %v851
    %v1545 = vunpack.c.l.b16 %v852
    %v1546 = vunpack.c.h.b16 %v852
    %v1547 = vunpack.c.l.b16 %v853
    %v1548 = vunpack.c.h.b16 %v853
    %v1549 = vunpack.c.l.b16 %v854
    %v1550 = vunpack.c.h.b16 %v854
    %v1551 = vunpack.c.l.b16 %v855
    %v1552 = vunpack.c.h.b16 %v855
    %v1553 = vunpack.c.l.b16 %v856
    %v1554 = vunpack.c.h.b16 %v856
    %v1555 = vunpack.c.l.b16 %v857
    %v1556 = vunpack.c.h.b16 %v857
    %v1557 = vunpack.c.l.b16 %v858
    %v1558 = vunpack.c.h.b16 %v858
    %v1559 = vunpack.c.l.b16 %v859
    %v1560 = vunpack.c.h.b16 %v859
    %v1561 = vunpack.c.l.b16 %v860
    %v1562 = vunpack.c.h.b16 %v860
    %v1563 = vunpack.c.l.b16 %v861
    %v1564 = vunpack.c.h.b16 %v861
    %v1565 = vunpack.c.l.b16 %v862
    %v1566 = vunpack.c.h.b16 %v862
    %v1567 = vunpack.c.l.b16 %v863
    %v1568 = vunpack.c.h.b16 %v863
    %v1569 = vunpack.c.l.b16 %v864
    %v1570 = vunpack.c.h.b16 %v864
    %v1571 = vunpack.c.l.b16 %v865
    %v1572 = vunpack.c.h.b16 %v865
    %v1573 = vunpack.c.l.b16 %v866
    %v1574 = vunpack.c.h.b16 %v866
    %v1575 = vunpack.c.l.b16 %v867
    %v1576 = vunpack.c.h.b16 %v867
    %v1577 = vunpack.c.l.b16 %v868
    %v1578 = vunpack.c.h.b16 %v868
    %v1579 = vunpack.c.l.b16 %v869
    %v1580 = vunpack.c.h.b16 %v869
    %v1581 = vunpack.c.l.b16 %v870
    %v1582 = vunpack.c.h.b16 %v870
    %v1583 = vunpack.c.l.b16 %v871
    %v1584 = vunpack.c.h.b16 %v871
    %v1585 = vunpack.c.l.b16 %v872
    %v1586 = vunpack.c.h.b16 %v872
    %v1587 = vunpack.c.l.b16 %v873
    %v1588 = vunpack.c.h.b16 %v873
    %v1589 = vunpack.c.l.b16 %v874
    %v1590 = vunpack.c.h.b16 %v874
    %v1591 = vunpack.c.l.b16 %v875
    %v1592 = vunpack.c.h.b16 %v875
    %v1593 = vunpack.c.l.b16 %v876
    %v1594 = vunpack.c.h.b16 %v876
    %v1595 = vunpack.c.l.b16 %v877
    %v1596 = vunpack.c.h.b16 %v877
    %v1597 = vunpack.c.l.b16 %v878
    %v1598 = vunpack.c.h.b16 %v878
    %v1599 = vunpack.c.l.b16 %v879
    %v1600 = vunpack.c.h.b16 %v879
    %v1601 = vunpack.c.l.b16 %v880
    %v1602 = vunpack.c.h.b16 %v880
    %v1603 = vunpack.c.l.b16 %v881
    %v1604 = vunpack.c.h.b16 %v881
    %v1605 = vunpack.c.l.b16 %v882
    %v1606 = vunpack.c.h.b16 %v882
    %v1607 = vunpack.c.l.b16 %v883
    %v1608 = vunpack.c.h.b16 %v883
    %v1609 = vunpack.c.l.b16 %v884
    %v1610 = vunpack.c.h.b16 %v884
    %v1611 = vunpack.c.l.b16 %v885
    %v1612 = vunpack.c.h.b16 %v885
    %v1613 = vunpack.c.l.b16 %v886
    %v1614 = vunpack.c.h.b16 %v886
    %v1615 = vunpack.c.l.b16 %v887
    %v1616 = vunpack.c.h.b16 %v887
    %v1617 = vunpack.c.l.b16 %v888
    %v1618 = vunpack.c.h.b16 %v888
    %v1619 = vunpack.c.l.b16 %v889
    %v1620 = vunpack.c.h.b16 %v889
    %v1621 = vunpack.c.l.b16 %v890
    %v1622 = vunpack.c.h.b16 %v890
    %v1623 = vunpack.c.l.b16 %v891
    %v1624 = vunpack.c.h.b16 %v891
    %v1625 = vunpack.c.l.b16 %v892
    %v1626 = vunpack.c.h.b16 %v892
    %v1627 = vunpack.c.l.b16 %v893
    %v1628 = vunpack.c.h.b16 %v893
    %v1629 = vunpack.c.l.b16 %v894
    %v1630 = vunpack.c.h.b16 %v894
    %v1631 = vunpack.c.l.b16 %v895
    %v1632 = vunpack.c.h.b16 %v895
    %v1633 = vunpack.c.l.b16 %v896
    %v1634 = vunpack.c.h.b16 %v896
    %v1635 = vunpack.c.l.b16 %v897
    %v1636 = vunpack.c.h.b16 %v897
    %v1637 = vunpack.c.l.b16 %v898
    %v1638 = vunpack.c.h.b16 %v898
    %v1639 = vunpack.c.l.b16 %v899
    %v1640 = vunpack.c.h.b16 %v899
    %v1641 = vunpack.c.l.b16 %v900
    %v1642 = vunpack.c.h.b16 %v900
    %v1643 = vunpack.c.l.b16 %v901
    %v1644 = vunpack.c.h.b16 %v901
    %v1645 = vunpack.c.l.b16 %v902
    %v1646 = vunpack.c.h.b16 %v902
    %v1647 = vunpack.c.l.b16 %v903
    %v1648 = vunpack.c.h.b16 %v903
    %v1649 = vunpack.c.l.b16 %v904
    %v1650 = vunpack.c.h.b16 %v904
    %v1651 = vunpack.c.l.b16 %v905
    %v1652 = vunpack.c.h.b16 %v905
    %v1653 = vunpack.c.l.b16 %v906
    %v1654 = vunpack.c.h.b16 %v906
    %v1655 = vunpack.c.l.b16 %v907
    %v1656 = vunpack.c.h.b16 %v907
    %v1657 = vunpack.c.l.b16 %v908
    %v1658 = vunpack.c.h.b16 %v908
    %v1659 = vunpack.c.l.b16 %v909
    %v1660 = vunpack.c.h.b16 %v909
    %v1661 = vunpack.c.l.b16 %v910
    %v1662 = vunpack.c.h.b16 %v910
    %v1663 = vunpack.c.l.b16 %v911
    %v1664 = vunpack.c.h.b16 %v911
    %v1665 = vunpack.c.l.b16 %v912
    %v1666 = vunpack.c.h.b16 %v912
    %v1667 = vunpack.c.l.b16 %v913
    %v1668 = vunpack.c.h.b16 %v913
    %v1669 = vunpack.c.l.b16 %v914
    %v1670 = vunpack.c.h.b16 %v914
    %v1671 = vunpack.c.l.b16 %v915
    %v1672 = vunpack.c.h.b16 %v915
    %v1673 = vunpack.c.l.b16 %v916
    %v1674 = vunpack.c.h.b16 %v916
    %v1675 = vunpack.c.l.b16 %v917
    %v1676 = vunpack.c.h.b16 %v917
    %v1677 = vunpack.c.l.b16 %v918
    %v1678 = vunpack.c.h.b16 %v918
    %v1679 = vunpack.c.l.b16 %v919
    %v1680 = vunpack.c.h.b16 %v919
    %v1681 = vunpack.c.l.b16 %v920
    %v1682 = vunpack.c.h.b16 %v920
    %v1683 = vunpack.c.l.b16 %v921
    %v1684 = vunpack.c.h.b16 %v921
    %v1685 = vunpack.c.l.b16 %v922
    %v1686 = vunpack.c.h.b16 %v922
    %v1687 = vunpack.c.l.b16 %v923
    %v1688 = vunpack.c.h.b16 %v923
    %v1689 = vunpack.c.l.b16 %v924
    %v1690 = vunpack.c.h.b16 %v924
    %v1691 = vunpack.c.l.b16 %v925
    %v1692 = vunpack.c.h.b16 %v925
    %v1693 = vunpack.c.l.b16 %v926
    %v1694 = vunpack.c.h.b16 %v926
    %v1695 = vunpack.c.l.b16 %v927
    %v1696 = vunpack.c.h.b16 %v927
    %v1697 = vunpack.c.l.b16 %v928
    %v1698 = vunpack.c.h.b16 %v928
    %v1699 = vunpack.c.l.b16 %v929
    %v1700 = vunpack.c.h.b16 %v929
    %v1701 = vunpack.c.l.b16 %v930
    %v1702 = vunpack.c.h.b16 %v930
    %v1703 = vunpack.c.l.b16 %v931
    %v1704 = vunpack.c.h.b16 %v931
    %v1705 = vunpack.c.l.b16 %v932
    %v1706 = vunpack.c.h.b16 %v932
    %v1707 = vunpack.c.l.b16 %v933
    %v1708 = vunpack.c.h.b16 %v933
    %v1709 = vunpack.c.l.b16 %v934
    %v1710 = vunpack.c.h.b16 %v934
    %v1711 = vunpack.c.l.b16 %v935
    %v1712 = vunpack.c.h.b16 %v935
    %v1713 = vunpack.c.l.b16 %v936
    %v1714 = vunpack.c.h.b16 %v936
    %v1715 = vunpack.c.l.b16 %v937
    %v1716 = vunpack.c.h.b16 %v937
    %v1717 = vunpack.c.l.b16 %v938
    %v1718 = vunpack.c.h.b16 %v938
    %v1719 = vunpack.c.l.b16 %v939
    %v1720 = vunpack.c.h.b16 %v939
    %v1721 = vunpack.c.l.b16 %v940
    %v1722 = vunpack.c.h.b16 %v940
    %v1723 = vunpack.c.l.b16 %v941
    %v1724 = vunpack.c.h.b16 %v941
    %v1725 = vunpack.c.l.b16 %v942
    %v1726 = vunpack.c.h.b16 %v942
    %v1727 = vunpack.c.l.b16 %v943
    %v1728 = vunpack.c.h.b16 %v943
    %v1729 = vunpack.c.l.b16 %v944
    %v1730 = vunpack.c.h.b16 %v944
    %v1731 = vpack.c.b16 %v1227, %v1219
    %v1732 = vpack.c.b16 %v1228, %v1220
    %v1733 = vpack.c.b16 %v1229, %v1221
    %v1734 = vpack.c.b16 %v1230, %v1222
    %v1735 = vpack.c.b16 %v1231, %v1223
    %v1736 = vpack.c.b16 %v1232, %v1224
    %v1737 = vpack.c.b16 %v1233, %v1225
    %v1738 = vpack.c.b16 %v1234, %v1226
    %v1739 = vpack.c.b16 %v1243, %v1235
    %v1740 = vpack.c.b16 %v1244, %v1236
    %v1741 = vpack.c.b16 %v1245, %v1237
    %v1742 = vpack.c.b16 %v1246, %v1238
    %v1743 = vpack.c.b16 %v1247, %v1239
    %v1744 = vpack.c.b16 %v1248, %v1240
    %v1745 = vpack.c.b16 %v1249, %v1241
    %v1746 = vpack.c.b16 %v1250, %v1242
    %v1747 = vpack.c.b16 %v1259, %v1251
    %v1748 = vpack.c.b16 %v1260, %v1252
    %v1749 = vpack.c.b16 %v1261, %v1253
    %v1750 = vpack.c.b16 %v1262, %v1254
    %v1751 = vpack.c.b16 %v1263, %v1255
    %v1752 = vpack.c.b16 %v1264, %v1256
    %v1753 = vpack.c.b16 %v1265, %v1257
    %v1754 = vpack.c.b16 %v1266, %v1258
    %v1755 = vpack.c.b16 %v1275, %v1267
    %v1756 = vpack.c.b16 %v1276, %v1268
    %v1757 = vpack.c.b16 %v1277, %v1269
    %v1758 = vpack.c.b16 %v1278, %v1270
    %v1759 = vpack.c.b16 %v1279, %v1271
    %v1760 = vpack.c.b16 %v1280, %v1272
    %v1761 = vpack.c.b16 %v1281, %v1273
    %v1762 = vpack.c.b16 %v1282, %v1274
    %v1763 = vpack.c.b16 %v1291, %v1283
    %v1764 = vpack.c.b16 %v1292, %v1284
    %v1765 = vpack.c.b16 %v1293, %v1285
    %v1766 = vpack.c.b16 %v1294, %v1286
    %v1767 = vpack.c.b16 %v1295, %v1287
    %v1768 = vpack.c.b16 %v1296, %v1288
    %v1769 = vpack.c.b16 %v1297, %v1289
    %v1770 = vpack.c.b16 %v1298, %v1290
    %v1771 = vpack.c.b16 %v1307, %v1299
    %v1772 = vpack.c.b16 %v1308, %v1300
    %v1773 = vpack.c.b16 %v1309, %v1301
    %v1774 = vpack.c.b16 %v1310, %v1302
    %v1775 = vpack.c.b16 %v1311, %v1303
    %v1776 = vpack.c.b16 %v1312, %v1304
    %v1777 = vpack.c.b16 %v1313, %v1305
    %v1778 = vpack.c.b16 %v1314, %v1306
    %v1779 = vpack.c.b16 %v1323, %v1315
    %v1780 = vpack.c.b16 %v1324, %v1316
    %v1781 = vpack.c.b16 %v1325, %v1317
    %v1782 = vpack.c.b16 %v1326, %v1318
    %v1783 = vpack.c.b16 %v1327, %v1319
    %v1784 = vpack.c.b16 %v1328, %v1320
    %v1785 = vpack.c.b16 %v1329, %v1321
    %v1786 = vpack.c.b16 %v1330, %v1322
    %v1787 = vpack.c.b16 %v1339, %v1331
    %v1788 = vpack.c.b16 %v1340, %v1332
    %v1789 = vpack.c.b16 %v1341, %v1333
    %v1790 = vpack.c.b16 %v1342, %v1334
    %v1791 = vpack.c.b16 %v1343, %v1335
    %v1792 = vpack.c.b16 %v1344, %v1336
    %v1793 = vpack.c.b16 %v1345, %v1337
    %v1794 = vpack.c.b16 %v1346, %v1338
    %v1795 = vpack.c.b16 %v1355, %v1347
    %v1796 = vpack.c.b16 %v1356, %v1348
    %v1797 = vpack.c.b16 %v1357, %v1349
    %v1798 = vpack.c.b16 %v1358, %v1350
    %v1799 = vpack.c.b16 %v1359, %v1351
    %v1800 = vpack.c.b16 %v1360, %v1352
    %v1801 = vpack.c.b16 %v1361, %v1353
    %v1802 = vpack.c.b16 %v1362, %v1354
    %v1803 = vpack.c.b16 %v1371, %v1363
    %v1804 = vpack.c.b16 %v1372, %v1364
    %v1805 = vpack.c.b16 %v1373, %v1365
    %v1806 = vpack.c.b16 %v1374, %v1366
    %v1807 = vpack.c.b16 %v1375, %v1367
    %v1808 = vpack.c.b16 %v1376, %v1368
    %v1809 = vpack.c.b16 %v1377, %v1369
    %v1810 = vpack.c.b16 %v1378, %v1370
    %v1811 = vpack.c.b16 %v1387, %v1379
    %v1812 = vpack.c.b16 %v1388, %v1380
    %v1813 = vpack.c.b16 %v1389, %v1381
    %v1814 = vpack.c.b16 %v1390, %v1382
    %v1815 = vpack.c.b16 %v1391, %v1383
    %v1816 = vpack.c.b16 %v1392, %v1384
    %v1817 = vpack.c.b16 %v1393, %v1385
    %v1818 = vpack.c.b16 %v1394, %v1386
    %v1819 = vpack.c.b16 %v1403, %v1395
    %v1820 = vpack.c.b16 %v1404, %v1396
    %v1821 = vpack.c.b16 %v1405, %v1397
    %v1822 = vpack.c.b16 %v1406, %v1398
    %v1823 = vpack.c.b16 %v1407, %v1399
    %v1824 = vpack.c.b16 %v1408, %v1400
    %v1825 = vpack.c.b16 %v1409, %v1401
    %v1826 = vpack.c.b16 %v1410, %v1402
    %v1827 = vpack.c.b16 %v1419, %v1411
    %v1828 = vpack.c.b16 %v1420, %v1412
    %v1829 = vpack.c.b16 %v1421, %v1413
    %v1830 = vpack.c.b16 %v1422, %v1414
    %v1831 = vpack.c.b16 %v1423, %v1415
    %v1832 = vpack.c.b16 %v1424, %v1416
    %v1833 = vpack.c.b16 %v1425, %v1417
    %v1834 = vpack.c.b16 %v1426, %v1418
    %v1835 = vpack.c.b16 %v1435, %v1427
    %v1836 = vpack.c.b16 %v1436, %v1428
    %v1837 = vpack.c.b16 %v1437, %v1429
    %v1838 = vpack.c.b16 %v1438, %v1430
    %v1839 = vpack.c.b16 %v1439, %v1431
    %v1840 = vpack.c.b16 %v1440, %v1432
    %v1841 = vpack.c.b16 %v1441, %v1433
    %v1842 = vpack.c.b16 %v1442, %v1434
    %v1843 = vpack.c.b16 %v1451, %v1443
    %v1844 = vpack.c.b16 %v1452, %v1444
    %v1845 = vpack.c.b16 %v1453, %v1445
    %v1846 = vpack.c.b16 %v1454, %v1446
    %v1847 = vpack.c.b16 %v1455, %v1447
    %v1848 = vpack.c.b16 %v1456, %v1448
    %v1849 = vpack.c.b16 %v1457, %v1449
    %v1850 = vpack.c.b16 %v1458, %v1450
    %v1851 = vpack.c.b16 %v1467, %v1459
    %v1852 = vpack.c.b16 %v1468, %v1460
    %v1853 = vpack.c.b16 %v1469, %v1461
    %v1854 = vpack.c.b16 %v1470, %v1462
    %v1855 = vpack.c.b16 %v1471, %v1463
    %v1856 = vpack.c.b16 %v1472, %v1464
    %v1857 = vpack.c.b16 %v1473, %v1465
    %v1858 = vpack.c.b16 %v1474, %v1466
    %v1859 = vpack.c.b16 %v1483, %v1475
    %v1860 = vpack.c.b16 %v1484, %v1476
    %v1861 = vpack.c.b16 %v1485, %v1477
    %v1862 = vpack.c.b16 %v1486, %v1478
    %v1863 = vpack.c.b16 %v1487, %v1479
    %v1864 = vpack.c.b16 %v1488, %v1480
    %v1865 = vpack.c.b16 %v1489, %v1481
    %v1866 = vpack.c.b16 %v1490, %v1482
    %v1867 = vpack.c.b16 %v1499, %v1491
    %v1868 = vpack.c.b16 %v1500, %v1492
    %v1869 = vpack.c.b16 %v1501, %v1493
    %v1870 = vpack.c.b16 %v1502, %v1494
    %v1871 = vpack.c.b16 %v1503, %v1495
    %v1872 = vpack.c.b16 %v1504, %v1496
    %v1873 = vpack.c.b16 %v1505, %v1497
    %v1874 = vpack.c.b16 %v1506, %v1498
    %v1875 = vpack.c.b16 %v1515, %v1507
    %v1876 = vpack.c.b16 %v1516, %v1508
    %v1877 = vpack.c.b16 %v1517, %v1509
    %v1878 = vpack.c.b16 %v1518, %v1510
    %v1879 = vpack.c.b16 %v1519, %v1511
    %v1880 = vpack.c.b16 %v1520, %v1512
    %v1881 = vpack.c.b16 %v1521, %v1513
    %v1882 = vpack.c.b16 %v1522, %v1514
    %v1883 = vpack.c.b16 %v1531, %v1523
    %v1884 = vpack.c.b16 %v1532, %v1524
    %v1885 = vpack.c.b16 %v1533, %v1525
    %v1886 = vpack.c.b16 %v1534, %v1526
    %v1887 = vpack.c.b16 %v1535, %v1527
    %v1888 = vpack.c.b16 %v1536, %v1528
    %v1889 = vpack.c.b16 %v1537, %v1529
    %v1890 = vpack.c.b16 %v1538, %v1530
    %v1891 = vpack.c.b16 %v1547, %v1539
    %v1892 = vpack.c.b16 %v1548, %v1540
    %v1893 = vpack.c.b16 %v1549, %v1541
    %v1894 = vpack.c.b16 %v1550, %v1542
    %v1895 = vpack.c.b16 %v1551, %v1543
    %v1896 = vpack.c.b16 %v1552, %v1544
    %v1897 = vpack.c.b16 %v1553, %v1545
    %v1898 = vpack.c.b16 %v1554, %v1546
    %v1899 = vpack.c.b16 %v1563, %v1555
    %v1900 = vpack.c.b16 %v1564, %v1556
    %v1901 = vpack.c.b16 %v1565, %v1557
    %v1902 = vpack.c.b16 %v1566, %v1558
    %v1903 = vpack.c.b16 %v1567, %v1559
    %v1904 = vpack.c.b16 %v1568, %v1560
    %v1905 = vpack.c.b16 %v1569, %v1561
    %v1906 = vpack.c.b16 %v1570, %v1562
    %v1907 = vpack.c.b16 %v1579, %v1571
    %v1908 = vpack.c.b16 %v1580, %v1572
    %v1909 = vpack.c.b16 %v1581, %v1573
    %v1910 = vpack.c.b16 %v1582, %v1574
    %v1911 = vpack.c.b16 %v1583, %v1575
    %v1912 = vpack.c.b16 %v1584, %v1576
    %v1913 = vpack.c.b16 %v1585, %v1577
    %v1914 = vpack.c.b16 %v1586, %v1578
    %v1915 = vpack.c.b16 %v1595, %v1587
    %v1916 = vpack.c.b16 %v1596, %v1588
    %v1917 = vpack.c.b16 %v1597, %v1589
    %v1918 = vpack.c.b16 %v1598, %v1590
    %v1919 = vpack.c.b16 %v1599, %v1591
    %v1920 = vpack.c.b16 %v1600, %v1592
    %v1921 = vpack.c.b16 %v1601, %v1593
    %v1922 = vpack.c.b16 %v1602, %v1594
    %v1923 = vpack.c.b16 %v1611, %v1603
    %v1924 = vpack.c.b16 %v1612, %v1604
    %v1925 = vpack.c.b16 %v1613, %v1605
    %v1926 = vpack.c.b16 %v1614, %v1606
    %v1927 = vpack.c.b16 %v1615, %v1607
    %v1928 = vpack.c.b16 %v1616, %v1608
    %v1929 = vpack.c.b16 %v1617, %v1609
    %v1930 = vpack.c.b16 %v1618, %v1610
    %v1931 = vpack.c.b16 %v1627, %v1619
    %v1932 = vpack.c.b16 %v1628, %v1620
    %v1933 = vpack.c.b16 %v1629, %v1621
    %v1934 = vpack.c.b16 %v1630, %v1622
    %v1935 = vpack.c.b16 %v1631, %v1623
    %v1936 = vpack.c.b16 %v1632, %v1624
    %v1937 = vpack.c.b16 %v1633, %v1625
    %v1938 = vpack.c.b16 %v1634, %v1626
    %v1939 = vpack.c.b16 %v1643, %v1635
    %v1940 = vpack.c.b16 %v1644, %v1636
    %v1941 = vpack.c.b16 %v1645, %v1637
    %v1942 = vpack.c.b16 %v1646, %v1638
    %v1943 = vpack.c.b16 %v1647, %v1639
    %v1944 = vpack.c.b16 %v1648, %v1640
    %v1945 = vpack.c.b16 %v1649, %v1641
    %v1946 = vpack.c.b16 %v1650, %v1642
    %v1947 = vpack.c.b16 %v1659, %v1651
    %v1948 = vpack.c.b16 %v1660, %v1652
    %v1949 = vpack.c.b16 %v1661, %v1653
    %v1950 = vpack.c.b16 %v1662, %v1654
    %v1951 = vpack.c.b16 %v1663, %v1655
    %v1952 = vpack.c.b16 %v1664, %v1656
    %v1953 = vpack.c.b16 %v1665, %v1657
    %v1954 = vpack.c.b16 %v1666, %v1658
    %v1955 = vpack.c.b16 %v1675, %v1667
    %v1956 = vpack.c.b16 %v1676, %v1668
    %v1957 = vpack.c.b16 %v1677, %v1669
    %v1958 = vpack.c.b16 %v1678, %v1670
    %v1959 = vpack.c.b16 %v1679, %v1671
    %v1960 = vpack.c.b16 %v1680, %v1672
    %v1961 = vpack.c.b16 %v1681, %v1673
    %v1962 = vpack.c.b16 %v1682, %v1674
    %v1963 = vpack.c.b16 %v1691, %v1683
    %v1964 = vpack.c.b16 %v1692, %v1684
    %v1965 = vpack.c.b16 %v1693, %v1685
    %v1966 = vpack.c.b16 %v1694, %v1686
    %v1967 = vpack.c.b16 %v1695, %v1687
    %v1968 = vpack.c.b16 %v1696, %v1688
    %v1969 = vpack.c.b16 %v1697, %v1689
    %v1970 = vpack.c.b16 %v1698, %v1690
    %v1971 = vpack.c.b16 %v1707, %v1699
    %v1972 = vpack.c.b16 %v1708, %v1700
    %v1973 = vpack.c.b16 %v1709, %v1701
    %v1974 = vpack.c.b16 %v1710, %v1702
    %v1975 = vpack.c.b16 %v1711, %v1703
    %v1976 = vpack.c.b16 %v1712, %v1704
    %v1977 = vpack.c.b16 %v1713, %v1705
    %v1978 = vpack.c.b16 %v1714, %v1706
    %v1979 = vpack.c.b16 %v1723, %v1715
    %v1980 = vpack.c.b16 %v1724, %v1716
    %v1981 = vpack.c.b16 %v1725, %v1717
    %v1982 = vpack.c.b16 %v1726, %v1718
    %v1983 = vpack.c.b16 %v1727, %v1719
    %v1984 = vpack.c.b16 %v1728, %v1720
    %v1985 = vpack.c.b16 %v1729, %v1721
    %v1986 = vpack.c.b16 %v1730, %v1722
    %2243 = vmatpush.bf16.msra.mxu0 %v1787
    %2244 = vmatpush.bf16.msra.mxu0 %v1779
    %2245 = vmatpush.bf16.msra.mxu0 %v1771
    %2246 = vmatpush.bf16.msra.mxu0 %v1763
    %2247 = vmatpush.bf16.msra.mxu0 %v1755
    %2248 = vmatpush.bf16.msra.mxu0 %v1747
    %2249 = vmatpush.bf16.msra.mxu0 %v1739
    %2250 = vmatpush.bf16.msra.mxu0 %v1731
    %2251 = vmatmul.bf16.gmra.mxu0 %v685
    %v2252 = vpop.f32.mrf.mxu0
    %v2253 = vadd.f32 %v947, %v2252
    %v2254 = vpop.f32.mrf.mxu0
    %2255 = vdwg.mxu0
    %2256 = vmatpush.bf16.msra.mxu0 %v1851
    %2257 = vmatpush.bf16.msra.mxu0 %v1843
    %2258 = vmatpush.bf16.msra.mxu0 %v1835
    %2259 = vmatpush.bf16.msra.mxu0 %v1827
    %2260 = vmatpush.bf16.msra.mxu0 %v1819
    %2261 = vmatpush.bf16.msra.mxu0 %v1811
    %2262 = vmatpush.bf16.msra.mxu0 %v1803
    %2263 = vmatpush.bf16.msra.mxu0 %v1795
    %2264 = vmatmul.bf16.gmra.mxu0 %v686
    %v2265 = vpop.f32.mrf.mxu0
    %v2266 = vadd.f32 %v2253, %v2265
    %v2267 = vpop.f32.mrf.mxu0
    %2268 = vdwg.mxu0
    %2269 = vmatpush.bf16.msra.mxu0 %v1915
    %2270 = vmatpush.bf16.msra.mxu0 %v1907
    %2271 = vmatpush.bf16.msra.mxu0 %v1899
    %2272 = vmatpush.bf16.msra.mxu0 %v1891
    %2273 = vmatpush.bf16.msra.mxu0 %v1883
    %2274 = vmatpush.bf16.msra.mxu0 %v1875
    %2275 = vmatpush.bf16.msra.mxu0 %v1867
    %2276 = vmatpush.bf16.msra.mxu0 %v1859
    %2277 = vmatmul.bf16.gmra.mxu0 %v687
    %v2278 = vpop.f32.mrf.mxu0
    %v2279 = vadd.f32 %v2266, %v2278
    %v2280 = vpop.f32.mrf.mxu0
    %2281 = vdwg.mxu0
    %2282 = vmatpush.bf16.msra.mxu0 %v1979
    %2283 = vmatpush.bf16.msra.mxu0 %v1971
    %2284 = vmatpush.bf16.msra.mxu0 %v1963
    %2285 = vmatpush.bf16.msra.mxu0 %v1955
    %2286 = vmatpush.bf16.msra.mxu0 %v1947
    %2287 = vmatpush.bf16.msra.mxu0 %v1939
    %2288 = vmatpush.bf16.msra.mxu0 %v1931
    %2289 = vmatpush.bf16.msra.mxu0 %v1923
    %2290 = vmatmul.bf16.gmra.mxu0 %v688
    %v2291 = vpop.f32.mrf.mxu0
    %v2292 = vadd.f32 %v2279, %v2291
    %v2293 = vpop.f32.mrf.mxu0
    %2294 = vdwg.mxu0
    %2295 = vmatpush.bf16.msra.mxu0 %v1788
    %2296 = vmatpush.bf16.msra.mxu0 %v1780
    %2297 = vmatpush.bf16.msra.mxu0 %v1772
    %2298 = vmatpush.bf16.msra.mxu0 %v1764
    %2299 = vmatpush.bf16.msra.mxu0 %v1756
    %2300 = vmatpush.bf16.msra.mxu0 %v1748
    %2301 = vmatpush.bf16.msra.mxu0 %v1740
    %2302 = vmatpush.bf16.msra.mxu0 %v1732
    %2303 = vmatmul.bf16.gmra.mxu0 %v685
    %v2304 = vpop.f32.mrf.mxu0
    %v2305 = vadd.f32 %v948, %v2304
    %v2306 = vpop.f32.mrf.mxu0
    %2307 = vdwg.mxu0
    %2308 = vmatpush.bf16.msra.mxu0 %v1852
    %2309 = vmatpush.bf16.msra.mxu0 %v1844
    %2310 = vmatpush.bf16.msra.mxu0 %v1836
    %2311 = vmatpush.bf16.msra.mxu0 %v1828
    %2312 = vmatpush.bf16.msra.mxu0 %v1820
    %2313 = vmatpush.bf16.msra.mxu0 %v1812
    %2314 = vmatpush.bf16.msra.mxu0 %v1804
    %2315 = vmatpush.bf16.msra.mxu0 %v1796
    %2316 = vmatmul.bf16.gmra.mxu0 %v686
    %v2317 = vpop.f32.mrf.mxu0
    %v2318 = vadd.f32 %v2305, %v2317
    %v2319 = vpop.f32.mrf.mxu0
    %2320 = vdwg.mxu0
    %2321 = vmatpush.bf16.msra.mxu0 %v1916
    %2322 = vmatpush.bf16.msra.mxu0 %v1908
    %2323 = vmatpush.bf16.msra.mxu0 %v1900
    %2324 = vmatpush.bf16.msra.mxu0 %v1892
    %2325 = vmatpush.bf16.msra.mxu0 %v1884
    %2326 = vmatpush.bf16.msra.mxu0 %v1876
    %2327 = vmatpush.bf16.msra.mxu0 %v1868
    %2328 = vmatpush.bf16.msra.mxu0 %v1860
    %2329 = vmatmul.bf16.gmra.mxu0 %v687
    %v2330 = vpop.f32.mrf.mxu0
    %v2331 = vadd.f32 %v2318, %v2330
    %v2332 = vpop.f32.mrf.mxu0
    %2333 = vdwg.mxu0
    %2334 = vmatpush.bf16.msra.mxu0 %v1980
    %2335 = vmatpush.bf16.msra.mxu0 %v1972
    %2336 = vmatpush.bf16.msra.mxu0 %v1964
    %2337 = vmatpush.bf16.msra.mxu0 %v1956
    %2338 = vmatpush.bf16.msra.mxu0 %v1948
    %2339 = vmatpush.bf16.msra.mxu0 %v1940
    %2340 = vmatpush.bf16.msra.mxu0 %v1932
    %2341 = vmatpush.bf16.msra.mxu0 %v1924
    %2342 = vmatmul.bf16.gmra.mxu0 %v688
    %v2343 = vpop.f32.mrf.mxu0
    %v2344 = vadd.f32 %v2331, %v2343
    %v2345 = vpop.f32.mrf.mxu0
    %2346 = vdwg.mxu0
    %2347 = vmatpush.bf16.msra.mxu0 %v1789
    %2348 = vmatpush.bf16.msra.mxu0 %v1781
    %2349 = vmatpush.bf16.msra.mxu0 %v1773
    %2350 = vmatpush.bf16.msra.mxu0 %v1765
    %2351 = vmatpush.bf16.msra.mxu0 %v1757
    %2352 = vmatpush.bf16.msra.mxu0 %v1749
    %2353 = vmatpush.bf16.msra.mxu0 %v1741
    %2354 = vmatpush.bf16.msra.mxu0 %v1733
    %2355 = vmatmul.bf16.gmra.mxu0 %v685
    %v2356 = vpop.f32.mrf.mxu0
    %v2357 = vadd.f32 %v949, %v2356
    %v2358 = vpop.f32.mrf.mxu0
    %2359 = vdwg.mxu0
    %2360 = vmatpush.bf16.msra.mxu0 %v1853
    %2361 = vmatpush.bf16.msra.mxu0 %v1845
    %2362 = vmatpush.bf16.msra.mxu0 %v1837
    %2363 = vmatpush.bf16.msra.mxu0 %v1829
    %2364 = vmatpush.bf16.msra.mxu0 %v1821
    %2365 = vmatpush.bf16.msra.mxu0 %v1813
    %2366 = vmatpush.bf16.msra.mxu0 %v1805
    %2367 = vmatpush.bf16.msra.mxu0 %v1797
    %2368 = vmatmul.bf16.gmra.mxu0 %v686
    %v2369 = vpop.f32.mrf.mxu0
    %v2370 = vadd.f32 %v2357, %v2369
    %v2371 = vpop.f32.mrf.mxu0
    %2372 = vdwg.mxu0
    %2373 = vmatpush.bf16.msra.mxu0 %v1917
    %2374 = vmatpush.bf16.msra.mxu0 %v1909
    %2375 = vmatpush.bf16.msra.mxu0 %v1901
    %2376 = vmatpush.bf16.msra.mxu0 %v1893
    %2377 = vmatpush.bf16.msra.mxu0 %v1885
    %2378 = vmatpush.bf16.msra.mxu0 %v1877
    %2379 = vmatpush.bf16.msra.mxu0 %v1869
    %2380 = vmatpush.bf16.msra.mxu0 %v1861
    %2381 = vmatmul.bf16.gmra.mxu0 %v687
    %v2382 = vpop.f32.mrf.mxu0
    %v2383 = vadd.f32 %v2370, %v2382
    %v2384 = vpop.f32.mrf.mxu0
    %2385 = vdwg.mxu0
    %2386 = vmatpush.bf16.msra.mxu0 %v1981
    %2387 = vmatpush.bf16.msra.mxu0 %v1973
    %2388 = vmatpush.bf16.msra.mxu0 %v1965
    %2389 = vmatpush.bf16.msra.mxu0 %v1957
    %2390 = vmatpush.bf16.msra.mxu0 %v1949
    %2391 = vmatpush.bf16.msra.mxu0 %v1941
    %2392 = vmatpush.bf16.msra.mxu0 %v1933
    %2393 = vmatpush.bf16.msra.mxu0 %v1925
    %2394 = vmatmul.bf16.gmra.mxu0 %v688
    %v2395 = vpop.f32.mrf.mxu0
    %v2396 = vadd.f32 %v2383, %v2395
    %v2397 = vpop.f32.mrf.mxu0
    %2398 = vdwg.mxu0
    %2399 = vmatpush.bf16.msra.mxu0 %v1790
    %2400 = vmatpush.bf16.msra.mxu0 %v1782
    %2401 = vmatpush.bf16.msra.mxu0 %v1774
    %2402 = vmatpush.bf16.msra.mxu0 %v1766
    %2403 = vmatpush.bf16.msra.mxu0 %v1758
    %2404 = vmatpush.bf16.msra.mxu0 %v1750
    %2405 = vmatpush.bf16.msra.mxu0 %v1742
    %2406 = vmatpush.bf16.msra.mxu0 %v1734
    %2407 = vmatmul.bf16.gmra.mxu0 %v685
    %v2408 = vpop.f32.mrf.mxu0
    %v2409 = vadd.f32 %v950, %v2408
    %v2410 = vpop.f32.mrf.mxu0
    %2411 = vdwg.mxu0
    %2412 = vmatpush.bf16.msra.mxu0 %v1854
    %2413 = vmatpush.bf16.msra.mxu0 %v1846
    %2414 = vmatpush.bf16.msra.mxu0 %v1838
    %2415 = vmatpush.bf16.msra.mxu0 %v1830
    %2416 = vmatpush.bf16.msra.mxu0 %v1822
    %2417 = vmatpush.bf16.msra.mxu0 %v1814
    %2418 = vmatpush.bf16.msra.mxu0 %v1806
    %2419 = vmatpush.bf16.msra.mxu0 %v1798
    %2420 = vmatmul.bf16.gmra.mxu0 %v686
    %v2421 = vpop.f32.mrf.mxu0
    %v2422 = vadd.f32 %v2409, %v2421
    %v2423 = vpop.f32.mrf.mxu0
    %2424 = vdwg.mxu0
    %2425 = vmatpush.bf16.msra.mxu0 %v1918
    %2426 = vmatpush.bf16.msra.mxu0 %v1910
    %2427 = vmatpush.bf16.msra.mxu0 %v1902
    %2428 = vmatpush.bf16.msra.mxu0 %v1894
    %2429 = vmatpush.bf16.msra.mxu0 %v1886
    %2430 = vmatpush.bf16.msra.mxu0 %v1878
    %2431 = vmatpush.bf16.msra.mxu0 %v1870
    %2432 = vmatpush.bf16.msra.mxu0 %v1862
    %2433 = vmatmul.bf16.gmra.mxu0 %v687
    %v2434 = vpop.f32.mrf.mxu0
    %v2435 = vadd.f32 %v2422, %v2434
    %v2436 = vpop.f32.mrf.mxu0
    %2437 = vdwg.mxu0
    %2438 = vmatpush.bf16.msra.mxu0 %v1982
    %2439 = vmatpush.bf16.msra.mxu0 %v1974
    %2440 = vmatpush.bf16.msra.mxu0 %v1966
    %2441 = vmatpush.bf16.msra.mxu0 %v1958
    %2442 = vmatpush.bf16.msra.mxu0 %v1950
    %2443 = vmatpush.bf16.msra.mxu0 %v1942
    %2444 = vmatpush.bf16.msra.mxu0 %v1934
    %2445 = vmatpush.bf16.msra.mxu0 %v1926
    %2446 = vmatmul.bf16.gmra.mxu0 %v688
    %v2447 = vpop.f32.mrf.mxu0
    %v2448 = vadd.f32 %v2435, %v2447
    %v2449 = vpop.f32.mrf.mxu0
    %2450 = vdwg.mxu0
    %2451 = vmatpush.bf16.msra.mxu0 %v1791
    %2452 = vmatpush.bf16.msra.mxu0 %v1783
    %2453 = vmatpush.bf16.msra.mxu0 %v1775
    %2454 = vmatpush.bf16.msra.mxu0 %v1767
    %2455 = vmatpush.bf16.msra.mxu0 %v1759
    %2456 = vmatpush.bf16.msra.mxu0 %v1751
    %2457 = vmatpush.bf16.msra.mxu0 %v1743
    %2458 = vmatpush.bf16.msra.mxu0 %v1735
    %2459 = vmatmul.bf16.gmra.mxu0 %v685
    %v2460 = vpop.f32.mrf.mxu0
    %v2461 = vadd.f32 %v951, %v2460
    %v2462 = vpop.f32.mrf.mxu0
    %2463 = vdwg.mxu0
    %2464 = vmatpush.bf16.msra.mxu0 %v1855
    %2465 = vmatpush.bf16.msra.mxu0 %v1847
    %2466 = vmatpush.bf16.msra.mxu0 %v1839
    %2467 = vmatpush.bf16.msra.mxu0 %v1831
    %2468 = vmatpush.bf16.msra.mxu0 %v1823
    %2469 = vmatpush.bf16.msra.mxu0 %v1815
    %2470 = vmatpush.bf16.msra.mxu0 %v1807
    %2471 = vmatpush.bf16.msra.mxu0 %v1799
    %2472 = vmatmul.bf16.gmra.mxu0 %v686
    %v2473 = vpop.f32.mrf.mxu0
    %v2474 = vadd.f32 %v2461, %v2473
    %v2475 = vpop.f32.mrf.mxu0
    %2476 = vdwg.mxu0
    %2477 = vmatpush.bf16.msra.mxu0 %v1919
    %2478 = vmatpush.bf16.msra.mxu0 %v1911
    %2479 = vmatpush.bf16.msra.mxu0 %v1903
    %2480 = vmatpush.bf16.msra.mxu0 %v1895
    %2481 = vmatpush.bf16.msra.mxu0 %v1887
    %2482 = vmatpush.bf16.msra.mxu0 %v1879
    %2483 = vmatpush.bf16.msra.mxu0 %v1871
    %2484 = vmatpush.bf16.msra.mxu0 %v1863
    %2485 = vmatmul.bf16.gmra.mxu0 %v687
    %v2486 = vpop.f32.mrf.mxu0
    %v2487 = vadd.f32 %v2474, %v2486
    %v2488 = vpop.f32.mrf.mxu0
    %2489 = vdwg.mxu0
    %2490 = vmatpush.bf16.msra.mxu0 %v1983
    %2491 = vmatpush.bf16.msra.mxu0 %v1975
    %2492 = vmatpush.bf16.msra.mxu0 %v1967
    %2493 = vmatpush.bf16.msra.mxu0 %v1959
    %2494 = vmatpush.bf16.msra.mxu0 %v1951
    %2495 = vmatpush.bf16.msra.mxu0 %v1943
    %2496 = vmatpush.bf16.msra.mxu0 %v1935
    %2497 = vmatpush.bf16.msra.mxu0 %v1927
    %2498 = vmatmul.bf16.gmra.mxu0 %v688
    %v2499 = vpop.f32.mrf.mxu0
    %v2500 = vadd.f32 %v2487, %v2499
    %v2501 = vpop.f32.mrf.mxu0
    %2502 = vdwg.mxu0
    %2503 = vmatpush.bf16.msra.mxu0 %v1792
    %2504 = vmatpush.bf16.msra.mxu0 %v1784
    %2505 = vmatpush.bf16.msra.mxu0 %v1776
    %2506 = vmatpush.bf16.msra.mxu0 %v1768
    %2507 = vmatpush.bf16.msra.mxu0 %v1760
    %2508 = vmatpush.bf16.msra.mxu0 %v1752
    %2509 = vmatpush.bf16.msra.mxu0 %v1744
    %2510 = vmatpush.bf16.msra.mxu0 %v1736
    %2511 = vmatmul.bf16.gmra.mxu0 %v685
    %v2512 = vpop.f32.mrf.mxu0
    %v2513 = vadd.f32 %v952, %v2512
    %v2514 = vpop.f32.mrf.mxu0
    %2515 = vdwg.mxu0
    %2516 = vmatpush.bf16.msra.mxu0 %v1856
    %2517 = vmatpush.bf16.msra.mxu0 %v1848
    %2518 = vmatpush.bf16.msra.mxu0 %v1840
    %2519 = vmatpush.bf16.msra.mxu0 %v1832
    %2520 = vmatpush.bf16.msra.mxu0 %v1824
    %2521 = vmatpush.bf16.msra.mxu0 %v1816
    %2522 = vmatpush.bf16.msra.mxu0 %v1808
    %2523 = vmatpush.bf16.msra.mxu0 %v1800
    %2524 = vmatmul.bf16.gmra.mxu0 %v686
    %v2525 = vpop.f32.mrf.mxu0
    %v2526 = vadd.f32 %v2513, %v2525
    %v2527 = vpop.f32.mrf.mxu0
    %2528 = vdwg.mxu0
    %2529 = vmatpush.bf16.msra.mxu0 %v1920
    %2530 = vmatpush.bf16.msra.mxu0 %v1912
    %2531 = vmatpush.bf16.msra.mxu0 %v1904
    %2532 = vmatpush.bf16.msra.mxu0 %v1896
    %2533 = vmatpush.bf16.msra.mxu0 %v1888
    %2534 = vmatpush.bf16.msra.mxu0 %v1880
    %2535 = vmatpush.bf16.msra.mxu0 %v1872
    %2536 = vmatpush.bf16.msra.mxu0 %v1864
    %2537 = vmatmul.bf16.gmra.mxu0 %v687
    %v2538 = vpop.f32.mrf.mxu0
    %v2539 = vadd.f32 %v2526, %v2538
    %v2540 = vpop.f32.mrf.mxu0
    %2541 = vdwg.mxu0
    %2542 = vmatpush.bf16.msra.mxu0 %v1984
    %2543 = vmatpush.bf16.msra.mxu0 %v1976
    %2544 = vmatpush.bf16.msra.mxu0 %v1968
    %2545 = vmatpush.bf16.msra.mxu0 %v1960
    %2546 = vmatpush.bf16.msra.mxu0 %v1952
    %2547 = vmatpush.bf16.msra.mxu0 %v1944
    %2548 = vmatpush.bf16.msra.mxu0 %v1936
    %2549 = vmatpush.bf16.msra.mxu0 %v1928
    %2550 = vmatmul.bf16.gmra.mxu0 %v688
    %v2551 = vpop.f32.mrf.mxu0
    %v2552 = vadd.f32 %v2539, %v2551
    %v2553 = vpop.f32.mrf.mxu0
    %2554 = vdwg.mxu0
    %2555 = vmatpush.bf16.msra.mxu0 %v1793
    %2556 = vmatpush.bf16.msra.mxu0 %v1785
    %2557 = vmatpush.bf16.msra.mxu0 %v1777
    %2558 = vmatpush.bf16.msra.mxu0 %v1769
    %2559 = vmatpush.bf16.msra.mxu0 %v1761
    %2560 = vmatpush.bf16.msra.mxu0 %v1753
    %2561 = vmatpush.bf16.msra.mxu0 %v1745
    %2562 = vmatpush.bf16.msra.mxu0 %v1737
    %2563 = vmatmul.bf16.gmra.mxu0 %v685
    %v2564 = vpop.f32.mrf.mxu0
    %v2565 = vadd.f32 %v953, %v2564
    %v2566 = vpop.f32.mrf.mxu0
    %2567 = vdwg.mxu0
    %2568 = vmatpush.bf16.msra.mxu0 %v1857
    %2569 = vmatpush.bf16.msra.mxu0 %v1849
    %2570 = vmatpush.bf16.msra.mxu0 %v1841
    %2571 = vmatpush.bf16.msra.mxu0 %v1833
    %2572 = vmatpush.bf16.msra.mxu0 %v1825
    %2573 = vmatpush.bf16.msra.mxu0 %v1817
    %2574 = vmatpush.bf16.msra.mxu0 %v1809
    %2575 = vmatpush.bf16.msra.mxu0 %v1801
    %2576 = vmatmul.bf16.gmra.mxu0 %v686
    %v2577 = vpop.f32.mrf.mxu0
    %v2578 = vadd.f32 %v2565, %v2577
    %v2579 = vpop.f32.mrf.mxu0
    %2580 = vdwg.mxu0
    %2581 = vmatpush.bf16.msra.mxu0 %v1921
    %2582 = vmatpush.bf16.msra.mxu0 %v1913
    %2583 = vmatpush.bf16.msra.mxu0 %v1905
    %2584 = vmatpush.bf16.msra.mxu0 %v1897
    %2585 = vmatpush.bf16.msra.mxu0 %v1889
    %2586 = vmatpush.bf16.msra.mxu0 %v1881
    %2587 = vmatpush.bf16.msra.mxu0 %v1873
    %2588 = vmatpush.bf16.msra.mxu0 %v1865
    %2589 = vmatmul.bf16.gmra.mxu0 %v687
    %v2590 = vpop.f32.mrf.mxu0
    %v2591 = vadd.f32 %v2578, %v2590
    %v2592 = vpop.f32.mrf.mxu0
    %2593 = vdwg.mxu0
    %2594 = vmatpush.bf16.msra.mxu0 %v1985
    %2595 = vmatpush.bf16.msra.mxu0 %v1977
    %2596 = vmatpush.bf16.msra.mxu0 %v1969
    %2597 = vmatpush.bf16.msra.mxu0 %v1961
    %2598 = vmatpush.bf16.msra.mxu0 %v1953
    %2599 = vmatpush.bf16.msra.mxu0 %v1945
    %2600 = vmatpush.bf16.msra.mxu0 %v1937
    %2601 = vmatpush.bf16.msra.mxu0 %v1929
    %2602 = vmatmul.bf16.gmra.mxu0 %v688
    %v2603 = vpop.f32.mrf.mxu0
    %v2604 = vadd.f32 %v2591, %v2603
    %v2605 = vpop.f32.mrf.mxu0
    %2606 = vdwg.mxu0
    %2607 = vmatpush.bf16.msra.mxu0 %v1794
    %2608 = vmatpush.bf16.msra.mxu0 %v1786
    %2609 = vmatpush.bf16.msra.mxu0 %v1778
    %2610 = vmatpush.bf16.msra.mxu0 %v1770
    %2611 = vmatpush.bf16.msra.mxu0 %v1762
    %2612 = vmatpush.bf16.msra.mxu0 %v1754
    %2613 = vmatpush.bf16.msra.mxu0 %v1746
    %2614 = vmatpush.bf16.msra.mxu0 %v1738
    %2615 = vmatmul.bf16.gmra.mxu0 %v685
    %v2616 = vpop.f32.mrf.mxu0
    %v2617 = vadd.f32 %v954, %v2616
    %v2618 = vpop.f32.mrf.mxu0
    %2619 = vdwg.mxu0
    %2620 = vmatpush.bf16.msra.mxu0 %v1858
    %2621 = vmatpush.bf16.msra.mxu0 %v1850
    %2622 = vmatpush.bf16.msra.mxu0 %v1842
    %2623 = vmatpush.bf16.msra.mxu0 %v1834
    %2624 = vmatpush.bf16.msra.mxu0 %v1826
    %2625 = vmatpush.bf16.msra.mxu0 %v1818
    %2626 = vmatpush.bf16.msra.mxu0 %v1810
    %2627 = vmatpush.bf16.msra.mxu0 %v1802
    %2628 = vmatmul.bf16.gmra.mxu0 %v686
    %v2629 = vpop.f32.mrf.mxu0
    %v2630 = vadd.f32 %v2617, %v2629
    %v2631 = vpop.f32.mrf.mxu0
    %2632 = vdwg.mxu0
    %2633 = vmatpush.bf16.msra.mxu0 %v1922
    %2634 = vmatpush.bf16.msra.mxu0 %v1914
    %2635 = vmatpush.bf16.msra.mxu0 %v1906
    %2636 = vmatpush.bf16.msra.mxu0 %v1898
    %2637 = vmatpush.bf16.msra.mxu0 %v1890
    %2638 = vmatpush.bf16.msra.mxu0 %v1882
    %2639 = vmatpush.bf16.msra.mxu0 %v1874
    %2640 = vmatpush.bf16.msra.mxu0 %v1866
    %2641 = vmatmul.bf16.gmra.mxu0 %v687
    %v2642 = vpop.f32.mrf.mxu0
    %v2643 = vadd.f32 %v2630, %v2642
    %v2644 = vpop.f32.mrf.mxu0
    %2645 = vdwg.mxu0
    %2646 = vmatpush.bf16.msra.mxu0 %v1986
    %2647 = vmatpush.bf16.msra.mxu0 %v1978
    %2648 = vmatpush.bf16.msra.mxu0 %v1970
    %2649 = vmatpush.bf16.msra.mxu0 %v1962
    %2650 = vmatpush.bf16.msra.mxu0 %v1954
    %2651 = vmatpush.bf16.msra.mxu0 %v1946
    %2652 = vmatpush.bf16.msra.mxu0 %v1938
    %2653 = vmatpush.bf16.msra.mxu0 %v1930
    %2654 = vmatmul.bf16.gmra.mxu0 %v688
    %v2655 = vpop.f32.mrf.mxu0
    %v2656 = vadd.f32 %v2643, %v2655
    %v2657 = vpop.f32.mrf.mxu0
    %2658 = vdwg.mxu0
    %v2659 = vpack.c.bf16 %v2292, %v2292
    %v2660 = vpack.c.bf16 %v2344, %v2344
    %v2661 = vpack.c.bf16 %v2396, %v2396
    %v2662 = vpack.c.bf16 %v2448, %v2448
    %v2663 = vpack.c.bf16 %v2500, %v2500
    %v2664 = vpack.c.bf16 %v2552, %v2552
    %v2665 = vpack.c.bf16 %v2604, %v2604
    %v2666 = vpack.c.bf16 %v2656, %v2656
    %v2667 = vld [vmem:[#allocation11] sm:$0xff]
    %v2668 = vld [vmem:[#allocation11 + $0x8] sm:$0xff]
    %v2669 = vld [vmem:[#allocation11 + $0x10] sm:$0xff]
    %v2670 = vld [vmem:[#allocation11 + $0x18] sm:$0xff]
    %v2671 = vld [vmem:[#allocation11 + $0x20] sm:$0xff]
    %v2672 = vld [vmem:[#allocation11 + $0x28] sm:$0xff]
    %v2673 = vld [vmem:[#allocation11 + $0x30] sm:$0xff]
    %v2674 = vld [vmem:[#allocation11 + $0x38] sm:$0xff]
    %v2675 = vld [vmem:[#allocation11 + $0x40] sm:$0xff]
    %v2676 = vld [vmem:[#allocation11 + $0x48] sm:$0xff]
    %v2677 = vld [vmem:[#allocation11 + $0x50] sm:$0xff]
    %v2678 = vld [vmem:[#allocation11 + $0x58] sm:$0xff]
    %v2679 = vld [vmem:[#allocation11 + $0x60] sm:$0xff]
    %v2680 = vld [vmem:[#allocation11 + $0x68] sm:$0xff]
    %v2681 = vld [vmem:[#allocation11 + $0x70] sm:$0xff]
    %v2682 = vld [vmem:[#allocation11 + $0x78] sm:$0xff]
    %v2683 = vld [vmem:[#allocation11 + $0x80] sm:$0xff]
    %v2684 = vld [vmem:[#allocation11 + $0x88] sm:$0xff]
    %v2685 = vld [vmem:[#allocation11 + $0x90] sm:$0xff]
    %v2686 = vld [vmem:[#allocation11 + $0x98] sm:$0xff]
    %v2687 = vld [vmem:[#allocation11 + $0xa0] sm:$0xff]
    %v2688 = vld [vmem:[#allocation11 + $0xa8] sm:$0xff]
    %v2689 = vld [vmem:[#allocation11 + $0xb0] sm:$0xff]
    %v2690 = vld [vmem:[#allocation11 + $0xb8] sm:$0xff]
    %v2691 = vld [vmem:[#allocation11 + $0xc0] sm:$0xff]
    %v2692 = vld [vmem:[#allocation11 + $0xc8] sm:$0xff]
    %v2693 = vld [vmem:[#allocation11 + $0xd0] sm:$0xff]
    %v2694 = vld [vmem:[#allocation11 + $0xd8] sm:$0xff]
    %v2695 = vld [vmem:[#allocation11 + $0xe0] sm:$0xff]
    %v2696 = vld [vmem:[#allocation11 + $0xe8] sm:$0xff]
    %v2697 = vld [vmem:[#allocation11 + $0xf0] sm:$0xff]
    %v2698 = vld [vmem:[#allocation11 + $0xf8] sm:$0xff]
    %v2699 = vld [vmem:[#allocation11 + $0x100] sm:$0xff]
    %v2700 = vld [vmem:[#allocation11 + $0x108] sm:$0xff]
    %v2701 = vld [vmem:[#allocation11 + $0x110] sm:$0xff]
    %v2702 = vld [vmem:[#allocation11 + $0x118] sm:$0xff]
    %v2703 = vld [vmem:[#allocation11 + $0x120] sm:$0xff]
    %v2704 = vld [vmem:[#allocation11 + $0x128] sm:$0xff]
    %v2705 = vld [vmem:[#allocation11 + $0x130] sm:$0xff]
    %v2706 = vld [vmem:[#allocation11 + $0x138] sm:$0xff]
    %v2707 = vld [vmem:[#allocation11 + $0x140] sm:$0xff]
    %v2708 = vld [vmem:[#allocation11 + $0x148] sm:$0xff]
    %v2709 = vld [vmem:[#allocation11 + $0x150] sm:$0xff]
    %v2710 = vld [vmem:[#allocation11 + $0x158] sm:$0xff]
    %v2711 = vld [vmem:[#allocation11 + $0x160] sm:$0xff]
    %v2712 = vld [vmem:[#allocation11 + $0x168] sm:$0xff]
    %v2713 = vld [vmem:[#allocation11 + $0x170] sm:$0xff]
    %v2714 = vld [vmem:[#allocation11 + $0x178] sm:$0xff]
    %v2715 = vld [vmem:[#allocation11 + $0x180] sm:$0xff]
    %v2716 = vld [vmem:[#allocation11 + $0x188] sm:$0xff]
    %v2717 = vld [vmem:[#allocation11 + $0x190] sm:$0xff]
    %v2718 = vld [vmem:[#allocation11 + $0x198] sm:$0xff]
    %v2719 = vld [vmem:[#allocation11 + $0x1a0] sm:$0xff]
    %v2720 = vld [vmem:[#allocation11 + $0x1a8] sm:$0xff]
    %v2721 = vld [vmem:[#allocation11 + $0x1b0] sm:$0xff]
    %v2722 = vld [vmem:[#allocation11 + $0x1b8] sm:$0xff]
    %v2723 = vld [vmem:[#allocation11 + $0x1c0] sm:$0xff]
    %v2724 = vld [vmem:[#allocation11 + $0x1c8] sm:$0xff]
    %v2725 = vld [vmem:[#allocation11 + $0x1d0] sm:$0xff]
    %v2726 = vld [vmem:[#allocation11 + $0x1d8] sm:$0xff]
    %v2727 = vld [vmem:[#allocation11 + $0x1e0] sm:$0xff]
    %v2728 = vld [vmem:[#allocation11 + $0x1e8] sm:$0xff]
    %v2729 = vld [vmem:[#allocation11 + $0x1f0] sm:$0xff]
    %v2730 = vld [vmem:[#allocation11 + $0x1f8] sm:$0xff]
    %v2731 = vld [vmem:[#allocation11 + $0x200] sm:$0xff]
    %v2732 = vld [vmem:[#allocation11 + $0x208] sm:$0xff]
    %v2733 = vld [vmem:[#allocation11 + $0x210] sm:$0xff]
    %v2734 = vld [vmem:[#allocation11 + $0x218] sm:$0xff]
    %v2735 = vld [vmem:[#allocation11 + $0x220] sm:$0xff]
    %v2736 = vld [vmem:[#allocation11 + $0x228] sm:$0xff]
    %v2737 = vld [vmem:[#allocation11 + $0x230] sm:$0xff]
    %v2738 = vld [vmem:[#allocation11 + $0x238] sm:$0xff]
    %v2739 = vld [vmem:[#allocation11 + $0x240] sm:$0xff]
    %v2740 = vld [vmem:[#allocation11 + $0x248] sm:$0xff]
    %v2741 = vld [vmem:[#allocation11 + $0x250] sm:$0xff]
    %v2742 = vld [vmem:[#allocation11 + $0x258] sm:$0xff]
    %v2743 = vld [vmem:[#allocation11 + $0x260] sm:$0xff]
    %v2744 = vld [vmem:[#allocation11 + $0x268] sm:$0xff]
    %v2745 = vld [vmem:[#allocation11 + $0x270] sm:$0xff]
    %v2746 = vld [vmem:[#allocation11 + $0x278] sm:$0xff]
    %v2747 = vld [vmem:[#allocation11 + $0x280] sm:$0xff]
    %v2748 = vld [vmem:[#allocation11 + $0x288] sm:$0xff]
    %v2749 = vld [vmem:[#allocation11 + $0x290] sm:$0xff]
    %v2750 = vld [vmem:[#allocation11 + $0x298] sm:$0xff]
    %v2751 = vld [vmem:[#allocation11 + $0x2a0] sm:$0xff]
    %v2752 = vld [vmem:[#allocation11 + $0x2a8] sm:$0xff]
    %v2753 = vld [vmem:[#allocation11 + $0x2b0] sm:$0xff]
    %v2754 = vld [vmem:[#allocation11 + $0x2b8] sm:$0xff]
    %v2755 = vld [vmem:[#allocation11 + $0x2c0] sm:$0xff]
    %v2756 = vld [vmem:[#allocation11 + $0x2c8] sm:$0xff]
    %v2757 = vld [vmem:[#allocation11 + $0x2d0] sm:$0xff]
    %v2758 = vld [vmem:[#allocation11 + $0x2d8] sm:$0xff]
    %v2759 = vld [vmem:[#allocation11 + $0x2e0] sm:$0xff]
    %v2760 = vld [vmem:[#allocation11 + $0x2e8] sm:$0xff]
    %v2761 = vld [vmem:[#allocation11 + $0x2f0] sm:$0xff]
    %v2762 = vld [vmem:[#allocation11 + $0x2f8] sm:$0xff]
    %v2763 = vld [vmem:[#allocation11 + $0x300] sm:$0xff]
    %v2764 = vld [vmem:[#allocation11 + $0x308] sm:$0xff]
    %v2765 = vld [vmem:[#allocation11 + $0x310] sm:$0xff]
    %v2766 = vld [vmem:[#allocation11 + $0x318] sm:$0xff]
    %v2767 = vld [vmem:[#allocation11 + $0x320] sm:$0xff]
    %v2768 = vld [vmem:[#allocation11 + $0x328] sm:$0xff]
    %v2769 = vld [vmem:[#allocation11 + $0x330] sm:$0xff]
    %v2770 = vld [vmem:[#allocation11 + $0x338] sm:$0xff]
    %v2771 = vld [vmem:[#allocation11 + $0x340] sm:$0xff]
    %v2772 = vld [vmem:[#allocation11 + $0x348] sm:$0xff]
    %v2773 = vld [vmem:[#allocation11 + $0x350] sm:$0xff]
    %v2774 = vld [vmem:[#allocation11 + $0x358] sm:$0xff]
    %v2775 = vld [vmem:[#allocation11 + $0x360] sm:$0xff]
    %v2776 = vld [vmem:[#allocation11 + $0x368] sm:$0xff]
    %v2777 = vld [vmem:[#allocation11 + $0x370] sm:$0xff]
    %v2778 = vld [vmem:[#allocation11 + $0x378] sm:$0xff]
    %v2779 = vld [vmem:[#allocation11 + $0x380] sm:$0xff]
    %v2780 = vld [vmem:[#allocation11 + $0x388] sm:$0xff]
    %v2781 = vld [vmem:[#allocation11 + $0x390] sm:$0xff]
    %v2782 = vld [vmem:[#allocation11 + $0x398] sm:$0xff]
    %v2783 = vld [vmem:[#allocation11 + $0x3a0] sm:$0xff]
    %v2784 = vld [vmem:[#allocation11 + $0x3a8] sm:$0xff]
    %v2785 = vld [vmem:[#allocation11 + $0x3b0] sm:$0xff]
    %v2786 = vld [vmem:[#allocation11 + $0x3b8] sm:$0xff]
    %v2787 = vld [vmem:[#allocation11 + $0x3c0] sm:$0xff]
    %v2788 = vld [vmem:[#allocation11 + $0x3c8] sm:$0xff]
    %v2789 = vld [vmem:[#allocation11 + $0x3d0] sm:$0xff]
    %v2790 = vld [vmem:[#allocation11 + $0x3d8] sm:$0xff]
    %v2791 = vld [vmem:[#allocation11 + $0x3e0] sm:$0xff]
    %v2792 = vld [vmem:[#allocation11 + $0x3e8] sm:$0xff]
    %v2793 = vld [vmem:[#allocation11 + $0x3f0] sm:$0xff]
    %v2794 = vld [vmem:[#allocation11 + $0x3f8] sm:$0xff]
    %v2795 = vld [vmem:[#allocation11 + $0x400] sm:$0xff]
    %v2796 = vld [vmem:[#allocation11 + $0x408] sm:$0xff]
    %v2797 = vld [vmem:[#allocation11 + $0x410] sm:$0xff]
    %v2798 = vld [vmem:[#allocation11 + $0x418] sm:$0xff]
    %v2799 = vld [vmem:[#allocation11 + $0x420] sm:$0xff]
    %v2800 = vld [vmem:[#allocation11 + $0x428] sm:$0xff]
    %v2801 = vld [vmem:[#allocation11 + $0x430] sm:$0xff]
    %v2802 = vld [vmem:[#allocation11 + $0x438] sm:$0xff]
    %v2803 = vld [vmem:[#allocation11 + $0x440] sm:$0xff]
    %v2804 = vld [vmem:[#allocation11 + $0x448] sm:$0xff]
    %v2805 = vld [vmem:[#allocation11 + $0x450] sm:$0xff]
    %v2806 = vld [vmem:[#allocation11 + $0x458] sm:$0xff]
    %v2807 = vld [vmem:[#allocation11 + $0x460] sm:$0xff]
    %v2808 = vld [vmem:[#allocation11 + $0x468] sm:$0xff]
    %v2809 = vld [vmem:[#allocation11 + $0x470] sm:$0xff]
    %v2810 = vld [vmem:[#allocation11 + $0x478] sm:$0xff]
    %v2811 = vld [vmem:[#allocation11 + $0x480] sm:$0xff]
    %v2812 = vld [vmem:[#allocation11 + $0x488] sm:$0xff]
    %v2813 = vld [vmem:[#allocation11 + $0x490] sm:$0xff]
    %v2814 = vld [vmem:[#allocation11 + $0x498] sm:$0xff]
    %v2815 = vld [vmem:[#allocation11 + $0x4a0] sm:$0xff]
    %v2816 = vld [vmem:[#allocation11 + $0x4a8] sm:$0xff]
    %v2817 = vld [vmem:[#allocation11 + $0x4b0] sm:$0xff]
    %v2818 = vld [vmem:[#allocation11 + $0x4b8] sm:$0xff]
    %v2819 = vld [vmem:[#allocation11 + $0x4c0] sm:$0xff]
    %v2820 = vld [vmem:[#allocation11 + $0x4c8] sm:$0xff]
    %v2821 = vld [vmem:[#allocation11 + $0x4d0] sm:$0xff]
    %v2822 = vld [vmem:[#allocation11 + $0x4d8] sm:$0xff]
    %v2823 = vld [vmem:[#allocation11 + $0x4e0] sm:$0xff]
    %v2824 = vld [vmem:[#allocation11 + $0x4e8] sm:$0xff]
    %v2825 = vld [vmem:[#allocation11 + $0x4f0] sm:$0xff]
    %v2826 = vld [vmem:[#allocation11 + $0x4f8] sm:$0xff]
    %v2827 = vld [vmem:[#allocation11 + $0x500] sm:$0xff]
    %v2828 = vld [vmem:[#allocation11 + $0x508] sm:$0xff]
    %v2829 = vld [vmem:[#allocation11 + $0x510] sm:$0xff]
    %v2830 = vld [vmem:[#allocation11 + $0x518] sm:$0xff]
    %v2831 = vld [vmem:[#allocation11 + $0x520] sm:$0xff]
    %v2832 = vld [vmem:[#allocation11 + $0x528] sm:$0xff]
    %v2833 = vld [vmem:[#allocation11 + $0x530] sm:$0xff]
    %v2834 = vld [vmem:[#allocation11 + $0x538] sm:$0xff]
    %v2835 = vld [vmem:[#allocation11 + $0x540] sm:$0xff]
    %v2836 = vld [vmem:[#allocation11 + $0x548] sm:$0xff]
    %v2837 = vld [vmem:[#allocation11 + $0x550] sm:$0xff]
    %v2838 = vld [vmem:[#allocation11 + $0x558] sm:$0xff]
    %v2839 = vld [vmem:[#allocation11 + $0x560] sm:$0xff]
    %v2840 = vld [vmem:[#allocation11 + $0x568] sm:$0xff]
    %v2841 = vld [vmem:[#allocation11 + $0x570] sm:$0xff]
    %v2842 = vld [vmem:[#allocation11 + $0x578] sm:$0xff]
    %v2843 = vld [vmem:[#allocation11 + $0x580] sm:$0xff]
    %v2844 = vld [vmem:[#allocation11 + $0x588] sm:$0xff]
    %v2845 = vld [vmem:[#allocation11 + $0x590] sm:$0xff]
    %v2846 = vld [vmem:[#allocation11 + $0x598] sm:$0xff]
    %v2847 = vld [vmem:[#allocation11 + $0x5a0] sm:$0xff]
    %v2848 = vld [vmem:[#allocation11 + $0x5a8] sm:$0xff]
    %v2849 = vld [vmem:[#allocation11 + $0x5b0] sm:$0xff]
    %v2850 = vld [vmem:[#allocation11 + $0x5b8] sm:$0xff]
    %v2851 = vld [vmem:[#allocation11 + $0x5c0] sm:$0xff]
    %v2852 = vld [vmem:[#allocation11 + $0x5c8] sm:$0xff]
    %v2853 = vld [vmem:[#allocation11 + $0x5d0] sm:$0xff]
    %v2854 = vld [vmem:[#allocation11 + $0x5d8] sm:$0xff]
    %v2855 = vld [vmem:[#allocation11 + $0x5e0] sm:$0xff]
    %v2856 = vld [vmem:[#allocation11 + $0x5e8] sm:$0xff]
    %v2857 = vld [vmem:[#allocation11 + $0x5f0] sm:$0xff]
    %v2858 = vld [vmem:[#allocation11 + $0x5f8] sm:$0xff]
    %v2859 = vld [vmem:[#allocation11 + $0x600] sm:$0xff]
    %v2860 = vld [vmem:[#allocation11 + $0x608] sm:$0xff]
    %v2861 = vld [vmem:[#allocation11 + $0x610] sm:$0xff]
    %v2862 = vld [vmem:[#allocation11 + $0x618] sm:$0xff]
    %v2863 = vld [vmem:[#allocation11 + $0x620] sm:$0xff]
    %v2864 = vld [vmem:[#allocation11 + $0x628] sm:$0xff]
    %v2865 = vld [vmem:[#allocation11 + $0x630] sm:$0xff]
    %v2866 = vld [vmem:[#allocation11 + $0x638] sm:$0xff]
    %v2867 = vld [vmem:[#allocation11 + $0x640] sm:$0xff]
    %v2868 = vld [vmem:[#allocation11 + $0x648] sm:$0xff]
    %v2869 = vld [vmem:[#allocation11 + $0x650] sm:$0xff]
    %v2870 = vld [vmem:[#allocation11 + $0x658] sm:$0xff]
    %v2871 = vld [vmem:[#allocation11 + $0x660] sm:$0xff]
    %v2872 = vld [vmem:[#allocation11 + $0x668] sm:$0xff]
    %v2873 = vld [vmem:[#allocation11 + $0x670] sm:$0xff]
    %v2874 = vld [vmem:[#allocation11 + $0x678] sm:$0xff]
    %v2875 = vld [vmem:[#allocation11 + $0x680] sm:$0xff]
    %v2876 = vld [vmem:[#allocation11 + $0x688] sm:$0xff]
    %v2877 = vld [vmem:[#allocation11 + $0x690] sm:$0xff]
    %v2878 = vld [vmem:[#allocation11 + $0x698] sm:$0xff]
    %v2879 = vld [vmem:[#allocation11 + $0x6a0] sm:$0xff]
    %v2880 = vld [vmem:[#allocation11 + $0x6a8] sm:$0xff]
    %v2881 = vld [vmem:[#allocation11 + $0x6b0] sm:$0xff]
    %v2882 = vld [vmem:[#allocation11 + $0x6b8] sm:$0xff]
    %v2883 = vld [vmem:[#allocation11 + $0x6c0] sm:$0xff]
    %v2884 = vld [vmem:[#allocation11 + $0x6c8] sm:$0xff]
    %v2885 = vld [vmem:[#allocation11 + $0x6d0] sm:$0xff]
    %v2886 = vld [vmem:[#allocation11 + $0x6d8] sm:$0xff]
    %v2887 = vld [vmem:[#allocation11 + $0x6e0] sm:$0xff]
    %v2888 = vld [vmem:[#allocation11 + $0x6e8] sm:$0xff]
    %v2889 = vld [vmem:[#allocation11 + $0x6f0] sm:$0xff]
    %v2890 = vld [vmem:[#allocation11 + $0x6f8] sm:$0xff]
    %v2891 = vld [vmem:[#allocation11 + $0x700] sm:$0xff]
    %v2892 = vld [vmem:[#allocation11 + $0x708] sm:$0xff]
    %v2893 = vld [vmem:[#allocation11 + $0x710] sm:$0xff]
    %v2894 = vld [vmem:[#allocation11 + $0x718] sm:$0xff]
    %v2895 = vld [vmem:[#allocation11 + $0x720] sm:$0xff]
    %v2896 = vld [vmem:[#allocation11 + $0x728] sm:$0xff]
    %v2897 = vld [vmem:[#allocation11 + $0x730] sm:$0xff]
    %v2898 = vld [vmem:[#allocation11 + $0x738] sm:$0xff]
    %v2899 = vld [vmem:[#allocation11 + $0x740] sm:$0xff]
    %v2900 = vld [vmem:[#allocation11 + $0x748] sm:$0xff]
    %v2901 = vld [vmem:[#allocation11 + $0x750] sm:$0xff]
    %v2902 = vld [vmem:[#allocation11 + $0x758] sm:$0xff]
    %v2903 = vld [vmem:[#allocation11 + $0x760] sm:$0xff]
    %v2904 = vld [vmem:[#allocation11 + $0x768] sm:$0xff]
    %v2905 = vld [vmem:[#allocation11 + $0x770] sm:$0xff]
    %v2906 = vld [vmem:[#allocation11 + $0x778] sm:$0xff]
    %v2907 = vld [vmem:[#allocation11 + $0x780] sm:$0xff]
    %v2908 = vld [vmem:[#allocation11 + $0x788] sm:$0xff]
    %v2909 = vld [vmem:[#allocation11 + $0x790] sm:$0xff]
    %v2910 = vld [vmem:[#allocation11 + $0x798] sm:$0xff]
    %v2911 = vld [vmem:[#allocation11 + $0x7a0] sm:$0xff]
    %v2912 = vld [vmem:[#allocation11 + $0x7a8] sm:$0xff]
    %v2913 = vld [vmem:[#allocation11 + $0x7b0] sm:$0xff]
    %v2914 = vld [vmem:[#allocation11 + $0x7b8] sm:$0xff]
    %v2915 = vld [vmem:[#allocation11 + $0x7c0] sm:$0xff]
    %v2916 = vld [vmem:[#allocation11 + $0x7c8] sm:$0xff]
    %v2917 = vld [vmem:[#allocation11 + $0x7d0] sm:$0xff]
    %v2918 = vld [vmem:[#allocation11 + $0x7d8] sm:$0xff]
    %v2919 = vld [vmem:[#allocation11 + $0x7e0] sm:$0xff]
    %v2920 = vld [vmem:[#allocation11 + $0x7e8] sm:$0xff]
    %v2921 = vld [vmem:[#allocation11 + $0x7f0] sm:$0xff]
    %v2922 = vld [vmem:[#allocation11 + $0x7f8] sm:$0xff]
    %v2923 = vld [vmem:[%s6] sm:$0xf]
    %v2925 = vperm.slane %v2923, 0
    %v2926 = vperm.slane %v2923, 1
    %v2927 = vperm.slane %v2923, 2
    %v2928 = vperm.slane %v2923, 3
    %v3189 = vunpack.c.l.b16 %v2667
    %v3190 = vunpack.c.h.b16 %v2667
    %v3191 = vunpack.c.l.b16 %v2668
    %v3192 = vunpack.c.h.b16 %v2668
    %v3193 = vunpack.c.l.b16 %v2669
    %v3194 = vunpack.c.h.b16 %v2669
    %v3195 = vunpack.c.l.b16 %v2670
    %v3196 = vunpack.c.h.b16 %v2670
    %v3197 = vunpack.c.l.b16 %v2671
    %v3198 = vunpack.c.h.b16 %v2671
    %v3199 = vunpack.c.l.b16 %v2672
    %v3200 = vunpack.c.h.b16 %v2672
    %v3201 = vunpack.c.l.b16 %v2673
    %v3202 = vunpack.c.h.b16 %v2673
    %v3203 = vunpack.c.l.b16 %v2674
    %v3204 = vunpack.c.h.b16 %v2674
    %v3205 = vunpack.c.l.b16 %v2675
    %v3206 = vunpack.c.h.b16 %v2675
    %v3207 = vunpack.c.l.b16 %v2676
    %v3208 = vunpack.c.h.b16 %v2676
    %v3209 = vunpack.c.l.b16 %v2677
    %v3210 = vunpack.c.h.b16 %v2677
    %v3211 = vunpack.c.l.b16 %v2678
    %v3212 = vunpack.c.h.b16 %v2678
    %v3213 = vunpack.c.l.b16 %v2679
    %v3214 = vunpack.c.h.b16 %v2679
    %v3215 = vunpack.c.l.b16 %v2680
    %v3216 = vunpack.c.h.b16 %v2680
    %v3217 = vunpack.c.l.b16 %v2681
    %v3218 = vunpack.c.h.b16 %v2681
    %v3219 = vunpack.c.l.b16 %v2682
    %v3220 = vunpack.c.h.b16 %v2682
    %v3221 = vunpack.c.l.b16 %v2683
    %v3222 = vunpack.c.h.b16 %v2683
    %v3223 = vunpack.c.l.b16 %v2684
    %v3224 = vunpack.c.h.b16 %v2684
    %v3225 = vunpack.c.l.b16 %v2685
    %v3226 = vunpack.c.h.b16 %v2685
    %v3227 = vunpack.c.l.b16 %v2686
    %v3228 = vunpack.c.h.b16 %v2686
    %v3229 = vunpack.c.l.b16 %v2687
    %v3230 = vunpack.c.h.b16 %v2687
    %v3231 = vunpack.c.l.b16 %v2688
    %v3232 = vunpack.c.h.b16 %v2688
    %v3233 = vunpack.c.l.b16 %v2689
    %v3234 = vunpack.c.h.b16 %v2689
    %v3235 = vunpack.c.l.b16 %v2690
    %v3236 = vunpack.c.h.b16 %v2690
    %v3237 = vunpack.c.l.b16 %v2691
    %v3238 = vunpack.c.h.b16 %v2691
    %v3239 = vunpack.c.l.b16 %v2692
    %v3240 = vunpack.c.h.b16 %v2692
    %v3241 = vunpack.c.l.b16 %v2693
    %v3242 = vunpack.c.h.b16 %v2693
    %v3243 = vunpack.c.l.b16 %v2694
    %v3244 = vunpack.c.h.b16 %v2694
    %v3245 = vunpack.c.l.b16 %v2695
    %v3246 = vunpack.c.h.b16 %v2695
    %v3247 = vunpack.c.l.b16 %v2696
    %v3248 = vunpack.c.h.b16 %v2696
    %v3249 = vunpack.c.l.b16 %v2697
    %v3250 = vunpack.c.h.b16 %v2697
    %v3251 = vunpack.c.l.b16 %v2698
    %v3252 = vunpack.c.h.b16 %v2698
    %v3253 = vunpack.c.l.b16 %v2699
    %v3254 = vunpack.c.h.b16 %v2699
    %v3255 = vunpack.c.l.b16 %v2700
    %v3256 = vunpack.c.h.b16 %v2700
    %v3257 = vunpack.c.l.b16 %v2701
    %v3258 = vunpack.c.h.b16 %v2701
    %v3259 = vunpack.c.l.b16 %v2702
    %v3260 = vunpack.c.h.b16 %v2702
    %v3261 = vunpack.c.l.b16 %v2703
    %v3262 = vunpack.c.h.b16 %v2703
    %v3263 = vunpack.c.l.b16 %v2704
    %v3264 = vunpack.c.h.b16 %v2704
    %v3265 = vunpack.c.l.b16 %v2705
    %v3266 = vunpack.c.h.b16 %v2705
    %v3267 = vunpack.c.l.b16 %v2706
    %v3268 = vunpack.c.h.b16 %v2706
    %v3269 = vunpack.c.l.b16 %v2707
    %v3270 = vunpack.c.h.b16 %v2707
    %v3271 = vunpack.c.l.b16 %v2708
    %v3272 = vunpack.c.h.b16 %v2708
    %v3273 = vunpack.c.l.b16 %v2709
    %v3274 = vunpack.c.h.b16 %v2709
    %v3275 = vunpack.c.l.b16 %v2710
    %v3276 = vunpack.c.h.b16 %v2710
    %v3277 = vunpack.c.l.b16 %v2711
    %v3278 = vunpack.c.h.b16 %v2711
    %v3279 = vunpack.c.l.b16 %v2712
    %v3280 = vunpack.c.h.b16 %v2712
    %v3281 = vunpack.c.l.b16 %v2713
    %v3282 = vunpack.c.h.b16 %v2713
    %v3283 = vunpack.c.l.b16 %v2714
    %v3284 = vunpack.c.h.b16 %v2714
    %v3285 = vunpack.c.l.b16 %v2715
    %v3286 = vunpack.c.h.b16 %v2715
    %v3287 = vunpack.c.l.b16 %v2716
    %v3288 = vunpack.c.h.b16 %v2716
    %v3289 = vunpack.c.l.b16 %v2717
    %v3290 = vunpack.c.h.b16 %v2717
    %v3291 = vunpack.c.l.b16 %v2718
    %v3292 = vunpack.c.h.b16 %v2718
    %v3293 = vunpack.c.l.b16 %v2719
    %v3294 = vunpack.c.h.b16 %v2719
    %v3295 = vunpack.c.l.b16 %v2720
    %v3296 = vunpack.c.h.b16 %v2720
    %v3297 = vunpack.c.l.b16 %v2721
    %v3298 = vunpack.c.h.b16 %v2721
    %v3299 = vunpack.c.l.b16 %v2722
    %v3300 = vunpack.c.h.b16 %v2722
    %v3301 = vunpack.c.l.b16 %v2723
    %v3302 = vunpack.c.h.b16 %v2723
    %v3303 = vunpack.c.l.b16 %v2724
    %v3304 = vunpack.c.h.b16 %v2724
    %v3305 = vunpack.c.l.b16 %v2725
    %v3306 = vunpack.c.h.b16 %v2725
    %v3307 = vunpack.c.l.b16 %v2726
    %v3308 = vunpack.c.h.b16 %v2726
    %v3309 = vunpack.c.l.b16 %v2727
    %v3310 = vunpack.c.h.b16 %v2727
    %v3311 = vunpack.c.l.b16 %v2728
    %v3312 = vunpack.c.h.b16 %v2728
    %v3313 = vunpack.c.l.b16 %v2729
    %v3314 = vunpack.c.h.b16 %v2729
    %v3315 = vunpack.c.l.b16 %v2730
    %v3316 = vunpack.c.h.b16 %v2730
    %v3317 = vunpack.c.l.b16 %v2731
    %v3318 = vunpack.c.h.b16 %v2731
    %v3319 = vunpack.c.l.b16 %v2732
    %v3320 = vunpack.c.h.b16 %v2732
    %v3321 = vunpack.c.l.b16 %v2733
    %v3322 = vunpack.c.h.b16 %v2733
    %v3323 = vunpack.c.l.b16 %v2734
    %v3324 = vunpack.c.h.b16 %v2734
    %v3325 = vunpack.c.l.b16 %v2735
    %v3326 = vunpack.c.h.b16 %v2735
    %v3327 = vunpack.c.l.b16 %v2736
    %v3328 = vunpack.c.h.b16 %v2736
    %v3329 = vunpack.c.l.b16 %v2737
    %v3330 = vunpack.c.h.b16 %v2737
    %v3331 = vunpack.c.l.b16 %v2738
    %v3332 = vunpack.c.h.b16 %v2738
    %v3333 = vunpack.c.l.b16 %v2739
    %v3334 = vunpack.c.h.b16 %v2739
    %v3335 = vunpack.c.l.b16 %v2740
    %v3336 = vunpack.c.h.b16 %v2740
    %v3337 = vunpack.c.l.b16 %v2741
    %v3338 = vunpack.c.h.b16 %v2741
    %v3339 = vunpack.c.l.b16 %v2742
    %v3340 = vunpack.c.h.b16 %v2742
    %v3341 = vunpack.c.l.b16 %v2743
    %v3342 = vunpack.c.h.b16 %v2743
    %v3343 = vunpack.c.l.b16 %v2744
    %v3344 = vunpack.c.h.b16 %v2744
    %v3345 = vunpack.c.l.b16 %v2745
    %v3346 = vunpack.c.h.b16 %v2745
    %v3347 = vunpack.c.l.b16 %v2746
    %v3348 = vunpack.c.h.b16 %v2746
    %v3349 = vunpack.c.l.b16 %v2747
    %v3350 = vunpack.c.h.b16 %v2747
    %v3351 = vunpack.c.l.b16 %v2748
    %v3352 = vunpack.c.h.b16 %v2748
    %v3353 = vunpack.c.l.b16 %v2749
    %v3354 = vunpack.c.h.b16 %v2749
    %v3355 = vunpack.c.l.b16 %v2750
    %v3356 = vunpack.c.h.b16 %v2750
    %v3357 = vunpack.c.l.b16 %v2751
    %v3358 = vunpack.c.h.b16 %v2751
    %v3359 = vunpack.c.l.b16 %v2752
    %v3360 = vunpack.c.h.b16 %v2752
    %v3361 = vunpack.c.l.b16 %v2753
    %v3362 = vunpack.c.h.b16 %v2753
    %v3363 = vunpack.c.l.b16 %v2754
    %v3364 = vunpack.c.h.b16 %v2754
    %v3365 = vunpack.c.l.b16 %v2755
    %v3366 = vunpack.c.h.b16 %v2755
    %v3367 = vunpack.c.l.b16 %v2756
    %v3368 = vunpack.c.h.b16 %v2756
    %v3369 = vunpack.c.l.b16 %v2757
    %v3370 = vunpack.c.h.b16 %v2757
    %v3371 = vunpack.c.l.b16 %v2758
    %v3372 = vunpack.c.h.b16 %v2758
    %v3373 = vunpack.c.l.b16 %v2759
    %v3374 = vunpack.c.h.b16 %v2759
    %v3375 = vunpack.c.l.b16 %v2760
    %v3376 = vunpack.c.h.b16 %v2760
    %v3377 = vunpack.c.l.b16 %v2761
    %v3378 = vunpack.c.h.b16 %v2761
    %v3379 = vunpack.c.l.b16 %v2762
    %v3380 = vunpack.c.h.b16 %v2762
    %v3381 = vunpack.c.l.b16 %v2763
    %v3382 = vunpack.c.h.b16 %v2763
    %v3383 = vunpack.c.l.b16 %v2764
    %v3384 = vunpack.c.h.b16 %v2764
    %v3385 = vunpack.c.l.b16 %v2765
    %v3386 = vunpack.c.h.b16 %v2765
    %v3387 = vunpack.c.l.b16 %v2766
    %v3388 = vunpack.c.h.b16 %v2766
    %v3389 = vunpack.c.l.b16 %v2767
    %v3390 = vunpack.c.h.b16 %v2767
    %v3391 = vunpack.c.l.b16 %v2768
    %v3392 = vunpack.c.h.b16 %v2768
    %v3393 = vunpack.c.l.b16 %v2769
    %v3394 = vunpack.c.h.b16 %v2769
    %v3395 = vunpack.c.l.b16 %v2770
    %v3396 = vunpack.c.h.b16 %v2770
    %v3397 = vunpack.c.l.b16 %v2771
    %v3398 = vunpack.c.h.b16 %v2771
    %v3399 = vunpack.c.l.b16 %v2772
    %v3400 = vunpack.c.h.b16 %v2772
    %v3401 = vunpack.c.l.b16 %v2773
    %v3402 = vunpack.c.h.b16 %v2773
    %v3403 = vunpack.c.l.b16 %v2774
    %v3404 = vunpack.c.h.b16 %v2774
    %v3405 = vunpack.c.l.b16 %v2775
    %v3406 = vunpack.c.h.b16 %v2775
    %v3407 = vunpack.c.l.b16 %v2776
    %v3408 = vunpack.c.h.b16 %v2776
    %v3409 = vunpack.c.l.b16 %v2777
    %v3410 = vunpack.c.h.b16 %v2777
    %v3411 = vunpack.c.l.b16 %v2778
    %v3412 = vunpack.c.h.b16 %v2778
    %v3413 = vunpack.c.l.b16 %v2779
    %v3414 = vunpack.c.h.b16 %v2779
    %v3415 = vunpack.c.l.b16 %v2780
    %v3416 = vunpack.c.h.b16 %v2780
    %v3417 = vunpack.c.l.b16 %v2781
    %v3418 = vunpack.c.h.b16 %v2781
    %v3419 = vunpack.c.l.b16 %v2782
    %v3420 = vunpack.c.h.b16 %v2782
    %v3421 = vunpack.c.l.b16 %v2783
    %v3422 = vunpack.c.h.b16 %v2783
    %v3423 = vunpack.c.l.b16 %v2784
    %v3424 = vunpack.c.h.b16 %v2784
    %v3425 = vunpack.c.l.b16 %v2785
    %v3426 = vunpack.c.h.b16 %v2785
    %v3427 = vunpack.c.l.b16 %v2786
    %v3428 = vunpack.c.h.b16 %v2786
    %v3429 = vunpack.c.l.b16 %v2787
    %v3430 = vunpack.c.h.b16 %v2787
    %v3431 = vunpack.c.l.b16 %v2788
    %v3432 = vunpack.c.h.b16 %v2788
    %v3433 = vunpack.c.l.b16 %v2789
    %v3434 = vunpack.c.h.b16 %v2789
    %v3435 = vunpack.c.l.b16 %v2790
    %v3436 = vunpack.c.h.b16 %v2790
    %v3437 = vunpack.c.l.b16 %v2791
    %v3438 = vunpack.c.h.b16 %v2791
    %v3439 = vunpack.c.l.b16 %v2792
    %v3440 = vunpack.c.h.b16 %v2792
    %v3441 = vunpack.c.l.b16 %v2793
    %v3442 = vunpack.c.h.b16 %v2793
    %v3443 = vunpack.c.l.b16 %v2794
    %v3444 = vunpack.c.h.b16 %v2794
    %v3445 = vunpack.c.l.b16 %v2795
    %v3446 = vunpack.c.h.b16 %v2795
    %v3447 = vunpack.c.l.b16 %v2796
    %v3448 = vunpack.c.h.b16 %v2796
    %v3449 = vunpack.c.l.b16 %v2797
    %v3450 = vunpack.c.h.b16 %v2797
    %v3451 = vunpack.c.l.b16 %v2798
    %v3452 = vunpack.c.h.b16 %v2798
    %v3453 = vunpack.c.l.b16 %v2799
    %v3454 = vunpack.c.h.b16 %v2799
    %v3455 = vunpack.c.l.b16 %v2800
    %v3456 = vunpack.c.h.b16 %v2800
    %v3457 = vunpack.c.l.b16 %v2801
    %v3458 = vunpack.c.h.b16 %v2801
    %v3459 = vunpack.c.l.b16 %v2802
    %v3460 = vunpack.c.h.b16 %v2802
    %v3461 = vunpack.c.l.b16 %v2803
    %v3462 = vunpack.c.h.b16 %v2803
    %v3463 = vunpack.c.l.b16 %v2804
    %v3464 = vunpack.c.h.b16 %v2804
    %v3465 = vunpack.c.l.b16 %v2805
    %v3466 = vunpack.c.h.b16 %v2805
    %v3467 = vunpack.c.l.b16 %v2806
    %v3468 = vunpack.c.h.b16 %v2806
    %v3469 = vunpack.c.l.b16 %v2807
    %v3470 = vunpack.c.h.b16 %v2807
    %v3471 = vunpack.c.l.b16 %v2808
    %v3472 = vunpack.c.h.b16 %v2808
    %v3473 = vunpack.c.l.b16 %v2809
    %v3474 = vunpack.c.h.b16 %v2809
    %v3475 = vunpack.c.l.b16 %v2810
    %v3476 = vunpack.c.h.b16 %v2810
    %v3477 = vunpack.c.l.b16 %v2811
    %v3478 = vunpack.c.h.b16 %v2811
    %v3479 = vunpack.c.l.b16 %v2812
    %v3480 = vunpack.c.h.b16 %v2812
    %v3481 = vunpack.c.l.b16 %v2813
    %v3482 = vunpack.c.h.b16 %v2813
    %v3483 = vunpack.c.l.b16 %v2814
    %v3484 = vunpack.c.h.b16 %v2814
    %v3485 = vunpack.c.l.b16 %v2815
    %v3486 = vunpack.c.h.b16 %v2815
    %v3487 = vunpack.c.l.b16 %v2816
    %v3488 = vunpack.c.h.b16 %v2816
    %v3489 = vunpack.c.l.b16 %v2817
    %v3490 = vunpack.c.h.b16 %v2817
    %v3491 = vunpack.c.l.b16 %v2818
    %v3492 = vunpack.c.h.b16 %v2818
    %v3493 = vunpack.c.l.b16 %v2819
    %v3494 = vunpack.c.h.b16 %v2819
    %v3495 = vunpack.c.l.b16 %v2820
    %v3496 = vunpack.c.h.b16 %v2820
    %v3497 = vunpack.c.l.b16 %v2821
    %v3498 = vunpack.c.h.b16 %v2821
    %v3499 = vunpack.c.l.b16 %v2822
    %v3500 = vunpack.c.h.b16 %v2822
    %v3501 = vunpack.c.l.b16 %v2823
    %v3502 = vunpack.c.h.b16 %v2823
    %v3503 = vunpack.c.l.b16 %v2824
    %v3504 = vunpack.c.h.b16 %v2824
    %v3505 = vunpack.c.l.b16 %v2825
    %v3506 = vunpack.c.h.b16 %v2825
    %v3507 = vunpack.c.l.b16 %v2826
    %v3508 = vunpack.c.h.b16 %v2826
    %v3509 = vunpack.c.l.b16 %v2827
    %v3510 = vunpack.c.h.b16 %v2827
    %v3511 = vunpack.c.l.b16 %v2828
    %v3512 = vunpack.c.h.b16 %v2828
    %v3513 = vunpack.c.l.b16 %v2829
    %v3514 = vunpack.c.h.b16 %v2829
    %v3515 = vunpack.c.l.b16 %v2830
    %v3516 = vunpack.c.h.b16 %v2830
    %v3517 = vunpack.c.l.b16 %v2831
    %v3518 = vunpack.c.h.b16 %v2831
    %v3519 = vunpack.c.l.b16 %v2832
    %v3520 = vunpack.c.h.b16 %v2832
    %v3521 = vunpack.c.l.b16 %v2833
    %v3522 = vunpack.c.h.b16 %v2833
    %v3523 = vunpack.c.l.b16 %v2834
    %v3524 = vunpack.c.h.b16 %v2834
    %v3525 = vunpack.c.l.b16 %v2835
    %v3526 = vunpack.c.h.b16 %v2835
    %v3527 = vunpack.c.l.b16 %v2836
    %v3528 = vunpack.c.h.b16 %v2836
    %v3529 = vunpack.c.l.b16 %v2837
    %v3530 = vunpack.c.h.b16 %v2837
    %v3531 = vunpack.c.l.b16 %v2838
    %v3532 = vunpack.c.h.b16 %v2838
    %v3533 = vunpack.c.l.b16 %v2839
    %v3534 = vunpack.c.h.b16 %v2839
    %v3535 = vunpack.c.l.b16 %v2840
    %v3536 = vunpack.c.h.b16 %v2840
    %v3537 = vunpack.c.l.b16 %v2841
    %v3538 = vunpack.c.h.b16 %v2841
    %v3539 = vunpack.c.l.b16 %v2842
    %v3540 = vunpack.c.h.b16 %v2842
    %v3541 = vunpack.c.l.b16 %v2843
    %v3542 = vunpack.c.h.b16 %v2843
    %v3543 = vunpack.c.l.b16 %v2844
    %v3544 = vunpack.c.h.b16 %v2844
    %v3545 = vunpack.c.l.b16 %v2845
    %v3546 = vunpack.c.h.b16 %v2845
    %v3547 = vunpack.c.l.b16 %v2846
    %v3548 = vunpack.c.h.b16 %v2846
    %v3549 = vunpack.c.l.b16 %v2847
    %v3550 = vunpack.c.h.b16 %v2847
    %v3551 = vunpack.c.l.b16 %v2848
    %v3552 = vunpack.c.h.b16 %v2848
    %v3553 = vunpack.c.l.b16 %v2849
    %v3554 = vunpack.c.h.b16 %v2849
    %v3555 = vunpack.c.l.b16 %v2850
    %v3556 = vunpack.c.h.b16 %v2850
    %v3557 = vunpack.c.l.b16 %v2851
    %v3558 = vunpack.c.h.b16 %v2851
    %v3559 = vunpack.c.l.b16 %v2852
    %v3560 = vunpack.c.h.b16 %v2852
    %v3561 = vunpack.c.l.b16 %v2853
    %v3562 = vunpack.c.h.b16 %v2853
    %v3563 = vunpack.c.l.b16 %v2854
    %v3564 = vunpack.c.h.b16 %v2854
    %v3565 = vunpack.c.l.b16 %v2855
    %v3566 = vunpack.c.h.b16 %v2855
    %v3567 = vunpack.c.l.b16 %v2856
    %v3568 = vunpack.c.h.b16 %v2856
    %v3569 = vunpack.c.l.b16 %v2857
    %v3570 = vunpack.c.h.b16 %v2857
    %v3571 = vunpack.c.l.b16 %v2858
    %v3572 = vunpack.c.h.b16 %v2858
    %v3573 = vunpack.c.l.b16 %v2859
    %v3574 = vunpack.c.h.b16 %v2859
    %v3575 = vunpack.c.l.b16 %v2860
    %v3576 = vunpack.c.h.b16 %v2860
    %v3577 = vunpack.c.l.b16 %v2861
    %v3578 = vunpack.c.h.b16 %v2861
    %v3579 = vunpack.c.l.b16 %v2862
    %v3580 = vunpack.c.h.b16 %v2862
    %v3581 = vunpack.c.l.b16 %v2863
    %v3582 = vunpack.c.h.b16 %v2863
    %v3583 = vunpack.c.l.b16 %v2864
    %v3584 = vunpack.c.h.b16 %v2864
    %v3585 = vunpack.c.l.b16 %v2865
    %v3586 = vunpack.c.h.b16 %v2865
    %v3587 = vunpack.c.l.b16 %v2866
    %v3588 = vunpack.c.h.b16 %v2866
    %v3589 = vunpack.c.l.b16 %v2867
    %v3590 = vunpack.c.h.b16 %v2867
    %v3591 = vunpack.c.l.b16 %v2868
    %v3592 = vunpack.c.h.b16 %v2868
    %v3593 = vunpack.c.l.b16 %v2869
    %v3594 = vunpack.c.h.b16 %v2869
    %v3595 = vunpack.c.l.b16 %v2870
    %v3596 = vunpack.c.h.b16 %v2870
    %v3597 = vunpack.c.l.b16 %v2871
    %v3598 = vunpack.c.h.b16 %v2871
    %v3599 = vunpack.c.l.b16 %v2872
    %v3600 = vunpack.c.h.b16 %v2872
    %v3601 = vunpack.c.l.b16 %v2873
    %v3602 = vunpack.c.h.b16 %v2873
    %v3603 = vunpack.c.l.b16 %v2874
    %v3604 = vunpack.c.h.b16 %v2874
    %v3605 = vunpack.c.l.b16 %v2875
    %v3606 = vunpack.c.h.b16 %v2875
    %v3607 = vunpack.c.l.b16 %v2876
    %v3608 = vunpack.c.h.b16 %v2876
    %v3609 = vunpack.c.l.b16 %v2877
    %v3610 = vunpack.c.h.b16 %v2877
    %v3611 = vunpack.c.l.b16 %v2878
    %v3612 = vunpack.c.h.b16 %v2878
    %v3613 = vunpack.c.l.b16 %v2879
    %v3614 = vunpack.c.h.b16 %v2879
    %v3615 = vunpack.c.l.b16 %v2880
    %v3616 = vunpack.c.h.b16 %v2880
    %v3617 = vunpack.c.l.b16 %v2881
    %v3618 = vunpack.c.h.b16 %v2881
    %v3619 = vunpack.c.l.b16 %v2882
    %v3620 = vunpack.c.h.b16 %v2882
    %v3621 = vunpack.c.l.b16 %v2883
    %v3622 = vunpack.c.h.b16 %v2883
    %v3623 = vunpack.c.l.b16 %v2884
    %v3624 = vunpack.c.h.b16 %v2884
    %v3625 = vunpack.c.l.b16 %v2885
    %v3626 = vunpack.c.h.b16 %v2885
    %v3627 = vunpack.c.l.b16 %v2886
    %v3628 = vunpack.c.h.b16 %v2886
    %v3629 = vunpack.c.l.b16 %v2887
    %v3630 = vunpack.c.h.b16 %v2887
    %v3631 = vunpack.c.l.b16 %v2888
    %v3632 = vunpack.c.h.b16 %v2888
    %v3633 = vunpack.c.l.b16 %v2889
    %v3634 = vunpack.c.h.b16 %v2889
    %v3635 = vunpack.c.l.b16 %v2890
    %v3636 = vunpack.c.h.b16 %v2890
    %v3637 = vunpack.c.l.b16 %v2891
    %v3638 = vunpack.c.h.b16 %v2891
    %v3639 = vunpack.c.l.b16 %v2892
    %v3640 = vunpack.c.h.b16 %v2892
    %v3641 = vunpack.c.l.b16 %v2893
    %v3642 = vunpack.c.h.b16 %v2893
    %v3643 = vunpack.c.l.b16 %v2894
    %v3644 = vunpack.c.h.b16 %v2894
    %v3645 = vunpack.c.l.b16 %v2895
    %v3646 = vunpack.c.h.b16 %v2895
    %v3647 = vunpack.c.l.b16 %v2896
    %v3648 = vunpack.c.h.b16 %v2896
    %v3649 = vunpack.c.l.b16 %v2897
    %v3650 = vunpack.c.h.b16 %v2897
    %v3651 = vunpack.c.l.b16 %v2898
    %v3652 = vunpack.c.h.b16 %v2898
    %v3653 = vunpack.c.l.b16 %v2899
    %v3654 = vunpack.c.h.b16 %v2899
    %v3655 = vunpack.c.l.b16 %v2900
    %v3656 = vunpack.c.h.b16 %v2900
    %v3657 = vunpack.c.l.b16 %v2901
    %v3658 = vunpack.c.h.b16 %v2901
    %v3659 = vunpack.c.l.b16 %v2902
    %v3660 = vunpack.c.h.b16 %v2902
    %v3661 = vunpack.c.l.b16 %v2903
    %v3662 = vunpack.c.h.b16 %v2903
    %v3663 = vunpack.c.l.b16 %v2904
    %v3664 = vunpack.c.h.b16 %v2904
    %v3665 = vunpack.c.l.b16 %v2905
    %v3666 = vunpack.c.h.b16 %v2905
    %v3667 = vunpack.c.l.b16 %v2906
    %v3668 = vunpack.c.h.b16 %v2906
    %v3669 = vunpack.c.l.b16 %v2907
    %v3670 = vunpack.c.h.b16 %v2907
    %v3671 = vunpack.c.l.b16 %v2908
    %v3672 = vunpack.c.h.b16 %v2908
    %v3673 = vunpack.c.l.b16 %v2909
    %v3674 = vunpack.c.h.b16 %v2909
    %v3675 = vunpack.c.l.b16 %v2910
    %v3676 = vunpack.c.h.b16 %v2910
    %v3677 = vunpack.c.l.b16 %v2911
    %v3678 = vunpack.c.h.b16 %v2911
    %v3679 = vunpack.c.l.b16 %v2912
    %v3680 = vunpack.c.h.b16 %v2912
    %v3681 = vunpack.c.l.b16 %v2913
    %v3682 = vunpack.c.h.b16 %v2913
    %v3683 = vunpack.c.l.b16 %v2914
    %v3684 = vunpack.c.h.b16 %v2914
    %v3685 = vunpack.c.l.b16 %v2915
    %v3686 = vunpack.c.h.b16 %v2915
    %v3687 = vunpack.c.l.b16 %v2916
    %v3688 = vunpack.c.h.b16 %v2916
    %v3689 = vunpack.c.l.b16 %v2917
    %v3690 = vunpack.c.h.b16 %v2917
    %v3691 = vunpack.c.l.b16 %v2918
    %v3692 = vunpack.c.h.b16 %v2918
    %v3693 = vunpack.c.l.b16 %v2919
    %v3694 = vunpack.c.h.b16 %v2919
    %v3695 = vunpack.c.l.b16 %v2920
    %v3696 = vunpack.c.h.b16 %v2920
    %v3697 = vunpack.c.l.b16 %v2921
    %v3698 = vunpack.c.h.b16 %v2921
    %v3699 = vunpack.c.l.b16 %v2922
    %v3700 = vunpack.c.h.b16 %v2922
    %v3701 = vpack.c.b16 %v3193, %v3189
    %v3702 = vpack.c.b16 %v3194, %v3190
    %v3703 = vpack.c.b16 %v3195, %v3191
    %v3704 = vpack.c.b16 %v3196, %v3192
    %v3705 = vpack.c.b16 %v3201, %v3197
    %v3706 = vpack.c.b16 %v3202, %v3198
    %v3707 = vpack.c.b16 %v3203, %v3199
    %v3708 = vpack.c.b16 %v3204, %v3200
    %v3709 = vpack.c.b16 %v3209, %v3205
    %v3710 = vpack.c.b16 %v3210, %v3206
    %v3711 = vpack.c.b16 %v3211, %v3207
    %v3712 = vpack.c.b16 %v3212, %v3208
    %v3713 = vpack.c.b16 %v3217, %v3213
    %v3714 = vpack.c.b16 %v3218, %v3214
    %v3715 = vpack.c.b16 %v3219, %v3215
    %v3716 = vpack.c.b16 %v3220, %v3216
    %v3717 = vpack.c.b16 %v3225, %v3221
    %v3718 = vpack.c.b16 %v3226, %v3222
    %v3719 = vpack.c.b16 %v3227, %v3223
    %v3720 = vpack.c.b16 %v3228, %v3224
    %v3721 = vpack.c.b16 %v3233, %v3229
    %v3722 = vpack.c.b16 %v3234, %v3230
    %v3723 = vpack.c.b16 %v3235, %v3231
    %v3724 = vpack.c.b16 %v3236, %v3232
    %v3725 = vpack.c.b16 %v3241, %v3237
    %v3726 = vpack.c.b16 %v3242, %v3238
    %v3727 = vpack.c.b16 %v3243, %v3239
    %v3728 = vpack.c.b16 %v3244, %v3240
    %v3729 = vpack.c.b16 %v3249, %v3245
    %v3730 = vpack.c.b16 %v3250, %v3246
    %v3731 = vpack.c.b16 %v3251, %v3247
    %v3732 = vpack.c.b16 %v3252, %v3248
    %v3733 = vpack.c.b16 %v3257, %v3253
    %v3734 = vpack.c.b16 %v3258, %v3254
    %v3735 = vpack.c.b16 %v3259, %v3255
    %v3736 = vpack.c.b16 %v3260, %v3256
    %v3737 = vpack.c.b16 %v3265, %v3261
    %v3738 = vpack.c.b16 %v3266, %v3262
    %v3739 = vpack.c.b16 %v3267, %v3263
    %v3740 = vpack.c.b16 %v3268, %v3264
    %v3741 = vpack.c.b16 %v3273, %v3269
    %v3742 = vpack.c.b16 %v3274, %v3270
    %v3743 = vpack.c.b16 %v3275, %v3271
    %v3744 = vpack.c.b16 %v3276, %v3272
    %v3745 = vpack.c.b16 %v3281, %v3277
    %v3746 = vpack.c.b16 %v3282, %v3278
    %v3747 = vpack.c.b16 %v3283, %v3279
    %v3748 = vpack.c.b16 %v3284, %v3280
    %v3749 = vpack.c.b16 %v3289, %v3285
    %v3750 = vpack.c.b16 %v3290, %v3286
    %v3751 = vpack.c.b16 %v3291, %v3287
    %v3752 = vpack.c.b16 %v3292, %v3288
    %v3753 = vpack.c.b16 %v3297, %v3293
    %v3754 = vpack.c.b16 %v3298, %v3294
    %v3755 = vpack.c.b16 %v3299, %v3295
    %v3756 = vpack.c.b16 %v3300, %v3296
    %v3757 = vpack.c.b16 %v3305, %v3301
    %v3758 = vpack.c.b16 %v3306, %v3302
    %v3759 = vpack.c.b16 %v3307, %v3303
    %v3760 = vpack.c.b16 %v3308, %v3304
    %v3761 = vpack.c.b16 %v3313, %v3309
    %v3762 = vpack.c.b16 %v3314, %v3310
    %v3763 = vpack.c.b16 %v3315, %v3311
    %v3764 = vpack.c.b16 %v3316, %v3312
    %v3765 = vpack.c.b16 %v3321, %v3317
    %v3766 = vpack.c.b16 %v3322, %v3318
    %v3767 = vpack.c.b16 %v3323, %v3319
    %v3768 = vpack.c.b16 %v3324, %v3320
    %v3769 = vpack.c.b16 %v3329, %v3325
    %v3770 = vpack.c.b16 %v3330, %v3326
    %v3771 = vpack.c.b16 %v3331, %v3327
    %v3772 = vpack.c.b16 %v3332, %v3328
    %v3773 = vpack.c.b16 %v3337, %v3333
    %v3774 = vpack.c.b16 %v3338, %v3334
    %v3775 = vpack.c.b16 %v3339, %v3335
    %v3776 = vpack.c.b16 %v3340, %v3336
    %v3777 = vpack.c.b16 %v3345, %v3341
    %v3778 = vpack.c.b16 %v3346, %v3342
    %v3779 = vpack.c.b16 %v3347, %v3343
    %v3780 = vpack.c.b16 %v3348, %v3344
    %v3781 = vpack.c.b16 %v3353, %v3349
    %v3782 = vpack.c.b16 %v3354, %v3350
    %v3783 = vpack.c.b16 %v3355, %v3351
    %v3784 = vpack.c.b16 %v3356, %v3352
    %v3785 = vpack.c.b16 %v3361, %v3357
    %v3786 = vpack.c.b16 %v3362, %v3358
    %v3787 = vpack.c.b16 %v3363, %v3359
    %v3788 = vpack.c.b16 %v3364, %v3360
    %v3789 = vpack.c.b16 %v3369, %v3365
    %v3790 = vpack.c.b16 %v3370, %v3366
    %v3791 = vpack.c.b16 %v3371, %v3367
    %v3792 = vpack.c.b16 %v3372, %v3368
    %v3793 = vpack.c.b16 %v3377, %v3373
    %v3794 = vpack.c.b16 %v3378, %v3374
    %v3795 = vpack.c.b16 %v3379, %v3375
    %v3796 = vpack.c.b16 %v3380, %v3376
    %v3797 = vpack.c.b16 %v3385, %v3381
    %v3798 = vpack.c.b16 %v3386, %v3382
    %v3799 = vpack.c.b16 %v3387, %v3383
    %v3800 = vpack.c.b16 %v3388, %v3384
    %v3801 = vpack.c.b16 %v3393, %v3389
    %v3802 = vpack.c.b16 %v3394, %v3390
    %v3803 = vpack.c.b16 %v3395, %v3391
    %v3804 = vpack.c.b16 %v3396, %v3392
    %v3805 = vpack.c.b16 %v3401, %v3397
    %v3806 = vpack.c.b16 %v3402, %v3398
    %v3807 = vpack.c.b16 %v3403, %v3399
    %v3808 = vpack.c.b16 %v3404, %v3400
    %v3809 = vpack.c.b16 %v3409, %v3405
    %v3810 = vpack.c.b16 %v3410, %v3406
    %v3811 = vpack.c.b16 %v3411, %v3407
    %v3812 = vpack.c.b16 %v3412, %v3408
    %v3813 = vpack.c.b16 %v3417, %v3413
    %v3814 = vpack.c.b16 %v3418, %v3414
    %v3815 = vpack.c.b16 %v3419, %v3415
    %v3816 = vpack.c.b16 %v3420, %v3416
    %v3817 = vpack.c.b16 %v3425, %v3421
    %v3818 = vpack.c.b16 %v3426, %v3422
    %v3819 = vpack.c.b16 %v3427, %v3423
    %v3820 = vpack.c.b16 %v3428, %v3424
    %v3821 = vpack.c.b16 %v3433, %v3429
    %v3822 = vpack.c.b16 %v3434, %v3430
    %v3823 = vpack.c.b16 %v3435, %v3431
    %v3824 = vpack.c.b16 %v3436, %v3432
    %v3825 = vpack.c.b16 %v3441, %v3437
    %v3826 = vpack.c.b16 %v3442, %v3438
    %v3827 = vpack.c.b16 %v3443, %v3439
    %v3828 = vpack.c.b16 %v3444, %v3440
    %v3829 = vpack.c.b16 %v3449, %v3445
    %v3830 = vpack.c.b16 %v3450, %v3446
    %v3831 = vpack.c.b16 %v3451, %v3447
    %v3832 = vpack.c.b16 %v3452, %v3448
    %v3833 = vpack.c.b16 %v3457, %v3453
    %v3834 = vpack.c.b16 %v3458, %v3454
    %v3835 = vpack.c.b16 %v3459, %v3455
    %v3836 = vpack.c.b16 %v3460, %v3456
    %v3837 = vpack.c.b16 %v3465, %v3461
    %v3838 = vpack.c.b16 %v3466, %v3462
    %v3839 = vpack.c.b16 %v3467, %v3463
    %v3840 = vpack.c.b16 %v3468, %v3464
    %v3841 = vpack.c.b16 %v3473, %v3469
    %v3842 = vpack.c.b16 %v3474, %v3470
    %v3843 = vpack.c.b16 %v3475, %v3471
    %v3844 = vpack.c.b16 %v3476, %v3472
    %v3845 = vpack.c.b16 %v3481, %v3477
    %v3846 = vpack.c.b16 %v3482, %v3478
    %v3847 = vpack.c.b16 %v3483, %v3479
    %v3848 = vpack.c.b16 %v3484, %v3480
    %v3849 = vpack.c.b16 %v3489, %v3485
    %v3850 = vpack.c.b16 %v3490, %v3486
    %v3851 = vpack.c.b16 %v3491, %v3487
    %v3852 = vpack.c.b16 %v3492, %v3488
    %v3853 = vpack.c.b16 %v3497, %v3493
    %v3854 = vpack.c.b16 %v3498, %v3494
    %v3855 = vpack.c.b16 %v3499, %v3495
    %v3856 = vpack.c.b16 %v3500, %v3496
    %v3857 = vpack.c.b16 %v3505, %v3501
    %v3858 = vpack.c.b16 %v3506, %v3502
    %v3859 = vpack.c.b16 %v3507, %v3503
    %v3860 = vpack.c.b16 %v3508, %v3504
    %v3861 = vpack.c.b16 %v3513, %v3509
    %v3862 = vpack.c.b16 %v3514, %v3510
    %v3863 = vpack.c.b16 %v3515, %v3511
    %v3864 = vpack.c.b16 %v3516, %v3512
    %v3865 = vpack.c.b16 %v3521, %v3517
    %v3866 = vpack.c.b16 %v3522, %v3518
    %v3867 = vpack.c.b16 %v3523, %v3519
    %v3868 = vpack.c.b16 %v3524, %v3520
    %v3869 = vpack.c.b16 %v3529, %v3525
    %v3870 = vpack.c.b16 %v3530, %v3526
    %v3871 = vpack.c.b16 %v3531, %v3527
    %v3872 = vpack.c.b16 %v3532, %v3528
    %v3873 = vpack.c.b16 %v3537, %v3533
    %v3874 = vpack.c.b16 %v3538, %v3534
    %v3875 = vpack.c.b16 %v3539, %v3535
    %v3876 = vpack.c.b16 %v3540, %v3536
    %v3877 = vpack.c.b16 %v3545, %v3541
    %v3878 = vpack.c.b16 %v3546, %v3542
    %v3879 = vpack.c.b16 %v3547, %v3543
    %v3880 = vpack.c.b16 %v3548, %v3544
    %v3881 = vpack.c.b16 %v3553, %v3549
    %v3882 = vpack.c.b16 %v3554, %v3550
    %v3883 = vpack.c.b16 %v3555, %v3551
    %v3884 = vpack.c.b16 %v3556, %v3552
    %v3885 = vpack.c.b16 %v3561, %v3557
    %v3886 = vpack.c.b16 %v3562, %v3558
    %v3887 = vpack.c.b16 %v3563, %v3559
    %v3888 = vpack.c.b16 %v3564, %v3560
    %v3889 = vpack.c.b16 %v3569, %v3565
    %v3890 = vpack.c.b16 %v3570, %v3566
    %v3891 = vpack.c.b16 %v3571, %v3567
    %v3892 = vpack.c.b16 %v3572, %v3568
    %v3893 = vpack.c.b16 %v3577, %v3573
    %v3894 = vpack.c.b16 %v3578, %v3574
    %v3895 = vpack.c.b16 %v3579, %v3575
    %v3896 = vpack.c.b16 %v3580, %v3576
    %v3897 = vpack.c.b16 %v3585, %v3581
    %v3898 = vpack.c.b16 %v3586, %v3582
    %v3899 = vpack.c.b16 %v3587, %v3583
    %v3900 = vpack.c.b16 %v3588, %v3584
    %v3901 = vpack.c.b16 %v3593, %v3589
    %v3902 = vpack.c.b16 %v3594, %v3590
    %v3903 = vpack.c.b16 %v3595, %v3591
    %v3904 = vpack.c.b16 %v3596, %v3592
    %v3905 = vpack.c.b16 %v3601, %v3597
    %v3906 = vpack.c.b16 %v3602, %v3598
    %v3907 = vpack.c.b16 %v3603, %v3599
    %v3908 = vpack.c.b16 %v3604, %v3600
    %v3909 = vpack.c.b16 %v3609, %v3605
    %v3910 = vpack.c.b16 %v3610, %v3606
    %v3911 = vpack.c.b16 %v3611, %v3607
    %v3912 = vpack.c.b16 %v3612, %v3608
    %v3913 = vpack.c.b16 %v3617, %v3613
    %v3914 = vpack.c.b16 %v3618, %v3614
    %v3915 = vpack.c.b16 %v3619, %v3615
    %v3916 = vpack.c.b16 %v3620, %v3616
    %v3917 = vpack.c.b16 %v3625, %v3621
    %v3918 = vpack.c.b16 %v3626, %v3622
    %v3919 = vpack.c.b16 %v3627, %v3623
    %v3920 = vpack.c.b16 %v3628, %v3624
    %v3921 = vpack.c.b16 %v3633, %v3629
    %v3922 = vpack.c.b16 %v3634, %v3630
    %v3923 = vpack.c.b16 %v3635, %v3631
    %v3924 = vpack.c.b16 %v3636, %v3632
    %v3925 = vpack.c.b16 %v3641, %v3637
    %v3926 = vpack.c.b16 %v3642, %v3638
    %v3927 = vpack.c.b16 %v3643, %v3639
    %v3928 = vpack.c.b16 %v3644, %v3640
    %v3929 = vpack.c.b16 %v3649, %v3645
    %v3930 = vpack.c.b16 %v3650, %v3646
    %v3931 = vpack.c.b16 %v3651, %v3647
    %v3932 = vpack.c.b16 %v3652, %v3648
    %v3933 = vpack.c.b16 %v3657, %v3653
    %v3934 = vpack.c.b16 %v3658, %v3654
    %v3935 = vpack.c.b16 %v3659, %v3655
    %v3936 = vpack.c.b16 %v3660, %v3656
    %v3937 = vpack.c.b16 %v3665, %v3661
    %v3938 = vpack.c.b16 %v3666, %v3662
    %v3939 = vpack.c.b16 %v3667, %v3663
    %v3940 = vpack.c.b16 %v3668, %v3664
    %v3941 = vpack.c.b16 %v3673, %v3669
    %v3942 = vpack.c.b16 %v3674, %v3670
    %v3943 = vpack.c.b16 %v3675, %v3671
    %v3944 = vpack.c.b16 %v3676, %v3672
    %v3945 = vpack.c.b16 %v3681, %v3677
    %v3946 = vpack.c.b16 %v3682, %v3678
    %v3947 = vpack.c.b16 %v3683, %v3679
    %v3948 = vpack.c.b16 %v3684, %v3680
    %v3949 = vpack.c.b16 %v3689, %v3685
    %v3950 = vpack.c.b16 %v3690, %v3686
    %v3951 = vpack.c.b16 %v3691, %v3687
    %v3952 = vpack.c.b16 %v3692, %v3688
    %v3953 = vpack.c.b16 %v3697, %v3693
    %v3954 = vpack.c.b16 %v3698, %v3694
    %v3955 = vpack.c.b16 %v3699, %v3695
    %v3956 = vpack.c.b16 %v3700, %v3696
    %4213 = vmatpush.bf16.msra.mxu0 %v3729
    %4214 = vmatpush.bf16.msra.mxu0 %v3725
    %4215 = vmatpush.bf16.msra.mxu0 %v3721
    %4216 = vmatpush.bf16.msra.mxu0 %v3717
    %4217 = vmatpush.bf16.msra.mxu0 %v3713
    %4218 = vmatpush.bf16.msra.mxu0 %v3709
    %4219 = vmatpush.bf16.msra.mxu0 %v3705
    %4220 = vmatpush.bf16.msra.mxu0 %v3701
    %4221 = vmatmul.bf16.gmra.mxu0 %v2659
    %v4222 = vpop.f32.mrf.mxu0
    %v4223 = vadd.f32 %v2925, %v4222
    %v4224 = vpop.f32.mrf.mxu0
    %4225 = vdwg.mxu0
    %4226 = vmatpush.bf16.msra.mxu0 %v3761
    %4227 = vmatpush.bf16.msra.mxu0 %v3757
    %4228 = vmatpush.bf16.msra.mxu0 %v3753
    %4229 = vmatpush.bf16.msra.mxu0 %v3749
    %4230 = vmatpush.bf16.msra.mxu0 %v3745
    %4231 = vmatpush.bf16.msra.mxu0 %v3741
    %4232 = vmatpush.bf16.msra.mxu0 %v3737
    %4233 = vmatpush.bf16.msra.mxu0 %v3733
    %4234 = vmatmul.bf16.gmra.mxu0 %v2660
    %v4235 = vpop.f32.mrf.mxu0
    %v4236 = vadd.f32 %v4223, %v4235
    %v4237 = vpop.f32.mrf.mxu0
    %4238 = vdwg.mxu0
    %4239 = vmatpush.bf16.msra.mxu0 %v3793
    %4240 = vmatpush.bf16.msra.mxu0 %v3789
    %4241 = vmatpush.bf16.msra.mxu0 %v3785
    %4242 = vmatpush.bf16.msra.mxu0 %v3781
    %4243 = vmatpush.bf16.msra.mxu0 %v3777
    %4244 = vmatpush.bf16.msra.mxu0 %v3773
    %4245 = vmatpush.bf16.msra.mxu0 %v3769
    %4246 = vmatpush.bf16.msra.mxu0 %v3765
    %4247 = vmatmul.bf16.gmra.mxu0 %v2661
    %v4248 = vpop.f32.mrf.mxu0
    %v4249 = vadd.f32 %v4236, %v4248
    %v4250 = vpop.f32.mrf.mxu0
    %4251 = vdwg.mxu0
    %4252 = vmatpush.bf16.msra.mxu0 %v3825
    %4253 = vmatpush.bf16.msra.mxu0 %v3821
    %4254 = vmatpush.bf16.msra.mxu0 %v3817
    %4255 = vmatpush.bf16.msra.mxu0 %v3813
    %4256 = vmatpush.bf16.msra.mxu0 %v3809
    %4257 = vmatpush.bf16.msra.mxu0 %v3805
    %4258 = vmatpush.bf16.msra.mxu0 %v3801
    %4259 = vmatpush.bf16.msra.mxu0 %v3797
    %4260 = vmatmul.bf16.gmra.mxu0 %v2662
    %v4261 = vpop.f32.mrf.mxu0
    %v4262 = vadd.f32 %v4249, %v4261
    %v4263 = vpop.f32.mrf.mxu0
    %4264 = vdwg.mxu0
    %4265 = vmatpush.bf16.msra.mxu0 %v3857
    %4266 = vmatpush.bf16.msra.mxu0 %v3853
    %4267 = vmatpush.bf16.msra.mxu0 %v3849
    %4268 = vmatpush.bf16.msra.mxu0 %v3845
    %4269 = vmatpush.bf16.msra.mxu0 %v3841
    %4270 = vmatpush.bf16.msra.mxu0 %v3837
    %4271 = vmatpush.bf16.msra.mxu0 %v3833
    %4272 = vmatpush.bf16.msra.mxu0 %v3829
    %4273 = vmatmul.bf16.gmra.mxu0 %v2663
    %v4274 = vpop.f32.mrf.mxu0
    %v4275 = vadd.f32 %v4262, %v4274
    %v4276 = vpop.f32.mrf.mxu0
    %4277 = vdwg.mxu0
    %4278 = vmatpush.bf16.msra.mxu0 %v3889
    %4279 = vmatpush.bf16.msra.mxu0 %v3885
    %4280 = vmatpush.bf16.msra.mxu0 %v3881
    %4281 = vmatpush.bf16.msra.mxu0 %v3877
    %4282 = vmatpush.bf16.msra.mxu0 %v3873
    %4283 = vmatpush.bf16.msra.mxu0 %v3869
    %4284 = vmatpush.bf16.msra.mxu0 %v3865
    %4285 = vmatpush.bf16.msra.mxu0 %v3861
    %4286 = vmatmul.bf16.gmra.mxu0 %v2664
    %v4287 = vpop.f32.mrf.mxu0
    %v4288 = vadd.f32 %v4275, %v4287
    %v4289 = vpop.f32.mrf.mxu0
    %4290 = vdwg.mxu0
    %4291 = vmatpush.bf16.msra.mxu0 %v3921
    %4292 = vmatpush.bf16.msra.mxu0 %v3917
    %4293 = vmatpush.bf16.msra.mxu0 %v3913
    %4294 = vmatpush.bf16.msra.mxu0 %v3909
    %4295 = vmatpush.bf16.msra.mxu0 %v3905
    %4296 = vmatpush.bf16.msra.mxu0 %v3901
    %4297 = vmatpush.bf16.msra.mxu0 %v3897
    %4298 = vmatpush.bf16.msra.mxu0 %v3893
    %4299 = vmatmul.bf16.gmra.mxu0 %v2665
    %v4300 = vpop.f32.mrf.mxu0
    %v4301 = vadd.f32 %v4288, %v4300
    %v4302 = vpop.f32.mrf.mxu0
    %4303 = vdwg.mxu0
    %4304 = vmatpush.bf16.msra.mxu0 %v3953
    %4305 = vmatpush.bf16.msra.mxu0 %v3949
    %4306 = vmatpush.bf16.msra.mxu0 %v3945
    %4307 = vmatpush.bf16.msra.mxu0 %v3941
    %4308 = vmatpush.bf16.msra.mxu0 %v3937
    %4309 = vmatpush.bf16.msra.mxu0 %v3933
    %4310 = vmatpush.bf16.msra.mxu0 %v3929
    %4311 = vmatpush.bf16.msra.mxu0 %v3925
    %4312 = vmatmul.bf16.gmra.mxu0 %v2666
    %v4313 = vpop.f32.mrf.mxu0
    %v4314 = vadd.f32 %v4301, %v4313
    %v4315 = vpop.f32.mrf.mxu0
    %4316 = vdwg.mxu0
    %4317 = vmatpush.bf16.msra.mxu0 %v3730
    %4318 = vmatpush.bf16.msra.mxu0 %v3726
    %4319 = vmatpush.bf16.msra.mxu0 %v3722
    %4320 = vmatpush.bf16.msra.mxu0 %v3718
    %4321 = vmatpush.bf16.msra.mxu0 %v3714
    %4322 = vmatpush.bf16.msra.mxu0 %v3710
    %4323 = vmatpush.bf16.msra.mxu0 %v3706
    %4324 = vmatpush.bf16.msra.mxu0 %v3702
    %4325 = vmatmul.bf16.gmra.mxu0 %v2659
    %v4326 = vpop.f32.mrf.mxu0
    %v4327 = vadd.f32 %v2926, %v4326
    %v4328 = vpop.f32.mrf.mxu0
    %4329 = vdwg.mxu0
    %4330 = vmatpush.bf16.msra.mxu0 %v3762
    %4331 = vmatpush.bf16.msra.mxu0 %v3758
    %4332 = vmatpush.bf16.msra.mxu0 %v3754
    %4333 = vmatpush.bf16.msra.mxu0 %v3750
    %4334 = vmatpush.bf16.msra.mxu0 %v3746
    %4335 = vmatpush.bf16.msra.mxu0 %v3742
    %4336 = vmatpush.bf16.msra.mxu0 %v3738
    %4337 = vmatpush.bf16.msra.mxu0 %v3734
    %4338 = vmatmul.bf16.gmra.mxu0 %v2660
    %v4339 = vpop.f32.mrf.mxu0
    %v4340 = vadd.f32 %v4327, %v4339
    %v4341 = vpop.f32.mrf.mxu0
    %4342 = vdwg.mxu0
    %4343 = vmatpush.bf16.msra.mxu0 %v3794
    %4344 = vmatpush.bf16.msra.mxu0 %v3790
    %4345 = vmatpush.bf16.msra.mxu0 %v3786
    %4346 = vmatpush.bf16.msra.mxu0 %v3782
    %4347 = vmatpush.bf16.msra.mxu0 %v3778
    %4348 = vmatpush.bf16.msra.mxu0 %v3774
    %4349 = vmatpush.bf16.msra.mxu0 %v3770
    %4350 = vmatpush.bf16.msra.mxu0 %v3766
    %4351 = vmatmul.bf16.gmra.mxu0 %v2661
    %v4352 = vpop.f32.mrf.mxu0
    %v4353 = vadd.f32 %v4340, %v4352
    %v4354 = vpop.f32.mrf.mxu0
    %4355 = vdwg.mxu0
    %4356 = vmatpush.bf16.msra.mxu0 %v3826
    %4357 = vmatpush.bf16.msra.mxu0 %v3822
    %4358 = vmatpush.bf16.msra.mxu0 %v3818
    %4359 = vmatpush.bf16.msra.mxu0 %v3814
    %4360 = vmatpush.bf16.msra.mxu0 %v3810
    %4361 = vmatpush.bf16.msra.mxu0 %v3806
    %4362 = vmatpush.bf16.msra.mxu0 %v3802
    %4363 = vmatpush.bf16.msra.mxu0 %v3798
    %4364 = vmatmul.bf16.gmra.mxu0 %v2662
    %v4365 = vpop.f32.mrf.mxu0
    %v4366 = vadd.f32 %v4353, %v4365
    %v4367 = vpop.f32.mrf.mxu0
    %4368 = vdwg.mxu0
    %4369 = vmatpush.bf16.msra.mxu0 %v3858
    %4370 = vmatpush.bf16.msra.mxu0 %v3854
    %4371 = vmatpush.bf16.msra.mxu0 %v3850
    %4372 = vmatpush.bf16.msra.mxu0 %v3846
    %4373 = vmatpush.bf16.msra.mxu0 %v3842
    %4374 = vmatpush.bf16.msra.mxu0 %v3838
    %4375 = vmatpush.bf16.msra.mxu0 %v3834
    %4376 = vmatpush.bf16.msra.mxu0 %v3830
    %4377 = vmatmul.bf16.gmra.mxu0 %v2663
    %v4378 = vpop.f32.mrf.mxu0
    %v4379 = vadd.f32 %v4366, %v4378
    %v4380 = vpop.f32.mrf.mxu0
    %4381 = vdwg.mxu0
    %4382 = vmatpush.bf16.msra.mxu0 %v3890
    %4383 = vmatpush.bf16.msra.mxu0 %v3886
    %4384 = vmatpush.bf16.msra.mxu0 %v3882
    %4385 = vmatpush.bf16.msra.mxu0 %v3878
    %4386 = vmatpush.bf16.msra.mxu0 %v3874
    %4387 = vmatpush.bf16.msra.mxu0 %v3870
    %4388 = vmatpush.bf16.msra.mxu0 %v3866
    %4389 = vmatpush.bf16.msra.mxu0 %v3862
    %4390 = vmatmul.bf16.gmra.mxu0 %v2664
    %v4391 = vpop.f32.mrf.mxu0
    %v4392 = vadd.f32 %v4379, %v4391
    %v4393 = vpop.f32.mrf.mxu0
    %4394 = vdwg.mxu0
    %4395 = vmatpush.bf16.msra.mxu0 %v3922
    %4396 = vmatpush.bf16.msra.mxu0 %v3918
    %4397 = vmatpush.bf16.msra.mxu0 %v3914
    %4398 = vmatpush.bf16.msra.mxu0 %v3910
    %4399 = vmatpush.bf16.msra.mxu0 %v3906
    %4400 = vmatpush.bf16.msra.mxu0 %v3902
    %4401 = vmatpush.bf16.msra.mxu0 %v3898
    %4402 = vmatpush.bf16.msra.mxu0 %v3894
    %4403 = vmatmul.bf16.gmra.mxu0 %v2665
    %v4404 = vpop.f32.mrf.mxu0
    %v4405 = vadd.f32 %v4392, %v4404
    %v4406 = vpop.f32.mrf.mxu0
    %4407 = vdwg.mxu0
    %4408 = vmatpush.bf16.msra.mxu0 %v3954
    %4409 = vmatpush.bf16.msra.mxu0 %v3950
    %4410 = vmatpush.bf16.msra.mxu0 %v3946
    %4411 = vmatpush.bf16.msra.mxu0 %v3942
    %4412 = vmatpush.bf16.msra.mxu0 %v3938
    %4413 = vmatpush.bf16.msra.mxu0 %v3934
    %4414 = vmatpush.bf16.msra.mxu0 %v3930
    %4415 = vmatpush.bf16.msra.mxu0 %v3926
    %4416 = vmatmul.bf16.gmra.mxu0 %v2666
    %v4417 = vpop.f32.mrf.mxu0
    %v4418 = vadd.f32 %v4405, %v4417
    %v4419 = vpop.f32.mrf.mxu0
    %4420 = vdwg.mxu0
    %4421 = vmatpush.bf16.msra.mxu0 %v3731
    %4422 = vmatpush.bf16.msra.mxu0 %v3727
    %4423 = vmatpush.bf16.msra.mxu0 %v3723
    %4424 = vmatpush.bf16.msra.mxu0 %v3719
    %4425 = vmatpush.bf16.msra.mxu0 %v3715
    %4426 = vmatpush.bf16.msra.mxu0 %v3711
    %4427 = vmatpush.bf16.msra.mxu0 %v3707
    %4428 = vmatpush.bf16.msra.mxu0 %v3703
    %4429 = vmatmul.bf16.gmra.mxu0 %v2659
    %v4430 = vpop.f32.mrf.mxu0
    %v4431 = vadd.f32 %v2927, %v4430
    %v4432 = vpop.f32.mrf.mxu0
    %4433 = vdwg.mxu0
    %4434 = vmatpush.bf16.msra.mxu0 %v3763
    %4435 = vmatpush.bf16.msra.mxu0 %v3759
    %4436 = vmatpush.bf16.msra.mxu0 %v3755
    %4437 = vmatpush.bf16.msra.mxu0 %v3751
    %4438 = vmatpush.bf16.msra.mxu0 %v3747
    %4439 = vmatpush.bf16.msra.mxu0 %v3743
    %4440 = vmatpush.bf16.msra.mxu0 %v3739
    %4441 = vmatpush.bf16.msra.mxu0 %v3735
    %4442 = vmatmul.bf16.gmra.mxu0 %v2660
    %v4443 = vpop.f32.mrf.mxu0
    %v4444 = vadd.f32 %v4431, %v4443
    %v4445 = vpop.f32.mrf.mxu0
    %4446 = vdwg.mxu0
    %4447 = vmatpush.bf16.msra.mxu0 %v3795
    %4448 = vmatpush.bf16.msra.mxu0 %v3791
    %4449 = vmatpush.bf16.msra.mxu0 %v3787
    %4450 = vmatpush.bf16.msra.mxu0 %v3783
    %4451 = vmatpush.bf16.msra.mxu0 %v3779
    %4452 = vmatpush.bf16.msra.mxu0 %v3775
    %4453 = vmatpush.bf16.msra.mxu0 %v3771
    %4454 = vmatpush.bf16.msra.mxu0 %v3767
    %4455 = vmatmul.bf16.gmra.mxu0 %v2661
    %v4456 = vpop.f32.mrf.mxu0
    %v4457 = vadd.f32 %v4444, %v4456
    %v4458 = vpop.f32.mrf.mxu0
    %4459 = vdwg.mxu0
    %4460 = vmatpush.bf16.msra.mxu0 %v3827
    %4461 = vmatpush.bf16.msra.mxu0 %v3823
    %4462 = vmatpush.bf16.msra.mxu0 %v3819
    %4463 = vmatpush.bf16.msra.mxu0 %v3815
    %4464 = vmatpush.bf16.msra.mxu0 %v3811
    %4465 = vmatpush.bf16.msra.mxu0 %v3807
    %4466 = vmatpush.bf16.msra.mxu0 %v3803
    %4467 = vmatpush.bf16.msra.mxu0 %v3799
    %4468 = vmatmul.bf16.gmra.mxu0 %v2662
    %v4469 = vpop.f32.mrf.mxu0
    %v4470 = vadd.f32 %v4457, %v4469
    %v4471 = vpop.f32.mrf.mxu0
    %4472 = vdwg.mxu0
    %4473 = vmatpush.bf16.msra.mxu0 %v3859
    %4474 = vmatpush.bf16.msra.mxu0 %v3855
    %4475 = vmatpush.bf16.msra.mxu0 %v3851
    %4476 = vmatpush.bf16.msra.mxu0 %v3847
    %4477 = vmatpush.bf16.msra.mxu0 %v3843
    %4478 = vmatpush.bf16.msra.mxu0 %v3839
    %4479 = vmatpush.bf16.msra.mxu0 %v3835
    %4480 = vmatpush.bf16.msra.mxu0 %v3831
    %4481 = vmatmul.bf16.gmra.mxu0 %v2663
    %v4482 = vpop.f32.mrf.mxu0
    %v4483 = vadd.f32 %v4470, %v4482
    %v4484 = vpop.f32.mrf.mxu0
    %4485 = vdwg.mxu0
    %4486 = vmatpush.bf16.msra.mxu0 %v3891
    %4487 = vmatpush.bf16.msra.mxu0 %v3887
    %4488 = vmatpush.bf16.msra.mxu0 %v3883
    %4489 = vmatpush.bf16.msra.mxu0 %v3879
    %4490 = vmatpush.bf16.msra.mxu0 %v3875
    %4491 = vmatpush.bf16.msra.mxu0 %v3871
    %4492 = vmatpush.bf16.msra.mxu0 %v3867
    %4493 = vmatpush.bf16.msra.mxu0 %v3863
    %4494 = vmatmul.bf16.gmra.mxu0 %v2664
    %v4495 = vpop.f32.mrf.mxu0
    %v4496 = vadd.f32 %v4483, %v4495
    %v4497 = vpop.f32.mrf.mxu0
    %4498 = vdwg.mxu0
    %4499 = vmatpush.bf16.msra.mxu0 %v3923
    %4500 = vmatpush.bf16.msra.mxu0 %v3919
    %4501 = vmatpush.bf16.msra.mxu0 %v3915
    %4502 = vmatpush.bf16.msra.mxu0 %v3911
    %4503 = vmatpush.bf16.msra.mxu0 %v3907
    %4504 = vmatpush.bf16.msra.mxu0 %v3903
    %4505 = vmatpush.bf16.msra.mxu0 %v3899
    %4506 = vmatpush.bf16.msra.mxu0 %v3895
    %4507 = vmatmul.bf16.gmra.mxu0 %v2665
    %v4508 = vpop.f32.mrf.mxu0
    %v4509 = vadd.f32 %v4496, %v4508
    %v4510 = vpop.f32.mrf.mxu0
    %4511 = vdwg.mxu0
    %4512 = vmatpush.bf16.msra.mxu0 %v3955
    %4513 = vmatpush.bf16.msra.mxu0 %v3951
    %4514 = vmatpush.bf16.msra.mxu0 %v3947
    %4515 = vmatpush.bf16.msra.mxu0 %v3943
    %4516 = vmatpush.bf16.msra.mxu0 %v3939
    %4517 = vmatpush.bf16.msra.mxu0 %v3935
    %4518 = vmatpush.bf16.msra.mxu0 %v3931
    %4519 = vmatpush.bf16.msra.mxu0 %v3927
    %4520 = vmatmul.bf16.gmra.mxu0 %v2666
    %v4521 = vpop.f32.mrf.mxu0
    %v4522 = vadd.f32 %v4509, %v4521
    %v4523 = vpop.f32.mrf.mxu0
    %4524 = vdwg.mxu0
    %4525 = vmatpush.bf16.msra.mxu0 %v3732
    %4526 = vmatpush.bf16.msra.mxu0 %v3728
    %4527 = vmatpush.bf16.msra.mxu0 %v3724
    %4528 = vmatpush.bf16.msra.mxu0 %v3720
    %4529 = vmatpush.bf16.msra.mxu0 %v3716
    %4530 = vmatpush.bf16.msra.mxu0 %v3712
    %4531 = vmatpush.bf16.msra.mxu0 %v3708
    %4532 = vmatpush.bf16.msra.mxu0 %v3704
    %4533 = vmatmul.bf16.gmra.mxu0 %v2659
    %v4534 = vpop.f32.mrf.mxu0
    %v4535 = vadd.f32 %v2928, %v4534
    %v4536 = vpop.f32.mrf.mxu0
    %4537 = vdwg.mxu0
    %4538 = vmatpush.bf16.msra.mxu0 %v3764
    %4539 = vmatpush.bf16.msra.mxu0 %v3760
    %4540 = vmatpush.bf16.msra.mxu0 %v3756
    %4541 = vmatpush.bf16.msra.mxu0 %v3752
    %4542 = vmatpush.bf16.msra.mxu0 %v3748
    %4543 = vmatpush.bf16.msra.mxu0 %v3744
    %4544 = vmatpush.bf16.msra.mxu0 %v3740
    %4545 = vmatpush.bf16.msra.mxu0 %v3736
    %4546 = vmatmul.bf16.gmra.mxu0 %v2660
    %v4547 = vpop.f32.mrf.mxu0
    %v4548 = vadd.f32 %v4535, %v4547
    %v4549 = vpop.f32.mrf.mxu0
    %4550 = vdwg.mxu0
    %4551 = vmatpush.bf16.msra.mxu0 %v3796
    %4552 = vmatpush.bf16.msra.mxu0 %v3792
    %4553 = vmatpush.bf16.msra.mxu0 %v3788
    %4554 = vmatpush.bf16.msra.mxu0 %v3784
    %4555 = vmatpush.bf16.msra.mxu0 %v3780
    %4556 = vmatpush.bf16.msra.mxu0 %v3776
    %4557 = vmatpush.bf16.msra.mxu0 %v3772
    %4558 = vmatpush.bf16.msra.mxu0 %v3768
    %4559 = vmatmul.bf16.gmra.mxu0 %v2661
    %v4560 = vpop.f32.mrf.mxu0
    %v4561 = vadd.f32 %v4548, %v4560
    %v4562 = vpop.f32.mrf.mxu0
    %4563 = vdwg.mxu0
    %4564 = vmatpush.bf16.msra.mxu0 %v3828
    %4565 = vmatpush.bf16.msra.mxu0 %v3824
    %4566 = vmatpush.bf16.msra.mxu0 %v3820
    %4567 = vmatpush.bf16.msra.mxu0 %v3816
    %4568 = vmatpush.bf16.msra.mxu0 %v3812
    %4569 = vmatpush.bf16.msra.mxu0 %v3808
    %4570 = vmatpush.bf16.msra.mxu0 %v3804
    %4571 = vmatpush.bf16.msra.mxu0 %v3800
    %4572 = vmatmul.bf16.gmra.mxu0 %v2662
    %v4573 = vpop.f32.mrf.mxu0
    %v4574 = vadd.f32 %v4561, %v4573
    %v4575 = vpop.f32.mrf.mxu0
    %4576 = vdwg.mxu0
    %4577 = vmatpush.bf16.msra.mxu0 %v3860
    %4578 = vmatpush.bf16.msra.mxu0 %v3856
    %4579 = vmatpush.bf16.msra.mxu0 %v3852
    %4580 = vmatpush.bf16.msra.mxu0 %v3848
    %4581 = vmatpush.bf16.msra.mxu0 %v3844
    %4582 = vmatpush.bf16.msra.mxu0 %v3840
    %4583 = vmatpush.bf16.msra.mxu0 %v3836
    %4584 = vmatpush.bf16.msra.mxu0 %v3832
    %4585 = vmatmul.bf16.gmra.mxu0 %v2663
    %v4586 = vpop.f32.mrf.mxu0
    %v4587 = vadd.f32 %v4574, %v4586
    %v4588 = vpop.f32.mrf.mxu0
    %4589 = vdwg.mxu0
    %4590 = vmatpush.bf16.msra.mxu0 %v3892
    %4591 = vmatpush.bf16.msra.mxu0 %v3888
    %4592 = vmatpush.bf16.msra.mxu0 %v3884
    %4593 = vmatpush.bf16.msra.mxu0 %v3880
    %4594 = vmatpush.bf16.msra.mxu0 %v3876
    %4595 = vmatpush.bf16.msra.mxu0 %v3872
    %4596 = vmatpush.bf16.msra.mxu0 %v3868
    %4597 = vmatpush.bf16.msra.mxu0 %v3864
    %4598 = vmatmul.bf16.gmra.mxu0 %v2664
    %v4599 = vpop.f32.mrf.mxu0
    %v4600 = vadd.f32 %v4587, %v4599
    %v4601 = vpop.f32.mrf.mxu0
    %4602 = vdwg.mxu0
    %4603 = vmatpush.bf16.msra.mxu0 %v3924
    %4604 = vmatpush.bf16.msra.mxu0 %v3920
    %4605 = vmatpush.bf16.msra.mxu0 %v3916
    %4606 = vmatpush.bf16.msra.mxu0 %v3912
    %4607 = vmatpush.bf16.msra.mxu0 %v3908
    %4608 = vmatpush.bf16.msra.mxu0 %v3904
    %4609 = vmatpush.bf16.msra.mxu0 %v3900
    %4610 = vmatpush.bf16.msra.mxu0 %v3896
    %4611 = vmatmul.bf16.gmra.mxu0 %v2665
    %v4612 = vpop.f32.mrf.mxu0
    %v4613 = vadd.f32 %v4600, %v4612
    %v4614 = vpop.f32.mrf.mxu0
    %4615 = vdwg.mxu0
    %4616 = vmatpush.bf16.msra.mxu0 %v3956
    %4617 = vmatpush.bf16.msra.mxu0 %v3952
    %4618 = vmatpush.bf16.msra.mxu0 %v3948
    %4619 = vmatpush.bf16.msra.mxu0 %v3944
    %4620 = vmatpush.bf16.msra.mxu0 %v3940
    %4621 = vmatpush.bf16.msra.mxu0 %v3936
    %4622 = vmatpush.bf16.msra.mxu0 %v3932
    %4623 = vmatpush.bf16.msra.mxu0 %v3928
    %4624 = vmatmul.bf16.gmra.mxu0 %v2666
    %v4625 = vpop.f32.mrf.mxu0
    %v4626 = vadd.f32 %v4613, %v4625
    %v4627 = vpop.f32.mrf.mxu0
    %4628 = vdwg.mxu0
    %v4629 = vpack.c.bf16 %v4314, %v4314
    %v4630 = vpack.c.bf16 %v4418, %v4418
    %v4631 = vpack.c.bf16 %v4522, %v4522
    %v4632 = vpack.c.bf16 %v4626, %v4626
    %v4633 = vld [vmem:[#allocation13] sm:$0xff]
    %v4634 = vld [vmem:[#allocation13 + $0x8] sm:$0xff]
    %v4635 = vld [vmem:[#allocation13 + $0x10] sm:$0xff]
    %v4636 = vld [vmem:[#allocation13 + $0x18] sm:$0xff]
    %v4637 = vld [vmem:[#allocation13 + $0x20] sm:$0xff]
    %v4638 = vld [vmem:[#allocation13 + $0x28] sm:$0xff]
    %v4639 = vld [vmem:[#allocation13 + $0x30] sm:$0xff]
    %v4640 = vld [vmem:[#allocation13 + $0x38] sm:$0xff]
    %v4641 = vld [vmem:[#allocation13 + $0x40] sm:$0xff]
    %v4642 = vld [vmem:[#allocation13 + $0x48] sm:$0xff]
    %v4643 = vld [vmem:[#allocation13 + $0x50] sm:$0xff]
    %v4644 = vld [vmem:[#allocation13 + $0x58] sm:$0xff]
    %v4645 = vld [vmem:[#allocation13 + $0x60] sm:$0xff]
    %v4646 = vld [vmem:[#allocation13 + $0x68] sm:$0xff]
    %v4647 = vld [vmem:[#allocation13 + $0x70] sm:$0xff]
    %v4648 = vld [vmem:[#allocation13 + $0x78] sm:$0xff]
    %v4649 = vld [vmem:[#allocation13 + $0x80] sm:$0xff]
    %v4650 = vld [vmem:[#allocation13 + $0x88] sm:$0xff]
    %v4651 = vld [vmem:[#allocation13 + $0x90] sm:$0xff]
    %v4652 = vld [vmem:[#allocation13 + $0x98] sm:$0xff]
    %v4653 = vld [vmem:[#allocation13 + $0xa0] sm:$0xff]
    %v4654 = vld [vmem:[#allocation13 + $0xa8] sm:$0xff]
    %v4655 = vld [vmem:[#allocation13 + $0xb0] sm:$0xff]
    %v4656 = vld [vmem:[#allocation13 + $0xb8] sm:$0xff]
    %v4657 = vld [vmem:[#allocation13 + $0xc0] sm:$0xff]
    %v4658 = vld [vmem:[#allocation13 + $0xc8] sm:$0xff]
    %v4659 = vld [vmem:[#allocation13 + $0xd0] sm:$0xff]
    %v4660 = vld [vmem:[#allocation13 + $0xd8] sm:$0xff]
    %v4661 = vld [vmem:[#allocation13 + $0xe0] sm:$0xff]
    %v4662 = vld [vmem:[#allocation13 + $0xe8] sm:$0xff]
    %v4663 = vld [vmem:[#allocation13 + $0xf0] sm:$0xff]
    %v4664 = vld [vmem:[#allocation13 + $0xf8] sm:$0xff]
    %v4665 = vld [vmem:[#allocation13 + $0x100] sm:$0xff]
    %v4666 = vld [vmem:[#allocation13 + $0x108] sm:$0xff]
    %v4667 = vld [vmem:[#allocation13 + $0x110] sm:$0xff]
    %v4668 = vld [vmem:[#allocation13 + $0x118] sm:$0xff]
    %v4669 = vld [vmem:[#allocation13 + $0x120] sm:$0xff]
    %v4670 = vld [vmem:[#allocation13 + $0x128] sm:$0xff]
    %v4671 = vld [vmem:[#allocation13 + $0x130] sm:$0xff]
    %v4672 = vld [vmem:[#allocation13 + $0x138] sm:$0xff]
    %v4673 = vld [vmem:[#allocation13 + $0x140] sm:$0xff]
    %v4674 = vld [vmem:[#allocation13 + $0x148] sm:$0xff]
    %v4675 = vld [vmem:[#allocation13 + $0x150] sm:$0xff]
    %v4676 = vld [vmem:[#allocation13 + $0x158] sm:$0xff]
    %v4677 = vld [vmem:[#allocation13 + $0x160] sm:$0xff]
    %v4678 = vld [vmem:[#allocation13 + $0x168] sm:$0xff]
    %v4679 = vld [vmem:[#allocation13 + $0x170] sm:$0xff]
    %v4680 = vld [vmem:[#allocation13 + $0x178] sm:$0xff]
    %v4681 = vld [vmem:[#allocation13 + $0x180] sm:$0xff]
    %v4682 = vld [vmem:[#allocation13 + $0x188] sm:$0xff]
    %v4683 = vld [vmem:[#allocation13 + $0x190] sm:$0xff]
    %v4684 = vld [vmem:[#allocation13 + $0x198] sm:$0xff]
    %v4685 = vld [vmem:[#allocation13 + $0x1a0] sm:$0xff]
    %v4686 = vld [vmem:[#allocation13 + $0x1a8] sm:$0xff]
    %v4687 = vld [vmem:[#allocation13 + $0x1b0] sm:$0xff]
    %v4688 = vld [vmem:[#allocation13 + $0x1b8] sm:$0xff]
    %v4689 = vld [vmem:[#allocation13 + $0x1c0] sm:$0xff]
    %v4690 = vld [vmem:[#allocation13 + $0x1c8] sm:$0xff]
    %v4691 = vld [vmem:[#allocation13 + $0x1d0] sm:$0xff]
    %v4692 = vld [vmem:[#allocation13 + $0x1d8] sm:$0xff]
    %v4693 = vld [vmem:[#allocation13 + $0x1e0] sm:$0xff]
    %v4694 = vld [vmem:[#allocation13 + $0x1e8] sm:$0xff]
    %v4695 = vld [vmem:[#allocation13 + $0x1f0] sm:$0xff]
    %v4696 = vld [vmem:[#allocation13 + $0x1f8] sm:$0xff]
    %v4697 = vld [vmem:[%s8] sm:$0x3]
    %v4699 = vperm.slane %v4697, 0
    %v4700 = vperm.slane %v4697, 1
    %v4767 = vunpack.c.l.b16 %v4633
    %v4768 = vunpack.c.h.b16 %v4633
    %v4769 = vunpack.c.l.b16 %v4634
    %v4770 = vunpack.c.h.b16 %v4634
    %v4771 = vunpack.c.l.b16 %v4635
    %v4772 = vunpack.c.h.b16 %v4635
    %v4773 = vunpack.c.l.b16 %v4636
    %v4774 = vunpack.c.h.b16 %v4636
    %v4775 = vunpack.c.l.b16 %v4637
    %v4776 = vunpack.c.h.b16 %v4637
    %v4777 = vunpack.c.l.b16 %v4638
    %v4778 = vunpack.c.h.b16 %v4638
    %v4779 = vunpack.c.l.b16 %v4639
    %v4780 = vunpack.c.h.b16 %v4639
    %v4781 = vunpack.c.l.b16 %v4640
    %v4782 = vunpack.c.h.b16 %v4640
    %v4783 = vunpack.c.l.b16 %v4641
    %v4784 = vunpack.c.h.b16 %v4641
    %v4785 = vunpack.c.l.b16 %v4642
    %v4786 = vunpack.c.h.b16 %v4642
    %v4787 = vunpack.c.l.b16 %v4643
    %v4788 = vunpack.c.h.b16 %v4643
    %v4789 = vunpack.c.l.b16 %v4644
    %v4790 = vunpack.c.h.b16 %v4644
    %v4791 = vunpack.c.l.b16 %v4645
    %v4792 = vunpack.c.h.b16 %v4645
    %v4793 = vunpack.c.l.b16 %v4646
    %v4794 = vunpack.c.h.b16 %v4646
    %v4795 = vunpack.c.l.b16 %v4647
    %v4796 = vunpack.c.h.b16 %v4647
    %v4797 = vunpack.c.l.b16 %v4648
    %v4798 = vunpack.c.h.b16 %v4648
    %v4799 = vunpack.c.l.b16 %v4649
    %v4800 = vunpack.c.h.b16 %v4649
    %v4801 = vunpack.c.l.b16 %v4650
    %v4802 = vunpack.c.h.b16 %v4650
    %v4803 = vunpack.c.l.b16 %v4651
    %v4804 = vunpack.c.h.b16 %v4651
    %v4805 = vunpack.c.l.b16 %v4652
    %v4806 = vunpack.c.h.b16 %v4652
    %v4807 = vunpack.c.l.b16 %v4653
    %v4808 = vunpack.c.h.b16 %v4653
    %v4809 = vunpack.c.l.b16 %v4654
    %v4810 = vunpack.c.h.b16 %v4654
    %v4811 = vunpack.c.l.b16 %v4655
    %v4812 = vunpack.c.h.b16 %v4655
    %v4813 = vunpack.c.l.b16 %v4656
    %v4814 = vunpack.c.h.b16 %v4656
    %v4815 = vunpack.c.l.b16 %v4657
    %v4816 = vunpack.c.h.b16 %v4657
    %v4817 = vunpack.c.l.b16 %v4658
    %v4818 = vunpack.c.h.b16 %v4658
    %v4819 = vunpack.c.l.b16 %v4659
    %v4820 = vunpack.c.h.b16 %v4659
    %v4821 = vunpack.c.l.b16 %v4660
    %v4822 = vunpack.c.h.b16 %v4660
    %v4823 = vunpack.c.l.b16 %v4661
    %v4824 = vunpack.c.h.b16 %v4661
    %v4825 = vunpack.c.l.b16 %v4662
    %v4826 = vunpack.c.h.b16 %v4662
    %v4827 = vunpack.c.l.b16 %v4663
    %v4828 = vunpack.c.h.b16 %v4663
    %v4829 = vunpack.c.l.b16 %v4664
    %v4830 = vunpack.c.h.b16 %v4664
    %v4831 = vunpack.c.l.b16 %v4665
    %v4832 = vunpack.c.h.b16 %v4665
    %v4833 = vunpack.c.l.b16 %v4666
    %v4834 = vunpack.c.h.b16 %v4666
    %v4835 = vunpack.c.l.b16 %v4667
    %v4836 = vunpack.c.h.b16 %v4667
    %v4837 = vunpack.c.l.b16 %v4668
    %v4838 = vunpack.c.h.b16 %v4668
    %v4839 = vunpack.c.l.b16 %v4669
    %v4840 = vunpack.c.h.b16 %v4669
    %v4841 = vunpack.c.l.b16 %v4670
    %v4842 = vunpack.c.h.b16 %v4670
    %v4843 = vunpack.c.l.b16 %v4671
    %v4844 = vunpack.c.h.b16 %v4671
    %v4845 = vunpack.c.l.b16 %v4672
    %v4846 = vunpack.c.h.b16 %v4672
    %v4847 = vunpack.c.l.b16 %v4673
    %v4848 = vunpack.c.h.b16 %v4673
    %v4849 = vunpack.c.l.b16 %v4674
    %v4850 = vunpack.c.h.b16 %v4674
    %v4851 = vunpack.c.l.b16 %v4675
    %v4852 = vunpack.c.h.b16 %v4675
    %v4853 = vunpack.c.l.b16 %v4676
    %v4854 = vunpack.c.h.b16 %v4676
    %v4855 = vunpack.c.l.b16 %v4677
    %v4856 = vunpack.c.h.b16 %v4677
    %v4857 = vunpack.c.l.b16 %v4678
    %v4858 = vunpack.c.h.b16 %v4678
    %v4859 = vunpack.c.l.b16 %v4679
    %v4860 = vunpack.c.h.b16 %v4679
    %v4861 = vunpack.c.l.b16 %v4680
    %v4862 = vunpack.c.h.b16 %v4680
    %v4863 = vunpack.c.l.b16 %v4681
    %v4864 = vunpack.c.h.b16 %v4681
    %v4865 = vunpack.c.l.b16 %v4682
    %v4866 = vunpack.c.h.b16 %v4682
    %v4867 = vunpack.c.l.b16 %v4683
    %v4868 = vunpack.c.h.b16 %v4683
    %v4869 = vunpack.c.l.b16 %v4684
    %v4870 = vunpack.c.h.b16 %v4684
    %v4871 = vunpack.c.l.b16 %v4685
    %v4872 = vunpack.c.h.b16 %v4685
    %v4873 = vunpack.c.l.b16 %v4686
    %v4874 = vunpack.c.h.b16 %v4686
    %v4875 = vunpack.c.l.b16 %v4687
    %v4876 = vunpack.c.h.b16 %v4687
    %v4877 = vunpack.c.l.b16 %v4688
    %v4878 = vunpack.c.h.b16 %v4688
    %v4879 = vunpack.c.l.b16 %v4689
    %v4880 = vunpack.c.h.b16 %v4689
    %v4881 = vunpack.c.l.b16 %v4690
    %v4882 = vunpack.c.h.b16 %v4690
    %v4883 = vunpack.c.l.b16 %v4691
    %v4884 = vunpack.c.h.b16 %v4691
    %v4885 = vunpack.c.l.b16 %v4692
    %v4886 = vunpack.c.h.b16 %v4692
    %v4887 = vunpack.c.l.b16 %v4693
    %v4888 = vunpack.c.h.b16 %v4693
    %v4889 = vunpack.c.l.b16 %v4694
    %v4890 = vunpack.c.h.b16 %v4694
    %v4891 = vunpack.c.l.b16 %v4695
    %v4892 = vunpack.c.h.b16 %v4695
    %v4893 = vunpack.c.l.b16 %v4696
    %v4894 = vunpack.c.h.b16 %v4696
    %v4895 = vpack.c.b16 %v4769, %v4767
    %v4896 = vpack.c.b16 %v4770, %v4768
    %v4897 = vpack.c.b16 %v4773, %v4771
    %v4898 = vpack.c.b16 %v4774, %v4772
    %v4899 = vpack.c.b16 %v4777, %v4775
    %v4900 = vpack.c.b16 %v4778, %v4776
    %v4901 = vpack.c.b16 %v4781, %v4779
    %v4902 = vpack.c.b16 %v4782, %v4780
    %v4903 = vpack.c.b16 %v4785, %v4783
    %v4904 = vpack.c.b16 %v4786, %v4784
    %v4905 = vpack.c.b16 %v4789, %v4787
    %v4906 = vpack.c.b16 %v4790, %v4788
    %v4907 = vpack.c.b16 %v4793, %v4791
    %v4908 = vpack.c.b16 %v4794, %v4792
    %v4909 = vpack.c.b16 %v4797, %v4795
    %v4910 = vpack.c.b16 %v4798, %v4796
    %v4911 = vpack.c.b16 %v4801, %v4799
    %v4912 = vpack.c.b16 %v4802, %v4800
    %v4913 = vpack.c.b16 %v4805, %v4803
    %v4914 = vpack.c.b16 %v4806, %v4804
    %v4915 = vpack.c.b16 %v4809, %v4807
    %v4916 = vpack.c.b16 %v4810, %v4808
    %v4917 = vpack.c.b16 %v4813, %v4811
    %v4918 = vpack.c.b16 %v4814, %v4812
    %v4919 = vpack.c.b16 %v4817, %v4815
    %v4920 = vpack.c.b16 %v4818, %v4816
    %v4921 = vpack.c.b16 %v4821, %v4819
    %v4922 = vpack.c.b16 %v4822, %v4820
    %v4923 = vpack.c.b16 %v4825, %v4823
    %v4924 = vpack.c.b16 %v4826, %v4824
    %v4925 = vpack.c.b16 %v4829, %v4827
    %v4926 = vpack.c.b16 %v4830, %v4828
    %v4927 = vpack.c.b16 %v4833, %v4831
    %v4928 = vpack.c.b16 %v4834, %v4832
    %v4929 = vpack.c.b16 %v4837, %v4835
    %v4930 = vpack.c.b16 %v4838, %v4836
    %v4931 = vpack.c.b16 %v4841, %v4839
    %v4932 = vpack.c.b16 %v4842, %v4840
    %v4933 = vpack.c.b16 %v4845, %v4843
    %v4934 = vpack.c.b16 %v4846, %v4844
    %v4935 = vpack.c.b16 %v4849, %v4847
    %v4936 = vpack.c.b16 %v4850, %v4848
    %v4937 = vpack.c.b16 %v4853, %v4851
    %v4938 = vpack.c.b16 %v4854, %v4852
    %v4939 = vpack.c.b16 %v4857, %v4855
    %v4940 = vpack.c.b16 %v4858, %v4856
    %v4941 = vpack.c.b16 %v4861, %v4859
    %v4942 = vpack.c.b16 %v4862, %v4860
    %v4943 = vpack.c.b16 %v4865, %v4863
    %v4944 = vpack.c.b16 %v4866, %v4864
    %v4945 = vpack.c.b16 %v4869, %v4867
    %v4946 = vpack.c.b16 %v4870, %v4868
    %v4947 = vpack.c.b16 %v4873, %v4871
    %v4948 = vpack.c.b16 %v4874, %v4872
    %v4949 = vpack.c.b16 %v4877, %v4875
    %v4950 = vpack.c.b16 %v4878, %v4876
    %v4951 = vpack.c.b16 %v4881, %v4879
    %v4952 = vpack.c.b16 %v4882, %v4880
    %v4953 = vpack.c.b16 %v4885, %v4883
    %v4954 = vpack.c.b16 %v4886, %v4884
    %v4955 = vpack.c.b16 %v4889, %v4887
    %v4956 = vpack.c.b16 %v4890, %v4888
    %v4957 = vpack.c.b16 %v4893, %v4891
    %v4958 = vpack.c.b16 %v4894, %v4892
    %5023 = vmatpush.bf16.msra.mxu0 %v4909
    %5024 = vmatpush.bf16.msra.mxu0 %v4907
    %5025 = vmatpush.bf16.msra.mxu0 %v4905
    %5026 = vmatpush.bf16.msra.mxu0 %v4903
    %5027 = vmatpush.bf16.msra.mxu0 %v4901
    %5028 = vmatpush.bf16.msra.mxu0 %v4899
    %5029 = vmatpush.bf16.msra.mxu0 %v4897
    %5030 = vmatpush.bf16.msra.mxu0 %v4895
    %5031 = vmatmul.bf16.gmra.mxu0 %v4629
    %v5032 = vpop.f32.mrf.mxu0
    %v5033 = vadd.f32 %v4699, %v5032
    %v5034 = vpop.f32.mrf.mxu0
    %5035 = vdwg.mxu0
    %5036 = vmatpush.bf16.msra.mxu0 %v4925
    %5037 = vmatpush.bf16.msra.mxu0 %v4923
    %5038 = vmatpush.bf16.msra.mxu0 %v4921
    %5039 = vmatpush.bf16.msra.mxu0 %v4919
    %5040 = vmatpush.bf16.msra.mxu0 %v4917
    %5041 = vmatpush.bf16.msra.mxu0 %v4915
    %5042 = vmatpush.bf16.msra.mxu0 %v4913
    %5043 = vmatpush.bf16.msra.mxu0 %v4911
    %5044 = vmatmul.bf16.gmra.mxu0 %v4630
    %v5045 = vpop.f32.mrf.mxu0
    %v5046 = vadd.f32 %v5033, %v5045
    %v5047 = vpop.f32.mrf.mxu0
    %5048 = vdwg.mxu0
    %5049 = vmatpush.bf16.msra.mxu0 %v4941
    %5050 = vmatpush.bf16.msra.mxu0 %v4939
    %5051 = vmatpush.bf16.msra.mxu0 %v4937
    %5052 = vmatpush.bf16.msra.mxu0 %v4935
    %5053 = vmatpush.bf16.msra.mxu0 %v4933
    %5054 = vmatpush.bf16.msra.mxu0 %v4931
    %5055 = vmatpush.bf16.msra.mxu0 %v4929
    %5056 = vmatpush.bf16.msra.mxu0 %v4927
    %5057 = vmatmul.bf16.gmra.mxu0 %v4631
    %v5058 = vpop.f32.mrf.mxu0
    %v5059 = vadd.f32 %v5046, %v5058
    %v5060 = vpop.f32.mrf.mxu0
    %5061 = vdwg.mxu0
    %5062 = vmatpush.bf16.msra.mxu0 %v4957
    %5063 = vmatpush.bf16.msra.mxu0 %v4955
    %5064 = vmatpush.bf16.msra.mxu0 %v4953
    %5065 = vmatpush.bf16.msra.mxu0 %v4951
    %5066 = vmatpush.bf16.msra.mxu0 %v4949
    %5067 = vmatpush.bf16.msra.mxu0 %v4947
    %5068 = vmatpush.bf16.msra.mxu0 %v4945
    %5069 = vmatpush.bf16.msra.mxu0 %v4943
    %5070 = vmatmul.bf16.gmra.mxu0 %v4632
    %v5071 = vpop.f32.mrf.mxu0
    %v5072 = vadd.f32 %v5059, %v5071
    %v5073 = vpop.f32.mrf.mxu0
    %5074 = vdwg.mxu0
    %5075 = vmatpush.bf16.msra.mxu0 %v4910
    %5076 = vmatpush.bf16.msra.mxu0 %v4908
    %5077 = vmatpush.bf16.msra.mxu0 %v4906
    %5078 = vmatpush.bf16.msra.mxu0 %v4904
    %5079 = vmatpush.bf16.msra.mxu0 %v4902
    %5080 = vmatpush.bf16.msra.mxu0 %v4900
    %5081 = vmatpush.bf16.msra.mxu0 %v4898
    %5082 = vmatpush.bf16.msra.mxu0 %v4896
    %5083 = vmatmul.bf16.gmra.mxu0 %v4629
    %v5084 = vpop.f32.mrf.mxu0
    %v5085 = vadd.f32 %v4700, %v5084
    %v5086 = vpop.f32.mrf.mxu0
    %5087 = vdwg.mxu0
    %5088 = vmatpush.bf16.msra.mxu0 %v4926
    %5089 = vmatpush.bf16.msra.mxu0 %v4924
    %5090 = vmatpush.bf16.msra.mxu0 %v4922
    %5091 = vmatpush.bf16.msra.mxu0 %v4920
    %5092 = vmatpush.bf16.msra.mxu0 %v4918
    %5093 = vmatpush.bf16.msra.mxu0 %v4916
    %5094 = vmatpush.bf16.msra.mxu0 %v4914
    %5095 = vmatpush.bf16.msra.mxu0 %v4912
    %5096 = vmatmul.bf16.gmra.mxu0 %v4630
    %v5097 = vpop.f32.mrf.mxu0
    %v5098 = vadd.f32 %v5085, %v5097
    %v5099 = vpop.f32.mrf.mxu0
    %5100 = vdwg.mxu0
    %5101 = vmatpush.bf16.msra.mxu0 %v4942
    %5102 = vmatpush.bf16.msra.mxu0 %v4940
    %5103 = vmatpush.bf16.msra.mxu0 %v4938
    %5104 = vmatpush.bf16.msra.mxu0 %v4936
    %5105 = vmatpush.bf16.msra.mxu0 %v4934
    %5106 = vmatpush.bf16.msra.mxu0 %v4932
    %5107 = vmatpush.bf16.msra.mxu0 %v4930
    %5108 = vmatpush.bf16.msra.mxu0 %v4928
    %5109 = vmatmul.bf16.gmra.mxu0 %v4631
    %v5110 = vpop.f32.mrf.mxu0
    %v5111 = vadd.f32 %v5098, %v5110
    %v5112 = vpop.f32.mrf.mxu0
    %5113 = vdwg.mxu0
    %5114 = vmatpush.bf16.msra.mxu0 %v4958
    %5115 = vmatpush.bf16.msra.mxu0 %v4956
    %5116 = vmatpush.bf16.msra.mxu0 %v4954
    %5117 = vmatpush.bf16.msra.mxu0 %v4952
    %5118 = vmatpush.bf16.msra.mxu0 %v4950
    %5119 = vmatpush.bf16.msra.mxu0 %v4948
    %5120 = vmatpush.bf16.msra.mxu0 %v4946
    %5121 = vmatpush.bf16.msra.mxu0 %v4944
    %5122 = vmatmul.bf16.gmra.mxu0 %v4632
    %v5123 = vpop.f32.mrf.mxu0
    %v5124 = vadd.f32 %v5111, %v5123
    %v5125 = vpop.f32.mrf.mxu0
    %5126 = vdwg.mxu0
    %v5127 = vpack.c.bf16 %v5072, %v5072
    %v5128 = vpack.c.bf16 %v5124, %v5124
    %v5129 = vld [vmem:[#allocation14] sm:$0xf]
    %v5130 = vld [vmem:[#allocation14 + $0x4] sm:$0xf]
    %v5131 = vld [vmem:[#allocation14 + $0x8] sm:$0xf]
    %v5132 = vld [vmem:[#allocation14 + $0xc] sm:$0xf]
    %v5133 = vld [vmem:[#allocation14 + $0x10] sm:$0xf]
    %v5134 = vld [vmem:[#allocation14 + $0x14] sm:$0xf]
    %v5135 = vld [vmem:[#allocation14 + $0x18] sm:$0xf]
    %v5136 = vld [vmem:[#allocation14 + $0x1c] sm:$0xf]
    %v5137 = vld [vmem:[#allocation14 + $0x20] sm:$0xf]
    %v5138 = vld [vmem:[#allocation14 + $0x24] sm:$0xf]
    %v5139 = vld [vmem:[#allocation14 + $0x28] sm:$0xf]
    %v5140 = vld [vmem:[#allocation14 + $0x2c] sm:$0xf]
    %v5141 = vld [vmem:[#allocation14 + $0x30] sm:$0xf]
    %v5142 = vld [vmem:[#allocation14 + $0x34] sm:$0xf]
    %v5143 = vld [vmem:[#allocation14 + $0x38] sm:$0xf]
    %v5144 = vld [vmem:[#allocation14 + $0x3c] sm:$0xf]
    %v5145 = vld [vmem:[#allocation14 + $0x40] sm:$0xf]
    %v5146 = vld [vmem:[#allocation14 + $0x44] sm:$0xf]
    %v5147 = vld [vmem:[#allocation14 + $0x48] sm:$0xf]
    %v5148 = vld [vmem:[#allocation14 + $0x4c] sm:$0xf]
    %v5149 = vld [vmem:[#allocation14 + $0x50] sm:$0xf]
    %v5150 = vld [vmem:[#allocation14 + $0x54] sm:$0xf]
    %v5151 = vld [vmem:[#allocation14 + $0x58] sm:$0xf]
    %v5152 = vld [vmem:[#allocation14 + $0x5c] sm:$0xf]
    %v5153 = vld [vmem:[#allocation14 + $0x60] sm:$0xf]
    %v5154 = vld [vmem:[#allocation14 + $0x64] sm:$0xf]
    %v5155 = vld [vmem:[#allocation14 + $0x68] sm:$0xf]
    %v5156 = vld [vmem:[#allocation14 + $0x6c] sm:$0xf]
    %v5157 = vld [vmem:[#allocation14 + $0x70] sm:$0xf]
    %v5158 = vld [vmem:[#allocation14 + $0x74] sm:$0xf]
    %v5159 = vld [vmem:[#allocation14 + $0x78] sm:$0xf]
    %v5160 = vld [vmem:[#allocation14 + $0x7c] sm:$0xf]
    %v5161 = vld [vmem:[%s10] sm:$0x1]
    %v5163 = vperm.slane %v5161, 0
    %v5197 = vunpack.c.l.b16 %v5129
    %v5198 = vunpack.c.l.b16 %v5130
    %v5199 = vunpack.c.l.b16 %v5131
    %v5200 = vunpack.c.l.b16 %v5132
    %v5201 = vunpack.c.l.b16 %v5133
    %v5202 = vunpack.c.l.b16 %v5134
    %v5203 = vunpack.c.l.b16 %v5135
    %v5204 = vunpack.c.l.b16 %v5136
    %v5205 = vunpack.c.l.b16 %v5137
    %v5206 = vunpack.c.l.b16 %v5138
    %v5207 = vunpack.c.l.b16 %v5139
    %v5208 = vunpack.c.l.b16 %v5140
    %v5209 = vunpack.c.l.b16 %v5141
    %v5210 = vunpack.c.l.b16 %v5142
    %v5211 = vunpack.c.l.b16 %v5143
    %v5212 = vunpack.c.l.b16 %v5144
    %v5213 = vunpack.c.l.b16 %v5145
    %v5214 = vunpack.c.l.b16 %v5146
    %v5215 = vunpack.c.l.b16 %v5147
    %v5216 = vunpack.c.l.b16 %v5148
    %v5217 = vunpack.c.l.b16 %v5149
    %v5218 = vunpack.c.l.b16 %v5150
    %v5219 = vunpack.c.l.b16 %v5151
    %v5220 = vunpack.c.l.b16 %v5152
    %v5221 = vunpack.c.l.b16 %v5153
    %v5222 = vunpack.c.l.b16 %v5154
    %v5223 = vunpack.c.l.b16 %v5155
    %v5224 = vunpack.c.l.b16 %v5156
    %v5225 = vunpack.c.l.b16 %v5157
    %v5226 = vunpack.c.l.b16 %v5158
    %v5227 = vunpack.c.l.b16 %v5159
    %v5228 = vunpack.c.l.b16 %v5160
    %v5229 = vpack.c.b16 %v5198, %v5197
    %v5230 = vpack.c.b16 %v5200, %v5199
    %v5231 = vpack.c.b16 %v5202, %v5201
    %v5232 = vpack.c.b16 %v5204, %v5203
    %v5233 = vpack.c.b16 %v5206, %v5205
    %v5234 = vpack.c.b16 %v5208, %v5207
    %v5235 = vpack.c.b16 %v5210, %v5209
    %v5236 = vpack.c.b16 %v5212, %v5211
    %v5237 = vpack.c.b16 %v5214, %v5213
    %v5238 = vpack.c.b16 %v5216, %v5215
    %v5239 = vpack.c.b16 %v5218, %v5217
    %v5240 = vpack.c.b16 %v5220, %v5219
    %v5241 = vpack.c.b16 %v5222, %v5221
    %v5242 = vpack.c.b16 %v5224, %v5223
    %v5243 = vpack.c.b16 %v5226, %v5225
    %v5244 = vpack.c.b16 %v5228, %v5227
    %5261 = vmatpush.bf16.msra.mxu0 %v5236
    %5262 = vmatpush.bf16.msra.mxu0 %v5235
    %5263 = vmatpush.bf16.msra.mxu0 %v5234
    %5264 = vmatpush.bf16.msra.mxu0 %v5233
    %5265 = vmatpush.bf16.msra.mxu0 %v5232
    %5266 = vmatpush.bf16.msra.mxu0 %v5231
    %5267 = vmatpush.bf16.msra.mxu0 %v5230
    %5268 = vmatpush.bf16.msra.mxu0 %v5229
    %5269 = vmatmul.bf16.gmra.mxu0 %v5127
    %v5270 = vpop.f32.mrf.mxu0
    %v5271 = vadd.f32 %v5163, %v5270
    %v5272 = vpop.f32.mrf.mxu0
    %5273 = vdwg.mxu0
    %5274 = vmatpush.bf16.msra.mxu0 %v5244
    %5275 = vmatpush.bf16.msra.mxu0 %v5243
    %5276 = vmatpush.bf16.msra.mxu0 %v5242
    %5277 = vmatpush.bf16.msra.mxu0 %v5241
    %5278 = vmatpush.bf16.msra.mxu0 %v5240
    %5279 = vmatpush.bf16.msra.mxu0 %v5239
    %5280 = vmatpush.bf16.msra.mxu0 %v5238
    %5281 = vmatpush.bf16.msra.mxu0 %v5237
    %5282 = vmatmul.bf16.gmra.mxu0 %v5128
    %v5283 = vpop.f32.mrf.mxu0
    %v5284 = vadd.f32 %v5271, %v5283
    %v5285 = vpop.f32.mrf.mxu0
    %5286 = vdwg.mxu0
    %v5287 = vmax.f32 %v5284, 0.0
    %v5288 = vpack.c.bf16 %v5287, %v5287
    %v5289 = vld [vmem:[#allocation16] sm:$0xf]
    %v5290 = vld [vmem:[#allocation16 + $0x4] sm:$0xf]
    %v5291 = vld [vmem:[#allocation16 + $0x8] sm:$0xf]
    %v5292 = vld [vmem:[#allocation16 + $0xc] sm:$0xf]
    %v5293 = vld [vmem:[#allocation16 + $0x10] sm:$0xf]
    %v5294 = vld [vmem:[#allocation16 + $0x14] sm:$0xf]
    %v5295 = vld [vmem:[#allocation16 + $0x18] sm:$0xf]
    %v5296 = vld [vmem:[#allocation16 + $0x1c] sm:$0xf]
    %v5297 = vld [vmem:[#allocation16 + $0x20] sm:$0xf]
    %v5298 = vld [vmem:[#allocation16 + $0x24] sm:$0xf]
    %v5299 = vld [vmem:[#allocation16 + $0x28] sm:$0xf]
    %v5300 = vld [vmem:[#allocation16 + $0x2c] sm:$0xf]
    %v5301 = vld [vmem:[#allocation16 + $0x30] sm:$0xf]
    %v5302 = vld [vmem:[#allocation16 + $0x34] sm:$0xf]
    %v5303 = vld [vmem:[#allocation16 + $0x38] sm:$0xf]
    %v5304 = vld [vmem:[#allocation16 + $0x3c] sm:$0xf]
    %v5305 = vld [vmem:[%s12] sm:$0x1]
    %v5307 = vperm.slane %v5305, 0
    %v5325 = vunpack.c.l.b16 %v5289
    %v5326 = vunpack.c.l.b16 %v5290
    %v5327 = vunpack.c.l.b16 %v5291
    %v5328 = vunpack.c.l.b16 %v5292
    %v5329 = vunpack.c.l.b16 %v5293
    %v5330 = vunpack.c.l.b16 %v5294
    %v5331 = vunpack.c.l.b16 %v5295
    %v5332 = vunpack.c.l.b16 %v5296
    %v5333 = vunpack.c.l.b16 %v5297
    %v5334 = vunpack.c.l.b16 %v5298
    %v5335 = vunpack.c.l.b16 %v5299
    %v5336 = vunpack.c.l.b16 %v5300
    %v5337 = vunpack.c.l.b16 %v5301
    %v5338 = vunpack.c.l.b16 %v5302
    %v5339 = vunpack.c.l.b16 %v5303
    %v5340 = vunpack.c.l.b16 %v5304
    %v5341 = vpack.c.b16 %v5326, %v5325
    %v5342 = vpack.c.b16 %v5328, %v5327
    %v5343 = vpack.c.b16 %v5330, %v5329
    %v5344 = vpack.c.b16 %v5332, %v5331
    %v5345 = vpack.c.b16 %v5334, %v5333
    %v5346 = vpack.c.b16 %v5336, %v5335
    %v5347 = vpack.c.b16 %v5338, %v5337
    %v5348 = vpack.c.b16 %v5340, %v5339
    %5357 = vmatpush.bf16.msra.mxu0 %v5348
    %5358 = vmatpush.bf16.msra.mxu0 %v5347
    %5359 = vmatpush.bf16.msra.mxu0 %v5346
    %5360 = vmatpush.bf16.msra.mxu0 %v5345
    %5361 = vmatpush.bf16.msra.mxu0 %v5344
    %5362 = vmatpush.bf16.msra.mxu0 %v5343
    %5363 = vmatpush.bf16.msra.mxu0 %v5342
    %5364 = vmatpush.bf16.msra.mxu0 %v5341
    %5365 = vmatmul.bf16.gmra.mxu0 %v5288
    %v5366 = vpop.f32.mrf.mxu0
    %v5367 = vadd.f32 %v5307, %v5366
    %v5368 = vpop.f32.mrf.mxu0
    %5369 = vdwg.mxu0
    %5370 = vst [vmem:[#allocation17] sm:$0xff] %v5367
    // Predicated region
    $region90: #{tpu_custom_call.1} parent=1 // pred_check
      _
    $region91: #{tpu_custom_call.1} parent=1 // pred_check_branch
      %5372 = sbr.rel (0) target = $region93
    $region92: #{tpu_custom_call.1} parent=1 // pred_region
      %5374 = vsyncadd [#allocation4], 0
      %s5376 = sshll.u32 [#allocation17], 4
      %s5377 = int_to_ptr.vmem [resolvable:$true] %s5376
      %s5378 = sshll.u32 %s13, 4
      %s5379 = int_to_ptr.hbm [resolvable:$true] %s5378
      %5381 = dma.vmem_to_hbm [thread:$0]  %s5377, 128, %s5379, [#allocation4]
    $region93: #{tpu_custom_call.1} parent=1 // pred_fallthru
      _
    // Predicated region
    $region94: #{tpu_custom_call.1} parent=1 // pred_check
      _
    $region95: #{tpu_custom_call.1} parent=1 // pred_check_branch
      %5383 = sbr.rel (0) target = $region97
    $region96: #{tpu_custom_call.1} parent=1 // pred_region
      %5385 = dma.done [#allocation4], 128
    $region97: #{tpu_custom_call.1} parent=1 // pred_fallthru
      _
    %5386 = vsyncpa [#allocation3], 1
    %5387 = vsyncpa [#allocation6], 1
    %5388 = vsyncpa [#allocation9], 1
    %5389 = vsyncpa [#allocation12], 1
    %5390 = vsyncpa [#allocation15], 1
    %5391 = vsyncpa [#allocation4], 1

</llo_original>
